<compile_context>
chip_gen: v5e
topology: v5e:2x2
jax: 0.10.0
libtpu: 0.0.40
codegen_flags: <defaults>
</compile_context>

<pallas_src>
import functools
import math

import jax
import jax.numpy as jnp
from jax.experimental import pallas as pl
from jax.experimental.pallas import tpu as pltpu

EPS_COMBINE = 2.220446049250313e-16  # np.finfo(float).eps used in ES_EE.ee
_GELU_C = math.sqrt(2.0 / math.pi)


def _moe_kernel(x_ref, plog_ref, wbig_ref, b1_ref, w2_ref, b2_ref,
                rep_ref, sum_ref, y_ref, st_ref, *, num_experts, k, eh_pad):
    E = num_experts

    x = x_ref[0]                                                    # (TN, C) bf16

    # ---- fused fc1 + gating matmul: one K=C MXU push --------------------------
    big = jnp.dot(x, wbig_ref[...],
                  preferred_element_type=jnp.float32)               # (TN, Eh_pad + E) f32

    # ---- gating: clean logits + iterative top-k + masked softmax --------------
    logits = big[:, eh_pad:eh_pad + E] + plog_ref[0]                # (TN, E)  (aligned slice)
    neg = jnp.float32(-1e30)
    col = jax.lax.broadcasted_iota(jnp.int32, logits.shape, 1)
    work = logits
    sel = jnp.zeros(logits.shape, jnp.bool_)
    for _ in range(k):                                              # iterative arg-top-k
        m = jnp.max(work, axis=-1, keepdims=True)
        is_max = work == m
        idx = jnp.min(jnp.where(is_max, col, E), axis=-1, keepdims=True)
        onehot = col == idx
        sel = jnp.logical_or(sel, onehot)
        work = jnp.where(onehot, neg, work)

    # softmax over the selected (top-k) logits, zeros elsewhere == torch scatter
    # of softmax(top_k_logits) into zeros.
    masked = jnp.where(sel, logits, neg)
    mmax = jnp.max(masked, axis=-1, keepdims=True)
    ex = jnp.where(sel, jnp.exp(masked - mmax), 0.0)
    gates = ex / jnp.sum(ex, axis=-1, keepdims=True)                # (TN, E) f32

    # ---- fused experts: fc1 bias + tanh-GELU + block-diagonal fc2 -------------
    h = big[:, :eh_pad] + b1_ref[...]                               # (TN, Eh_pad) f32
    # tanh-approx GELU (EUP tanh instead of the VALU erf polynomial)
    h = 0.5 * h * (1.0 + jnp.tanh(_GELU_C * (h + 0.044715 * h * h * h)))
    o = jnp.dot(h.astype(jnp.bfloat16), w2_ref[...],
                preferred_element_type=jnp.float32) + b2_ref[...]   # (TN, E*Cout)

    # ---- gate-weighted log-sum-exp combine with per-token max shift -----------
    # y_c = M + log(sum_e g_e * exp(o_{e,c} - M)); exact, and exp(...) <= 1 so no
    # overflow (the unshifted reference overflows for o > ~88).
    m_tok = jnp.max(o, axis=-1, keepdims=True)                      # (TN, 1)
    eo = jnp.exp(o - m_tok)                                         # (TN, E*Cout)
    rep_g = jnp.dot(gates, rep_ref[...],
                    preferred_element_type=jnp.float32)             # gate per expert lane block
    acc = jnp.dot(eo * rep_g, sum_ref[...],
                  preferred_element_type=jnp.float32)               # (TN, Cout)
    ens = jnp.where(acc == 0.0, jnp.float32(EPS_COMBINE), acc)      # replace-if-zero (ES_EE.ee)
    y_ref[0] = m_tok + jnp.log(ens)

    # ---- per-tile gate statistics for the balance loss ------------------------
    # (a 2xE writeback per grid step is ~32 B vs ~tens of us of per-tile compute;
    #  kept lane-sparse rather than risking an in-kernel pad/relayout.)
    w_part = jnp.sum(gates, axis=0, keepdims=True)                               # (1, E)
    c_part = jnp.sum((gates > 0).astype(jnp.float32), axis=0, keepdims=True)     # (1, E)
    st_ref[0, 0] = jnp.concatenate([w_part, c_part], axis=0)                     # (2, E)


def _balance(v):
    # torch: x.float().var() / (x.float().mean()**2 + eps), unbiased var
    v = v.astype(jnp.float32)
    if v.shape[0] == 1:
        return jnp.zeros((), jnp.float32)
    return jnp.var(v, ddof=1) / (jnp.mean(v) ** 2 + 1e-10)


def moe_forward(x, prompt, params, *, num_experts, k, tile_n=1024):
    B, C, H, W = x.shape
    HW = H * W
    E = num_experts
    assert k <= E

    wg, w1, b1, w2, b2 = (params["w_g"], params["w1"], params["b1"],
                          params["w2"], params["b2"])
    hdim = w1.shape[-1]
    Cout = w2.shape[-1]
    Eh = E * hdim
    Eh_pad = ((Eh + 127) // 128) * 128      # gate logits start at a lane-tile boundary

    # ---- tile size: divides HW, multiple of 8, and >= 2 total grid steps (v7x) ----
    t = min(tile_n, HW)
    while t > 8 and (HW % t != 0 or t % 8 != 0):
        t -= 8
    t = max(t, 8)
    while (B * (HW // t) < 2 and t % 2 == 0 and (t // 2) % 8 == 0
           and HW % (t // 2) == 0):
        t //= 2
    tile_n = t
    assert HW % tile_n == 0 and tile_n % 8 == 0
    n_t = HW // tile_n

    # token-major activations, bf16 on the HBM->VMEM / MXU input path
    x_tok = jnp.transpose(x, (0, 2, 3, 1)).reshape(B, HW, C).astype(jnp.bfloat16)

    # prompt contribution to the gating logits (constant per batch): (B, 1, E), f32
    p_log = jnp.dot(prompt.astype(jnp.float32), wg[C:]).reshape(B, 1, E)

    # fused fc1 + gating weights: (C, Eh_pad + E), bf16
    w1_flat = jnp.transpose(w1, (1, 0, 2)).reshape(C, Eh)
    w1_flat = jnp.pad(w1_flat, ((0, 0), (0, Eh_pad - Eh)))
    w_big = jnp.concatenate([w1_flat, wg[:C]], axis=1).astype(jnp.bfloat16)
    b1_flat = jnp.pad(b1.reshape(1, Eh), ((0, 0), (0, Eh_pad - Eh))).astype(jnp.float32)

    # block-diagonal fc2 (padded hidden rows are zero -> contribute nothing)
    w2_bd = jnp.zeros((Eh_pad, E * Cout), jnp.float32)
    for e in range(E):
        w2_bd = w2_bd.at[e * hdim:(e + 1) * hdim, e * Cout:(e + 1) * Cout].set(w2[e])
    w2_bd = w2_bd.astype(jnp.bfloat16)
    b2_flat = b2.reshape(1, E * Cout).astype(jnp.float32)

    rep_m = jnp.repeat(jnp.eye(E, dtype=jnp.float32), Cout, axis=1)   # (E, E*Cout)
    sum_m = jnp.tile(jnp.eye(Cout, dtype=jnp.float32), (E, 1))        # (E*Cout, Cout)

    # advisory cost estimate so XLA schedules the surrounding glue sensibly
    N = B * HW
    cost = pl.CostEstimate(
        flops=int(2 * N * (C * (Eh_pad + E) + Eh_pad * E * Cout
                           + E * E * Cout + E * Cout * Cout)),
        transcendentals=int(N * (Eh_pad + E * Cout + E + Cout)),
        bytes_accessed=int(x_tok.size * 2 + N * Cout * 4 + B * n_t * 2 * E * 4
                           + (w_big.size + w2_bd.size) * 2
                           + (b1_flat.size + b2_flat.size + rep_m.size + sum_m.size) * 4))

    kernel = functools.partial(_moe_kernel, num_experts=E, k=k, eh_pad=Eh_pad)
    y_tok, stats = pl.pallas_call(
        kernel,
        out_shape=(jax.ShapeDtypeStruct((B, HW, Cout), jnp.float32),
                   jax.ShapeDtypeStruct((B, n_t, 2, E), jnp.float32)),
        grid_spec=pltpu.PrefetchScalarGridSpec(
            num_scalar_prefetch=0,
            grid=(B, n_t),
            in_specs=[
                pl.BlockSpec((1, tile_n, C), lambda b, n: (b, n, 0)),
                pl.BlockSpec((1, 1, E), lambda b, n: (b, 0, 0)),
                pl.BlockSpec(w_big.shape, lambda b, n: (0, 0)),
                pl.BlockSpec(b1_flat.shape, lambda b, n: (0, 0)),
                pl.BlockSpec(w2_bd.shape, lambda b, n: (0, 0)),
                pl.BlockSpec(b2_flat.shape, lambda b, n: (0, 0)),
                pl.BlockSpec(rep_m.shape, lambda b, n: (0, 0)),
                pl.BlockSpec(sum_m.shape, lambda b, n: (0, 0)),
            ],
            out_specs=[
                pl.BlockSpec((1, tile_n, Cout), lambda b, n: (b, n, 0)),
                pl.BlockSpec((1, 1, 2, E), lambda b, n: (b, n, 0, 0)),
            ],
        ),
        compiler_params=pltpu.CompilerParams(
            dimension_semantics=("parallel", "parallel")),
        cost_estimate=cost,
    )(x_tok, p_log, w_big, b1_flat, w2_bd, b2_flat, rep_m, sum_m)

    # tiny glue: balance losses (Weight = gates.sum(0);  s = (gates > 0).sum(0))
    Weight = stats[:, :, 0, :].sum(axis=(0, 1))
    s = stats[:, :, 1, :].sum(axis=(0, 1))
    loss = _balance(Weight) + _balance(s)

    # rearrange 'b (h w) c -> b c h w'
    y = y_tok.reshape(B, H, W, Cout).transpose(0, 3, 1, 2)
    return y, loss


def init_params(key, input_size, output_size, mlp_ratio, num_experts):
    h = int(input_size * mlp_ratio)
    ks = jax.random.split(key, 5)
    return dict(
        w_g=jax.random.normal(ks[0], (2 * input_size, num_experts), jnp.float32),
        w1=0.1 * jax.random.normal(ks[1], (num_experts, input_size, h), jnp.float32),
        b1=0.01 * jax.random.normal(ks[2], (num_experts, h), jnp.float32),
        w2=0.1 * jax.random.normal(ks[3], (num_experts, h, output_size), jnp.float32),
        b2=0.01 * jax.random.normal(ks[4], (num_experts, output_size), jnp.float32),
    )


if __name__ == "__main__":
    key = jax.random.PRNGKey(0)
    B, C, H, W = 2, 16, 16, 16           # N = B*H*W = 512 tokens
    out_size, mlp_ratio, E, K = 16, 2.0, 4, 2

    kx, kp, kparam = jax.random.split(key, 3)
    x = jax.random.normal(kx, (B, C, H, W), jnp.float32)
    prompt = jax.random.normal(kp, (B, C), jnp.float32)
    params = init_params(kparam, C, out_size, mlp_ratio, E)

    y, loss = moe_forward(x, prompt, params, num_experts=E, k=K)
    jax.block_until_ready((y, loss))
    assert y.shape == (B, out_size, H, W)
    assert loss.shape == ()
    print("KERNEL_OK")
</pallas_src>

<mosaic_0001>
module attributes {stable_mosaic.version = 11 : i64} {
  func.func @_moe_kernel(%arg0: i32, %arg1: i32, %arg2: memref<1x256x16xbf16, #tpu.memory_space<vmem>>, %arg3: memref<1x1x4xf32, #tpu.memory_space<vmem>>, %arg4: memref<16x132xbf16, #tpu.memory_space<vmem>>, %arg5: memref<1x128xf32, #tpu.memory_space<vmem>>, %arg6: memref<128x64xbf16, #tpu.memory_space<vmem>>, %arg7: memref<1x64xf32, #tpu.memory_space<vmem>>, %arg8: memref<4x64xf32, #tpu.memory_space<vmem>>, %arg9: memref<64x16xf32, #tpu.memory_space<vmem>>, %arg10: memref<1x256x16xf32, #tpu.memory_space<vmem>>, %arg11: memref<1x1x2x4xf32, #tpu.memory_space<vmem>>) attributes {dimension_semantics = [#tpu.dimension_semantics<parallel>, #tpu.dimension_semantics<parallel>], iteration_bounds = array<i64: 2, 1>, scalar_prefetch = 0 : i64, scratch_operands = 0 : i64, tpu.core_type = #tpu.core_type<tc>, window_params = [{transform_indices = @transform_0, window_bounds = array<i64: 1, 256, 16>}, {transform_indices = @transform_1, window_bounds = array<i64: 1, 1, 4>}, {pipeline_mode = #tpu.pipeline_mode<synchronous>, transform_indices = @transform_2, window_bounds = array<i64: 16, 132>}, {pipeline_mode = #tpu.pipeline_mode<synchronous>, transform_indices = @transform_3, window_bounds = array<i64: 1, 128>}, {pipeline_mode = #tpu.pipeline_mode<synchronous>, transform_indices = @transform_4, window_bounds = array<i64: 128, 64>}, {pipeline_mode = #tpu.pipeline_mode<synchronous>, transform_indices = @transform_5, window_bounds = array<i64: 1, 64>}, {pipeline_mode = #tpu.pipeline_mode<synchronous>, transform_indices = @transform_6, window_bounds = array<i64: 4, 64>}, {pipeline_mode = #tpu.pipeline_mode<synchronous>, transform_indices = @transform_7, window_bounds = array<i64: 64, 16>}, {transform_indices = @transform_8, window_bounds = array<i64: 1, 256, 16>}, {transform_indices = @transform_9, window_bounds = array<i64: 1, 1, 2, 4>}]} {
    %c0 = arith.constant 0 : index
    %c0_0 = arith.constant 0 : index
    %c0_1 = arith.constant 0 : index
    %0 = vector.load %arg2[%c0, %c0_0, %c0_1] : memref<1x256x16xbf16, #tpu.memory_space<vmem>>, vector<1x256x16xbf16>
    %1 = vector.shape_cast %0 : vector<1x256x16xbf16> to vector<256x16xbf16>
    %c0_2 = arith.constant 0 : index
    %c0_3 = arith.constant 0 : index
    %2 = vector.load %arg4[%c0_2, %c0_3] : memref<16x132xbf16, #tpu.memory_space<vmem>>, vector<16x132xbf16>
    %cst = arith.constant dense<0.000000e+00> : vector<256x132xf32>
    %3 = tpu.matmul %1, %2, %cst {dimension_numbers = #tpu.dot_dimension_numbers<[1], [0], [0], [1], [0, 0, 1, 1], [], []>} : vector<256x16xbf16>, vector<16x132xbf16>, vector<256x132xf32> -> vector<256x132xf32>
    %4 = vector.extract_strided_slice %3 {offsets = [0, 128], sizes = [256, 4], strides = [1, 1]} : vector<256x132xf32> to vector<256x4xf32>
    %c0_4 = arith.constant 0 : index
    %c0_5 = arith.constant 0 : index
    %c0_6 = arith.constant 0 : index
    %5 = vector.load %arg3[%c0_4, %c0_5, %c0_6] : memref<1x1x4xf32, #tpu.memory_space<vmem>>, vector<1x1x4xf32>
    %6 = vector.shape_cast %5 : vector<1x1x4xf32> to vector<1x4xf32>
    %7 = vector.broadcast %6 : vector<1x4xf32> to vector<256x4xf32>
    %8 = arith.addf %4, %7 : vector<256x4xf32>
    %9 = tpu.iota {dimensions = array<i32: 1>} : vector<256x4xi32>
    %false = arith.constant false
    %10 = vector.broadcast %false : i1 to vector<256x4xi1>
    %cst_7 = arith.constant dense<0xFF800000> : vector<256xf32>
    %11 = vector.multi_reduction <maximumf>, %8, %cst_7 [1] : vector<256x4xf32> to vector<256xf32>
    %12 = vector.shape_cast %11 : vector<256xf32> to vector<256x1xf32>
    %13 = vector.broadcast %12 : vector<256x1xf32> to vector<256x4xf32>
    %14 = arith.cmpf oeq, %8, %13 : vector<256x4xf32>
    %c4_i32 = arith.constant 4 : i32
    %15 = vector.broadcast %c4_i32 : i32 to vector<256x4xi32>
    %16 = arith.select %14, %9, %15 : vector<256x4xi1>, vector<256x4xi32>
    %cst_8 = arith.constant dense<2147483647> : vector<256xi32>
    %17 = vector.multi_reduction <minsi>, %16, %cst_8 [1] : vector<256x4xi32> to vector<256xi32>
    %18 = vector.shape_cast %17 : vector<256xi32> to vector<256x1xi32>
    %19 = vector.broadcast %18 : vector<256x1xi32> to vector<256x4xi32>
    %20 = arith.cmpi eq, %9, %19 : vector<256x4xi32>
    %21 = arith.ori %10, %20 : vector<256x4xi1>
    %cst_9 = arith.constant -1.000000e+30 : f32
    %22 = vector.broadcast %cst_9 : f32 to vector<256x4xf32>
    %23 = arith.select %20, %22, %8 : vector<256x4xi1>, vector<256x4xf32>
    %cst_10 = arith.constant dense<0xFF800000> : vector<256xf32>
    %24 = vector.multi_reduction <maximumf>, %23, %cst_10 [1] : vector<256x4xf32> to vector<256xf32>
    %25 = vector.shape_cast %24 : vector<256xf32> to vector<256x1xf32>
    %26 = vector.broadcast %25 : vector<256x1xf32> to vector<256x4xf32>
    %27 = arith.cmpf oeq, %23, %26 : vector<256x4xf32>
    %c4_i32_11 = arith.constant 4 : i32
    %28 = vector.broadcast %c4_i32_11 : i32 to vector<256x4xi32>
    %29 = arith.select %27, %9, %28 : vector<256x4xi1>, vector<256x4xi32>
    %cst_12 = arith.constant dense<2147483647> : vector<256xi32>
    %30 = vector.multi_reduction <minsi>, %29, %cst_12 [1] : vector<256x4xi32> to vector<256xi32>
    %31 = vector.shape_cast %30 : vector<256xi32> to vector<256x1xi32>
    %32 = vector.broadcast %31 : vector<256x1xi32> to vector<256x4xi32>
    %33 = arith.cmpi eq, %9, %32 : vector<256x4xi32>
    %34 = arith.ori %21, %33 : vector<256x4xi1>
    %cst_13 = arith.constant -1.000000e+30 : f32
    %35 = vector.broadcast %cst_13 : f32 to vector<256x4xf32>
    %36 = arith.select %34, %8, %35 : vector<256x4xi1>, vector<256x4xf32>
    %cst_14 = arith.constant dense<0xFF800000> : vector<256xf32>
    %37 = vector.multi_reduction <maximumf>, %36, %cst_14 [1] : vector<256x4xf32> to vector<256xf32>
    %38 = vector.shape_cast %37 : vector<256xf32> to vector<256x1xf32>
    %39 = vector.broadcast %38 : vector<256x1xf32> to vector<256x4xf32>
    %40 = arith.subf %36, %39 : vector<256x4xf32>
    %41 = math.exp %40 : vector<256x4xf32>
    %cst_15 = arith.constant 0.000000e+00 : f32
    %42 = vector.broadcast %cst_15 : f32 to vector<256x4xf32>
    %43 = arith.select %34, %41, %42 : vector<256x4xi1>, vector<256x4xf32>
    %cst_16 = arith.constant dense<0.000000e+00> : vector<256xf32>
    %44 = vector.multi_reduction <add>, %43, %cst_16 [1] : vector<256x4xf32> to vector<256xf32>
    %45 = vector.shape_cast %44 : vector<256xf32> to vector<256x1xf32>
    %46 = vector.broadcast %45 : vector<256x1xf32> to vector<256x4xf32>
    %47 = arith.divf %43, %46 : vector<256x4xf32>
    %48 = vector.extract_strided_slice %3 {offsets = [0, 0], sizes = [256, 128], strides = [1, 1]} : vector<256x132xf32> to vector<256x128xf32>
    %c0_17 = arith.constant 0 : index
    %c0_18 = arith.constant 0 : index
    %49 = vector.load %arg5[%c0_17, %c0_18] : memref<1x128xf32, #tpu.memory_space<vmem>>, vector<1x128xf32>
    %50 = vector.broadcast %49 : vector<1x128xf32> to vector<256x128xf32>
    %51 = arith.addf %48, %50 : vector<256x128xf32>
    %cst_19 = arith.constant 5.000000e-01 : f32
    %52 = vector.broadcast %cst_19 : f32 to vector<256x128xf32>
    %53 = arith.mulf %52, %51 : vector<256x128xf32>
    %cst_20 = arith.constant 4.471500e-02 : f32
    %54 = vector.broadcast %cst_20 : f32 to vector<256x128xf32>
    %55 = arith.mulf %54, %51 : vector<256x128xf32>
    %56 = arith.mulf %55, %51 : vector<256x128xf32>
    %57 = arith.mulf %56, %51 : vector<256x128xf32>
    %58 = arith.addf %51, %57 : vector<256x128xf32>
    %cst_21 = arith.constant 0.797884583 : f32
    %59 = vector.broadcast %cst_21 : f32 to vector<256x128xf32>
    %60 = arith.mulf %59, %58 : vector<256x128xf32>
    %61 = math.tanh %60 : vector<256x128xf32>
    %cst_22 = arith.constant 1.000000e+00 : f32
    %62 = vector.broadcast %cst_22 : f32 to vector<256x128xf32>
    %63 = arith.addf %62, %61 : vector<256x128xf32>
    %64 = arith.mulf %53, %63 : vector<256x128xf32>
    %65 = arith.truncf %64 : vector<256x128xf32> to vector<256x128xbf16>
    %c0_23 = arith.constant 0 : index
    %c0_24 = arith.constant 0 : index
    %66 = vector.load %arg6[%c0_23, %c0_24] : memref<128x64xbf16, #tpu.memory_space<vmem>>, vector<128x64xbf16>
    %cst_25 = arith.constant dense<0.000000e+00> : vector<256x64xf32>
    %67 = tpu.matmul %65, %66, %cst_25 {dimension_numbers = #tpu.dot_dimension_numbers<[1], [0], [0], [1], [0, 0, 1, 1], [], []>} : vector<256x128xbf16>, vector<128x64xbf16>, vector<256x64xf32> -> vector<256x64xf32>
    %c0_26 = arith.constant 0 : index
    %c0_27 = arith.constant 0 : index
    %68 = vector.load %arg7[%c0_26, %c0_27] : memref<1x64xf32, #tpu.memory_space<vmem>>, vector<1x64xf32>
    %69 = vector.broadcast %68 : vector<1x64xf32> to vector<256x64xf32>
    %70 = arith.addf %67, %69 : vector<256x64xf32>
    %cst_28 = arith.constant dense<0xFF800000> : vector<256xf32>
    %71 = vector.multi_reduction <maximumf>, %70, %cst_28 [1] : vector<256x64xf32> to vector<256xf32>
    %72 = vector.shape_cast %71 : vector<256xf32> to vector<256x1xf32>
    %73 = vector.broadcast %72 : vector<256x1xf32> to vector<256x64xf32>
    %74 = arith.subf %70, %73 : vector<256x64xf32>
    %75 = math.exp %74 : vector<256x64xf32>
    %c0_29 = arith.constant 0 : index
    %c0_30 = arith.constant 0 : index
    %76 = vector.load %arg8[%c0_29, %c0_30] : memref<4x64xf32, #tpu.memory_space<vmem>>, vector<4x64xf32>
    %cst_31 = arith.constant dense<0.000000e+00> : vector<256x64xf32>
    %77 = tpu.matmul %47, %76, %cst_31 {dimension_numbers = #tpu.dot_dimension_numbers<[1], [0], [0], [1], [0, 0, 1, 1], [], []>} : vector<256x4xf32>, vector<4x64xf32>, vector<256x64xf32> -> vector<256x64xf32>
    %78 = arith.mulf %75, %77 : vector<256x64xf32>
    %c0_32 = arith.constant 0 : index
    %c0_33 = arith.constant 0 : index
    %79 = vector.load %arg9[%c0_32, %c0_33] : memref<64x16xf32, #tpu.memory_space<vmem>>, vector<64x16xf32>
    %cst_34 = arith.constant dense<0.000000e+00> : vector<256x16xf32>
    %80 = tpu.matmul %78, %79, %cst_34 {dimension_numbers = #tpu.dot_dimension_numbers<[1], [0], [0], [1], [0, 0, 1, 1], [], []>} : vector<256x64xf32>, vector<64x16xf32>, vector<256x16xf32> -> vector<256x16xf32>
    %cst_35 = arith.constant 0.000000e+00 : f32
    %81 = vector.broadcast %cst_35 : f32 to vector<256x16xf32>
    %82 = arith.cmpf oeq, %80, %81 : vector<256x16xf32>
    %cst_36 = arith.constant 2.22044605E-16 : f32
    %83 = vector.broadcast %cst_36 : f32 to vector<256x16xf32>
    %84 = arith.select %82, %83, %80 : vector<256x16xi1>, vector<256x16xf32>
    %85 = math.log %84 : vector<256x16xf32>
    %86 = vector.broadcast %72 : vector<256x1xf32> to vector<256x16xf32>
    %87 = arith.addf %86, %85 : vector<256x16xf32>
    %c0_37 = arith.constant 0 : index
    %c0_38 = arith.constant 0 : index
    %c0_39 = arith.constant 0 : index
    %88 = vector.load %arg10[%c0_37, %c0_38, %c0_39] : memref<1x256x16xf32, #tpu.memory_space<vmem>>, vector<1x256x16xf32>
    %89 = vector.shape_cast %88 : vector<1x256x16xf32> to vector<256x16xf32>
    %90 = vector.shape_cast %87 : vector<256x16xf32> to vector<1x256x16xf32>
    tpu.vector_store %arg10[%c0_37, %c0_38, %c0_39], %90 {strides = array<i32>} : memref<1x256x16xf32, #tpu.memory_space<vmem>>, vector<1x256x16xf32>,
    %cst_40 = arith.constant dense<0.000000e+00> : vector<4xf32>
    %91 = vector.multi_reduction <add>, %47, %cst_40 [0] : vector<256x4xf32> to vector<4xf32>
    %92 = vector.shape_cast %91 : vector<4xf32> to vector<1x4xf32>
    %cst_41 = arith.constant 0.000000e+00 : f32
    %93 = vector.broadcast %cst_41 : f32 to vector<256x4xf32>
    %94 = arith.cmpf ogt, %47, %93 : vector<256x4xf32>
    %95 = arith.extui %94 : vector<256x4xi1> to vector<256x4xi32>
    %96 = arith.sitofp %95 : vector<256x4xi32> to vector<256x4xf32>
    %cst_42 = arith.constant dense<0.000000e+00> : vector<4xf32>
    %97 = vector.multi_reduction <add>, %96, %cst_42 [0] : vector<256x4xf32> to vector<4xf32>
    %98 = vector.shape_cast %97 : vector<4xf32> to vector<1x4xf32>
    %99 = tpu.concatenate %92, %98 in 0 : vector<1x4xf32>, vector<1x4xf32> -> vector<2x4xf32>
    %c0_43 = arith.constant 0 : index
    %c0_44 = arith.constant 0 : index
    %c0_45 = arith.constant 0 : index
    %c0_46 = arith.constant 0 : index
    %100 = vector.load %arg11[%c0_43, %c0_44, %c0_45, %c0_46] : memref<1x1x2x4xf32, #tpu.memory_space<vmem>>, vector<1x1x2x4xf32>
    %101 = vector.shape_cast %100 : vector<1x1x2x4xf32> to vector<2x4xf32>
    %102 = vector.shape_cast %99 : vector<2x4xf32> to vector<1x1x2x4xf32>
    tpu.vector_store %arg11[%c0_43, %c0_44, %c0_45, %c0_46], %102 {strides = array<i32>} : memref<1x1x2x4xf32, #tpu.memory_space<vmem>>, vector<1x1x2x4xf32>,
    return
  }
  func.func @transform_0(%arg0: i32, %arg1: i32) -> (i32, i32, i32) {
    %c0_i32 = arith.constant 0 : i32
    %c0_i32_0 = arith.constant 0 : i32
    return %arg0, %arg1, %c0_i32 : i32, i32, i32
  }
  func.func @transform_1(%arg0: i32, %arg1: i32) -> (i32, i32, i32) {
    %c0_i32 = arith.constant 0 : i32
    %c0_i32_0 = arith.constant 0 : i32
    %c0_i32_1 = arith.constant 0 : i32
    return %arg0, %c0_i32, %c0_i32_0 : i32, i32, i32
  }
  func.func @transform_2(%arg0: i32, %arg1: i32) -> (i32, i32) {
    %c0_i32 = arith.constant 0 : i32
    %c0_i32_0 = arith.constant 0 : i32
    %c0_i32_1 = arith.constant 0 : i32
    return %c0_i32, %c0_i32_0 : i32, i32
  }
  func.func @transform_3(%arg0: i32, %arg1: i32) -> (i32, i32) {
    %c0_i32 = arith.constant 0 : i32
    %c0_i32_0 = arith.constant 0 : i32
    %c0_i32_1 = arith.constant 0 : i32
    return %c0_i32, %c0_i32_0 : i32, i32
  }
  func.func @transform_4(%arg0: i32, %arg1: i32) -> (i32, i32) {
    %c0_i32 = arith.constant 0 : i32
    %c0_i32_0 = arith.constant 0 : i32
    %c0_i32_1 = arith.constant 0 : i32
    return %c0_i32, %c0_i32_0 : i32, i32
  }
  func.func @transform_5(%arg0: i32, %arg1: i32) -> (i32, i32) {
    %c0_i32 = arith.constant 0 : i32
    %c0_i32_0 = arith.constant 0 : i32
    %c0_i32_1 = arith.constant 0 : i32
    return %c0_i32, %c0_i32_0 : i32, i32
  }
  func.func @transform_6(%arg0: i32, %arg1: i32) -> (i32, i32) {
    %c0_i32 = arith.constant 0 : i32
    %c0_i32_0 = arith.constant 0 : i32
    %c0_i32_1 = arith.constant 0 : i32
    return %c0_i32, %c0_i32_0 : i32, i32
  }
  func.func @transform_7(%arg0: i32, %arg1: i32) -> (i32, i32) {
    %c0_i32 = arith.constant 0 : i32
    %c0_i32_0 = arith.constant 0 : i32
    %c0_i32_1 = arith.constant 0 : i32
    return %c0_i32, %c0_i32_0 : i32, i32
  }
  func.func @transform_8(%arg0: i32, %arg1: i32) -> (i32, i32, i32) {
    %c0_i32 = arith.constant 0 : i32
    %c0_i32_0 = arith.constant 0 : i32
    return %arg0, %arg1, %c0_i32 : i32, i32, i32
  }
  func.func @transform_9(%arg0: i32, %arg1: i32) -> (i32, i32, i32, i32) {
    %c0_i32 = arith.constant 0 : i32
    %c0_i32_0 = arith.constant 0 : i32
    %c0_i32_1 = arith.constant 0 : i32
    return %arg0, %arg1, %c0_i32, %c0_i32_0 : i32, i32, i32, i32
  }
}

</mosaic_0001>

<llo_original>
// kernel: tpu_custom_call.1
$region0: #{tpu_custom_call.1}
  #allocation0 [shape = 'u32[]', space=smem, size = 0x4, offset = 0x4, fixed_abs, tag = 'smem constant byte address 0x4 - core index']
  #allocation1 [shape = 'u32[72,128]{1,0:T(1,128)}', space=vmem, size = 0x9000, scoped, tag = 'internal scratch']
  %s0 = inlined_call_operand.vmem [shape: bf16[2,256,16], index: 0, kind: input, shape index: {}]
  %s1 = inlined_call_operand.vmem [shape: f32[2,1,4], index: 1, kind: input, shape index: {}]
  %s2 = inlined_call_operand.vmem [shape: bf16[16,132], index: 2, kind: input, shape index: {}]
  %s3 = inlined_call_operand.vmem [shape: f32[1,128], index: 3, kind: input, shape index: {}]
  %s4 = inlined_call_operand.vmem [shape: bf16[128,64], index: 4, kind: input, shape index: {}]
  %s5 = inlined_call_operand.vmem [shape: f32[1,64], index: 5, kind: input, shape index: {}]
  %s6 = inlined_call_operand.vmem [shape: f32[4,64], index: 6, kind: input, shape index: {}]
  %s7 = inlined_call_operand.vmem [shape: f32[64,16], index: 7, kind: input, shape index: {}]
  %s8 = inlined_call_operand.vmem [shape: f32[2,256,16], index: 8, kind: output, shape index: {0}]
  %s9 = inlined_call_operand.hbm [shape: f32[2,1,2,4], index: 9, kind: output, shape index: {1}]
  %10 = xla_tuple %s8, %s9
  %s11 = sld [smem:[#allocation0]]
  $region73: #{tpu_custom_call.1} parent=0
    _
  %s13 = ssub.s32 1, %s11
  %s14 = scalar_select 0, %s13, %s11
  $region1: #{tpu_custom_call.1} parent=0
    #allocation2 [shape = 'u8[2048]{0}', space=vmem, size = 0x800, scoped, tag = 'output window, operand 1']
    #allocation3 [shape = 's32[2]{0}', space=sflag, size = 0x8, scoped, tag = 'scoped memory for tpu_custom_call.1']
    %15 = vsyncpa [#allocation3], 0
    %s16 = scalar_lea.sflag [#allocation3], 1
    %17 = vsyncpa %s16, 0
    loop: start=0, step=1, limit=4
    $region2: #{tpu_custom_call.1} parent=1 // loop_pre_header
      _
    $region3: #{tpu_custom_call.1} parent=1 // loop_header
      %s19 = sphi 0, %s23
      %p20 = scmp.ge.s32.totalorder %s19, 4
      %s26 = sphi 0, %s38
      %s27 = sphi 0, %s34
      %s28 = sphi 0, %s26
      %s29 = sphi 0, %s27
      %s30 = sphi 0, %s28
      %s31 = sphi 0, %s29
      %s43 = sphi 0, %s45
      %s46 = sphi 0, %s43
      %s47 = sphi 0, %s46
      %s63 = sphi 0, %s47
      %s69 = sphi 0, %s71
      %s72 = sphi 0, %s69
      %s73 = sphi 0, %s72
      %s89 = sphi 0, %s73
      %s93 = sphi 0, %s93
      %s95 = sphi 0, %s93
      %s96 = sphi 0, %s95
      %s110 = sphi 0, %s96
      %s114 = sphi 0, %s114
      %s116 = sphi 0, %s114
      %s117 = sphi 0, %s116
      %s131 = sphi 0, %s117
      %s135 = sphi 0, %s135
      %s137 = sphi 0, %s135
      %s138 = sphi 0, %s137
      %s152 = sphi 0, %s138
      %s156 = sphi 0, %s156
      %s158 = sphi 0, %s156
      %s159 = sphi 0, %s158
      %s173 = sphi 0, %s159
      %s177 = sphi 0, %s177
      %s179 = sphi 0, %s177
      %s180 = sphi 0, %s179
      %s194 = sphi 0, %s180
      %s198 = sphi 0, %s198
      %s200 = sphi 0, %s198
      %s201 = sphi 0, %s200
      %s215 = sphi 0, %s201
      %s223 = sphi 0, %s225
      %s226 = sphi 0, %s223
      %s227 = sphi 0, %s226
      %s243 = sphi 0, %s227
      %s251 = sphi 0, %s253
      %s254 = sphi 0, %s251
      %s255 = sphi 0, %s254
      %s271 = sphi 0, %s255
    $region4: #{tpu_custom_call.1} parent=1 // loop_header_branch
      %22 = sbr.rel (%p20) target = $region8
    $region5: #{tpu_custom_call.1} parent=1 // loop_body
      %s24 = ssub.s32 %s19, 1
      %s25 = ssub.s32 %s19, 2
      %s32 = sadd.s32 1, %s27
      %p33 = scmp.ge.s32.totalorder %s32, 1
      %s34 = scalar_select %p33, 0, %s32
      %s35 = sadd.s32 1, %s26
      %s36 = scalar_select %p33, %s35, %s26
      %p37 = scmp.ge.s32.totalorder %s36, 2
      %s38 = scalar_select %p37, 0, %s36
      %s39 = ssub.s32 %s26, %s38
      %s40 = ssub.s32 %s27, %s34
      %s41 = sor.u32 %s39, %s40
      %p42 = scmp.eq.s32.totalorder %s41, 0
      %s44 = sadd.s32 %s43, 1
      %s45 = scalar_select %p42, %s43, %s44
      %p48 = pneg %p42
      %p49 = scmp.eq.s32.totalorder %s19, 1
      %p50 = por %p48, %p49
      %p51 = scmp.ne.s32.totalorder %s43, %s46
      %p52 = scmp.eq.s32.totalorder %s19, 0
      %p53 = por %p51, %p52
      %p54 = scmp.ne.s32.totalorder %s43, %s46
      %p55 = scmp.eq.s32.totalorder %s24, 1
      %p56 = por %p54, %p55
      %p57 = scmp.ne.s32.totalorder %s46, %s47
      %p58 = scmp.eq.s32.totalorder %s24, 0
      %p59 = por %p57, %p58
      %p60 = scmp.ne.s32.totalorder %s46, %s47
      %p61 = scmp.eq.s32.totalorder %s25, 1
      %p62 = por %p60, %p61
      %p64 = scmp.ne.s32.totalorder %s47, %s63
      %p65 = scmp.eq.s32.totalorder %s25, 0
      %p66 = por %p64, %p65
      %s67 = ssub.s32 %s26, %s38
      %p68 = scmp.eq.s32.totalorder %s67, 0
      %s70 = sadd.s32 %s69, 1
      %s71 = scalar_select %p68, %s69, %s70
      %p74 = pneg %p68
      %p75 = scmp.eq.s32.totalorder %s19, 1
      %p76 = por %p74, %p75
      %p77 = scmp.ne.s32.totalorder %s69, %s72
      %p78 = scmp.eq.s32.totalorder %s19, 0
      %p79 = por %p77, %p78
      %p80 = scmp.ne.s32.totalorder %s69, %s72
      %p81 = scmp.eq.s32.totalorder %s24, 1
      %p82 = por %p80, %p81
      %p83 = scmp.ne.s32.totalorder %s72, %s73
      %p84 = scmp.eq.s32.totalorder %s24, 0
      %p85 = por %p83, %p84
      %p86 = scmp.ne.s32.totalorder %s72, %s73
      %p87 = scmp.eq.s32.totalorder %s25, 1
      %p88 = por %p86, %p87
      %p90 = scmp.ne.s32.totalorder %s73, %s89
      %p91 = scmp.eq.s32.totalorder %s25, 0
      %p92 = por %p90, %p91
      %s94 = sadd.s32 %s93, 1
      %p97 = scmp.eq.s32.totalorder %s19, 1
      %p98 = scmp.ne.s32.totalorder %s93, %s95
      %p99 = scmp.eq.s32.totalorder %s19, 0
      %p100 = por %p98, %p99
      %p101 = scmp.ne.s32.totalorder %s93, %s95
      %p102 = scmp.eq.s32.totalorder %s24, 1
      %p103 = por %p101, %p102
      %p104 = scmp.ne.s32.totalorder %s95, %s96
      %p105 = scmp.eq.s32.totalorder %s24, 0
      %p106 = por %p104, %p105
      %p107 = scmp.ne.s32.totalorder %s95, %s96
      %p108 = scmp.eq.s32.totalorder %s25, 1
      %p109 = por %p107, %p108
      %p111 = scmp.ne.s32.totalorder %s96, %s110
      %p112 = scmp.eq.s32.totalorder %s25, 0
      %p113 = por %p111, %p112
      %s115 = sadd.s32 %s114, 1
      %p118 = scmp.eq.s32.totalorder %s19, 1
      %p119 = scmp.ne.s32.totalorder %s114, %s116
      %p120 = scmp.eq.s32.totalorder %s19, 0
      %p121 = por %p119, %p120
      %p122 = scmp.ne.s32.totalorder %s114, %s116
      %p123 = scmp.eq.s32.totalorder %s24, 1
      %p124 = por %p122, %p123
      %p125 = scmp.ne.s32.totalorder %s116, %s117
      %p126 = scmp.eq.s32.totalorder %s24, 0
      %p127 = por %p125, %p126
      %p128 = scmp.ne.s32.totalorder %s116, %s117
      %p129 = scmp.eq.s32.totalorder %s25, 1
      %p130 = por %p128, %p129
      %p132 = scmp.ne.s32.totalorder %s117, %s131
      %p133 = scmp.eq.s32.totalorder %s25, 0
      %p134 = por %p132, %p133
      %s136 = sadd.s32 %s135, 1
      %p139 = scmp.eq.s32.totalorder %s19, 1
      %p140 = scmp.ne.s32.totalorder %s135, %s137
      %p141 = scmp.eq.s32.totalorder %s19, 0
      %p142 = por %p140, %p141
      %p143 = scmp.ne.s32.totalorder %s135, %s137
      %p144 = scmp.eq.s32.totalorder %s24, 1
      %p145 = por %p143, %p144
      %p146 = scmp.ne.s32.totalorder %s137, %s138
      %p147 = scmp.eq.s32.totalorder %s24, 0
      %p148 = por %p146, %p147
      %p149 = scmp.ne.s32.totalorder %s137, %s138
      %p150 = scmp.eq.s32.totalorder %s25, 1
      %p151 = por %p149, %p150
      %p153 = scmp.ne.s32.totalorder %s138, %s152
      %p154 = scmp.eq.s32.totalorder %s25, 0
      %p155 = por %p153, %p154
      %s157 = sadd.s32 %s156, 1
      %p160 = scmp.eq.s32.totalorder %s19, 1
      %p161 = scmp.ne.s32.totalorder %s156, %s158
      %p162 = scmp.eq.s32.totalorder %s19, 0
      %p163 = por %p161, %p162
      %p164 = scmp.ne.s32.totalorder %s156, %s158
      %p165 = scmp.eq.s32.totalorder %s24, 1
      %p166 = por %p164, %p165
      %p167 = scmp.ne.s32.totalorder %s158, %s159
      %p168 = scmp.eq.s32.totalorder %s24, 0
      %p169 = por %p167, %p168
      %p170 = scmp.ne.s32.totalorder %s158, %s159
      %p171 = scmp.eq.s32.totalorder %s25, 1
      %p172 = por %p170, %p171
      %p174 = scmp.ne.s32.totalorder %s159, %s173
      %p175 = scmp.eq.s32.totalorder %s25, 0
      %p176 = por %p174, %p175
      %s178 = sadd.s32 %s177, 1
      %p181 = scmp.eq.s32.totalorder %s19, 1
      %p182 = scmp.ne.s32.totalorder %s177, %s179
      %p183 = scmp.eq.s32.totalorder %s19, 0
      %p184 = por %p182, %p183
      %p185 = scmp.ne.s32.totalorder %s177, %s179
      %p186 = scmp.eq.s32.totalorder %s24, 1
      %p187 = por %p185, %p186
      %p188 = scmp.ne.s32.totalorder %s179, %s180
      %p189 = scmp.eq.s32.totalorder %s24, 0
      %p190 = por %p188, %p189
      %p191 = scmp.ne.s32.totalorder %s179, %s180
      %p192 = scmp.eq.s32.totalorder %s25, 1
      %p193 = por %p191, %p192
      %p195 = scmp.ne.s32.totalorder %s180, %s194
      %p196 = scmp.eq.s32.totalorder %s25, 0
      %p197 = por %p195, %p196
      %s199 = sadd.s32 %s198, 1
      %p202 = scmp.eq.s32.totalorder %s19, 1
      %p203 = scmp.ne.s32.totalorder %s198, %s200
      %p204 = scmp.eq.s32.totalorder %s19, 0
      %p205 = por %p203, %p204
      %p206 = scmp.ne.s32.totalorder %s198, %s200
      %p207 = scmp.eq.s32.totalorder %s24, 1
      %p208 = por %p206, %p207
      %p209 = scmp.ne.s32.totalorder %s200, %s201
      %p210 = scmp.eq.s32.totalorder %s24, 0
      %p211 = por %p209, %p210
      %p212 = scmp.ne.s32.totalorder %s200, %s201
      %p213 = scmp.eq.s32.totalorder %s25, 1
      %p214 = por %p212, %p213
      %p216 = scmp.ne.s32.totalorder %s201, %s215
      %p217 = scmp.eq.s32.totalorder %s25, 0
      %p218 = por %p216, %p217
      %s219 = ssub.s32 %s26, %s38
      %s220 = ssub.s32 %s27, %s34
      %s221 = sor.u32 %s219, %s220
      %p222 = scmp.eq.s32.totalorder %s221, 0
      %s224 = sadd.s32 %s223, 1
      %s225 = scalar_select %p222, %s223, %s224
      %p228 = pneg %p222
      %p229 = scmp.eq.s32.totalorder %s19, 1
      %p230 = por %p228, %p229
      %p231 = scmp.ne.s32.totalorder %s223, %s226
      %p232 = scmp.eq.s32.totalorder %s19, 0
      %p233 = por %p231, %p232
      %p234 = scmp.ne.s32.totalorder %s223, %s226
      %p235 = scmp.eq.s32.totalorder %s24, 1
      %p236 = por %p234, %p235
      %p237 = scmp.ne.s32.totalorder %s226, %s227
      %p238 = scmp.eq.s32.totalorder %s24, 0
      %p239 = por %p237, %p238
      %p240 = scmp.ne.s32.totalorder %s226, %s227
      %p241 = scmp.eq.s32.totalorder %s25, 1
      %p242 = por %p240, %p241
      %p244 = scmp.ne.s32.totalorder %s227, %s243
      %p245 = scmp.eq.s32.totalorder %s25, 0
      %p246 = por %p244, %p245
      %s247 = ssub.s32 %s26, %s38
      %s248 = ssub.s32 %s27, %s34
      %s249 = sor.u32 %s247, %s248
      %p250 = scmp.eq.s32.totalorder %s249, 0
      %s252 = sadd.s32 %s251, 1
      %s253 = scalar_select %p250, %s251, %s252
      %p256 = pneg %p250
      %p257 = scmp.eq.s32.totalorder %s19, 1
      %p258 = por %p256, %p257
      %p259 = scmp.ne.s32.totalorder %s251, %s254
      %p260 = scmp.eq.s32.totalorder %s19, 0
      %p261 = por %p259, %p260
      %p262 = scmp.ne.s32.totalorder %s251, %s254
      %p263 = scmp.eq.s32.totalorder %s24, 1
      %p264 = por %p262, %p263
      %p265 = scmp.ne.s32.totalorder %s254, %s255
      %p266 = scmp.eq.s32.totalorder %s24, 0
      %p267 = por %p265, %p266
      %p268 = scmp.ne.s32.totalorder %s254, %s255
      %p269 = scmp.eq.s32.totalorder %s25, 1
      %p270 = por %p268, %p269
      %p272 = scmp.ne.s32.totalorder %s255, %s271
      %p273 = scmp.eq.s32.totalorder %s25, 0
      %p274 = por %p272, %p273
      %p275 = scmp.le.s32.totalorder 1, %s19
      %p276 = scmp.lt.s32.totalorder %s19, 3
      %p277 = pnand %p275, %p276
      %p278 = pneg %p277
      // Predicated region
      $region9: #{tpu_custom_call.1} parent=5 // pred_check
        _
      $region10: #{tpu_custom_call.1} parent=5 // pred_check_branch
        %280 = sbr.rel (%p277) target = $region12
      $region11: #{tpu_custom_call.1} parent=5 // pred_region
        %s281 = ssub.s32 %s19, 1
        // Predicated region
        $region13: #{tpu_custom_call.1} parent=11 // pred_check
          %p282 = pneg %p106
        $region14: #{tpu_custom_call.1} parent=11 // pred_check_branch
          %284 = sbr.rel (%p282) target = $region16
        $region15: #{tpu_custom_call.1} parent=11 // pred_region
          _
        $region16: #{tpu_custom_call.1} parent=11 // pred_fallthru
          _
        // Predicated region
        $region17: #{tpu_custom_call.1} parent=11 // pred_check
          %p285 = pneg %p127
        $region18: #{tpu_custom_call.1} parent=11 // pred_check_branch
          %287 = sbr.rel (%p285) target = $region20
        $region19: #{tpu_custom_call.1} parent=11 // pred_region
          _
        $region20: #{tpu_custom_call.1} parent=11 // pred_fallthru
          _
        // Predicated region
        $region21: #{tpu_custom_call.1} parent=11 // pred_check
          %p288 = pneg %p148
        $region22: #{tpu_custom_call.1} parent=11 // pred_check_branch
          %290 = sbr.rel (%p288) target = $region24
        $region23: #{tpu_custom_call.1} parent=11 // pred_region
          _
        $region24: #{tpu_custom_call.1} parent=11 // pred_fallthru
          _
        // Predicated region
        $region25: #{tpu_custom_call.1} parent=11 // pred_check
          %p291 = pneg %p169
        $region26: #{tpu_custom_call.1} parent=11 // pred_check_branch
          %293 = sbr.rel (%p291) target = $region28
        $region27: #{tpu_custom_call.1} parent=11 // pred_region
          _
        $region28: #{tpu_custom_call.1} parent=11 // pred_fallthru
          _
        // Predicated region
        $region29: #{tpu_custom_call.1} parent=11 // pred_check
          %p294 = pneg %p190
        $region30: #{tpu_custom_call.1} parent=11 // pred_check_branch
          %296 = sbr.rel (%p294) target = $region32
        $region31: #{tpu_custom_call.1} parent=11 // pred_region
          _
        $region32: #{tpu_custom_call.1} parent=11 // pred_fallthru
          _
        // Predicated region
        $region33: #{tpu_custom_call.1} parent=11 // pred_check
          %p297 = pneg %p211
        $region34: #{tpu_custom_call.1} parent=11 // pred_check_branch
          %299 = sbr.rel (%p297) target = $region36
        $region35: #{tpu_custom_call.1} parent=11 // pred_region
          _
        $region36: #{tpu_custom_call.1} parent=11 // pred_fallthru
          _
      $region12: #{tpu_custom_call.1} parent=5 // pred_fallthru
        _
      %p300 = scmp.lt.s32.totalorder %s19, 2
      // Predicated region
      $region37: #{tpu_custom_call.1} parent=5 // pred_check
        %p301 = pneg %p300
      $region38: #{tpu_custom_call.1} parent=5 // pred_check_branch
        %303 = sbr.rel (%p301) target = $region40
      $region39: #{tpu_custom_call.1} parent=5 // pred_region
        // Predicated region
        $region41: #{tpu_custom_call.1} parent=39 // pred_check
          %p304 = pneg %p53
        $region42: #{tpu_custom_call.1} parent=39 // pred_check_branch
          %306 = sbr.rel (%p304) target = $region44
        $region43: #{tpu_custom_call.1} parent=39 // pred_region
          %s307 = smul.u32 32, %s27
          %p308 = scmp.lt.s32.totalorder %s26, 1
          %s309 = scalar_select %p308, %s26, 1
          %p310 = scmp.lt.s32.totalorder %s307, 31
          %s311 = scalar_select %p310, %s307, 31
          %s312 = smul.addr %s309, 32
          %s313 = sadd.s32 %s311, %s312
          %s314 = smul.addr %s313, 4
          %s315 = scalar_lea.vmem %s0, %s314
          %s316 = smul.u32 32, %s27
        $region44: #{tpu_custom_call.1} parent=39 // pred_fallthru
          _
        // Predicated region
        $region45: #{tpu_custom_call.1} parent=39 // pred_check
          %p317 = pneg %p79
        $region46: #{tpu_custom_call.1} parent=39 // pred_check_branch
          %319 = sbr.rel (%p317) target = $region48
        $region47: #{tpu_custom_call.1} parent=39 // pred_region
          %p320 = scmp.lt.s32.totalorder %s26, 1
          %s321 = scalar_select %p320, %s26, 1
          %s322 = scalar_lea.vmem %s1, %s321
        $region48: #{tpu_custom_call.1} parent=39 // pred_fallthru
          _
      $region40: #{tpu_custom_call.1} parent=5 // pred_fallthru
        _
      %p323 = scmp.le.s32.totalorder 1, %s19
      %p324 = scmp.lt.s32.totalorder %s19, 3
      %p325 = pnand %p323, %p324
      %p326 = pneg %p325
      // Predicated region
      $region49: #{tpu_custom_call.1} parent=5 // pred_check
        _
      $region50: #{tpu_custom_call.1} parent=5 // pred_check_branch
        %328 = sbr.rel (%p325) target = $region52
      $region51: #{tpu_custom_call.1} parent=5 // pred_region
        %s329 = ssub.s32 %s19, 1
        %s330 = smul.u32 32, %s29
        %p331 = scmp.lt.s32.totalorder %s28, 1
        %s332 = scalar_select %p331, %s28, 1
        %p333 = scmp.lt.s32.totalorder %s330, 31
        %s334 = scalar_select %p333, %s330, 31
        %s335 = smul.addr %s332, 32
        %s336 = sadd.s32 %s334, %s335
        %s337 = smul.addr %s336, 4
        %s338 = scalar_lea.vmem %s0, %s337
        %p339 = pneg %p59
        %p340 = pneg %p56
        %p341 = scmp.lt.s32.totalorder %s28, 1
        %s342 = scalar_select %p341, %s28, 1
        %s343 = scalar_lea.vmem %s1, %s342
        %p344 = pneg %p85
        %p345 = pneg %p82
        %p346 = pneg %p106
        %p347 = pneg %p103
        %p348 = pneg %p127
        %p349 = pneg %p124
        %p350 = pneg %p148
        %p351 = pneg %p145
        %p352 = pneg %p169
        %p353 = pneg %p166
        %p354 = pneg %p190
        %p355 = pneg %p187
        %p356 = pneg %p211
        %p357 = pneg %p208
        %p358 = pneg %p239
        %p359 = pneg %p236
        %s360 = smul.u32 32, %s29
        %p361 = scmp.lt.s32.totalorder %s28, 1
        %s362 = scalar_select %p361, %s28, 1
        %p363 = scmp.lt.s32.totalorder %s360, 31
        %s364 = scalar_select %p363, %s360, 31
        %s365 = smul.addr %s362, 32
        %s366 = sadd.s32 %s364, %s365
        %s367 = smul.addr %s366, 8
        %s368 = scalar_lea.vmem %s8, %s367
        %p369 = pneg %p267
        %p370 = pneg %p264
        %s371 = sand.u32 %s254, 1
        %s372 = scalar_lea.sflag [#allocation3], %s371
        %s373 = sand.u32 %s254, 1
        %s374 = smul.addr %s373, 2
        %s375 = scalar_lea.vmem [#allocation2], %s374
        %s376 = smul.u32 32, %s29
        %p377 = scmp.lt.s32.totalorder %s28, 1
        %s378 = scalar_select %p377, %s28, 1
        %p379 = scmp.lt.s32.totalorder %s376, 31
        %s380 = scalar_select %p379, %s376, 31
        %s381 = smul.addr %s378, 32
        %s382 = sadd.s32 %s380, %s381
        %s383 = smul.addr %s382, 4
        %s384 = scalar_lea.vmem %s0, %s383
        %s385 = smul.u32 32, %s29
        %p386 = scmp.lt.s32.totalorder %s28, 1
        %s387 = scalar_select %p386, %s28, 1
        %s388 = scalar_lea.vmem %s1, %s387
        %s389 = smul.u32 32, %s29
        %p390 = scmp.lt.s32.totalorder %s28, 1
        %s391 = scalar_select %p390, %s28, 1
        %p392 = scmp.lt.s32.totalorder %s389, 31
        %s393 = scalar_select %p392, %s389, 31
        %s394 = smul.addr %s391, 32
        %s395 = sadd.s32 %s393, %s394
        %s396 = smul.addr %s395, 8
        %s397 = scalar_lea.vmem %s8, %s396
        %s398 = smul.u32 32, %s29
        %v400 = vld [vmem:[%s384] sm:$0xf]
        %v401 = vld [vmem:[%s384 + $0x4] sm:$0xf]
        %v402 = vld [vmem:[%s384 + $0x8] sm:$0xf]
        %v403 = vld [vmem:[%s384 + $0xc] sm:$0xf]
        %v404 = vld [vmem:[%s384 + $0x10] sm:$0xf]
        %v405 = vld [vmem:[%s384 + $0x14] sm:$0xf]
        %v406 = vld [vmem:[%s384 + $0x18] sm:$0xf]
        %v407 = vld [vmem:[%s384 + $0x1c] sm:$0xf]
        %v408 = vld [vmem:[%s384 + $0x20] sm:$0xf]
        %v409 = vld [vmem:[%s384 + $0x24] sm:$0xf]
        %v410 = vld [vmem:[%s384 + $0x28] sm:$0xf]
        %v411 = vld [vmem:[%s384 + $0x2c] sm:$0xf]
        %v412 = vld [vmem:[%s384 + $0x30] sm:$0xf]
        %v413 = vld [vmem:[%s384 + $0x34] sm:$0xf]
        %v414 = vld [vmem:[%s384 + $0x38] sm:$0xf]
        %v415 = vld [vmem:[%s384 + $0x3c] sm:$0xf]
        %v416 = vld [vmem:[%s384 + $0x40] sm:$0xf]
        %v417 = vld [vmem:[%s384 + $0x44] sm:$0xf]
        %v418 = vld [vmem:[%s384 + $0x48] sm:$0xf]
        %v419 = vld [vmem:[%s384 + $0x4c] sm:$0xf]
        %v420 = vld [vmem:[%s384 + $0x50] sm:$0xf]
        %v421 = vld [vmem:[%s384 + $0x54] sm:$0xf]
        %v422 = vld [vmem:[%s384 + $0x58] sm:$0xf]
        %v423 = vld [vmem:[%s384 + $0x5c] sm:$0xf]
        %v424 = vld [vmem:[%s384 + $0x60] sm:$0xf]
        %v425 = vld [vmem:[%s384 + $0x64] sm:$0xf]
        %v426 = vld [vmem:[%s384 + $0x68] sm:$0xf]
        %v427 = vld [vmem:[%s384 + $0x6c] sm:$0xf]
        %v428 = vld [vmem:[%s384 + $0x70] sm:$0xf]
        %v429 = vld [vmem:[%s384 + $0x74] sm:$0xf]
        %v430 = vld [vmem:[%s384 + $0x78] sm:$0xf]
        %v431 = vld [vmem:[%s384 + $0x7c] sm:$0xf]
        %v432 = vld [vmem:[%s2] sm:$0xff]
        %v433 = vld [vmem:[%s2 + $0x8] sm:$0xff]
        %v466 = vunpack.c.l.b16 %v400
        %v467 = vunpack.c.l.b16 %v401
        %v468 = vunpack.c.l.b16 %v402
        %v469 = vunpack.c.l.b16 %v403
        %v470 = vunpack.c.l.b16 %v404
        %v471 = vunpack.c.l.b16 %v405
        %v472 = vunpack.c.l.b16 %v406
        %v473 = vunpack.c.l.b16 %v407
        %v474 = vunpack.c.l.b16 %v408
        %v475 = vunpack.c.l.b16 %v409
        %v476 = vunpack.c.l.b16 %v410
        %v477 = vunpack.c.l.b16 %v411
        %v478 = vunpack.c.l.b16 %v412
        %v479 = vunpack.c.l.b16 %v413
        %v480 = vunpack.c.l.b16 %v414
        %v481 = vunpack.c.l.b16 %v415
        %v482 = vunpack.c.l.b16 %v416
        %v483 = vunpack.c.l.b16 %v417
        %v484 = vunpack.c.l.b16 %v418
        %v485 = vunpack.c.l.b16 %v419
        %v486 = vunpack.c.l.b16 %v420
        %v487 = vunpack.c.l.b16 %v421
        %v488 = vunpack.c.l.b16 %v422
        %v489 = vunpack.c.l.b16 %v423
        %v490 = vunpack.c.l.b16 %v424
        %v491 = vunpack.c.l.b16 %v425
        %v492 = vunpack.c.l.b16 %v426
        %v493 = vunpack.c.l.b16 %v427
        %v494 = vunpack.c.l.b16 %v428
        %v495 = vunpack.c.l.b16 %v429
        %v496 = vunpack.c.l.b16 %v430
        %v497 = vunpack.c.l.b16 %v431
        %v498 = vpack.c.b16 %v467, %v466
        %v499 = vpack.c.b16 %v469, %v468
        %v500 = vpack.c.b16 %v471, %v470
        %v501 = vpack.c.b16 %v473, %v472
        %v502 = vpack.c.b16 %v475, %v474
        %v503 = vpack.c.b16 %v477, %v476
        %v504 = vpack.c.b16 %v479, %v478
        %v505 = vpack.c.b16 %v481, %v480
        %v506 = vpack.c.b16 %v483, %v482
        %v507 = vpack.c.b16 %v485, %v484
        %v508 = vpack.c.b16 %v487, %v486
        %v509 = vpack.c.b16 %v489, %v488
        %v510 = vpack.c.b16 %v491, %v490
        %v511 = vpack.c.b16 %v493, %v492
        %v512 = vpack.c.b16 %v495, %v494
        %v513 = vpack.c.b16 %v497, %v496
        %v516 = vunpack.c.l.b16 %v432
        %v517 = vunpack.c.h.b16 %v432
        %v518 = vunpack.c.l.b16 %v433
        %v519 = vunpack.c.h.b16 %v433
        %v520 = vpack.c.b16 %v518, %v516
        %v521 = vpack.c.b16 %v519, %v517
        %vm524 = vcmask 130048
        %v526 = vsel %vm524, %v498, 0
        %v529 = vsel %vm524, %v499, 0
        %v532 = vsel %vm524, %v500, 0
        %v535 = vsel %vm524, %v501, 0
        %v538 = vsel %vm524, %v502, 0
        %v541 = vsel %vm524, %v503, 0
        %v544 = vsel %vm524, %v504, 0
        %v547 = vsel %vm524, %v505, 0
        %v550 = vsel %vm524, %v506, 0
        %v553 = vsel %vm524, %v507, 0
        %v556 = vsel %vm524, %v508, 0
        %v559 = vsel %vm524, %v509, 0
        %v562 = vsel %vm524, %v510, 0
        %v565 = vsel %vm524, %v511, 0
        %v568 = vsel %vm524, %v512, 0
        %v571 = vsel %vm524, %v513, 0
        %573 = vmatpush.bf16.msra.mxu0 0
        %574 = vmatpush.bf16.msra.mxu0 0
        %575 = vmatpush.bf16.msra.mxu0 0
        %576 = vmatpush.bf16.msra.mxu0 0
        %577 = vmatpush.bf16.msra.mxu0 0
        %578 = vmatpush.bf16.msra.mxu0 0
        %579 = vmatpush.bf16.msra.mxu0 0
        %580 = vmatpush.bf16.msra.mxu0 %v520
        %581 = vmatmul.bf16.gmra.mxu0 %v526
        %v582 = vpop.f32.mrf.mxu0
        %v583 = vadd.f32 0.0, %v582
        %v584 = vpop.f32.mrf.mxu0
        %v585 = vadd.f32 0.0, %v584
        %586 = vmatmul.bf16.gmra.mxu0 %v529
        %v587 = vpop.f32.mrf.mxu0
        %v588 = vadd.f32 0.0, %v587
        %v589 = vpop.f32.mrf.mxu0
        %v590 = vadd.f32 0.0, %v589
        %591 = vmatmul.bf16.gmra.mxu0 %v532
        %v592 = vpop.f32.mrf.mxu0
        %v593 = vadd.f32 0.0, %v592
        %v594 = vpop.f32.mrf.mxu0
        %v595 = vadd.f32 0.0, %v594
        %596 = vmatmul.bf16.gmra.mxu0 %v535
        %v597 = vpop.f32.mrf.mxu0
        %v598 = vadd.f32 0.0, %v597
        %v599 = vpop.f32.mrf.mxu0
        %v600 = vadd.f32 0.0, %v599
        %601 = vmatmul.bf16.gmra.mxu0 %v538
        %v602 = vpop.f32.mrf.mxu0
        %v603 = vadd.f32 0.0, %v602
        %v604 = vpop.f32.mrf.mxu0
        %v605 = vadd.f32 0.0, %v604
        %606 = vmatmul.bf16.gmra.mxu0 %v541
        %v607 = vpop.f32.mrf.mxu0
        %v608 = vadd.f32 0.0, %v607
        %v609 = vpop.f32.mrf.mxu0
        %v610 = vadd.f32 0.0, %v609
        %611 = vmatmul.bf16.gmra.mxu0 %v544
        %v612 = vpop.f32.mrf.mxu0
        %v613 = vadd.f32 0.0, %v612
        %v614 = vpop.f32.mrf.mxu0
        %v615 = vadd.f32 0.0, %v614
        %616 = vmatmul.bf16.gmra.mxu0 %v547
        %v617 = vpop.f32.mrf.mxu0
        %v618 = vadd.f32 0.0, %v617
        %v619 = vpop.f32.mrf.mxu0
        %v620 = vadd.f32 0.0, %v619
        %621 = vmatmul.bf16.gmra.mxu0 %v550
        %v622 = vpop.f32.mrf.mxu0
        %v623 = vadd.f32 0.0, %v622
        %v624 = vpop.f32.mrf.mxu0
        %v625 = vadd.f32 0.0, %v624
        %626 = vmatmul.bf16.gmra.mxu0 %v553
        %v627 = vpop.f32.mrf.mxu0
        %v628 = vadd.f32 0.0, %v627
        %v629 = vpop.f32.mrf.mxu0
        %v630 = vadd.f32 0.0, %v629
        %631 = vmatmul.bf16.gmra.mxu0 %v556
        %v632 = vpop.f32.mrf.mxu0
        %v633 = vadd.f32 0.0, %v632
        %v634 = vpop.f32.mrf.mxu0
        %v635 = vadd.f32 0.0, %v634
        %636 = vmatmul.bf16.gmra.mxu0 %v559
        %v637 = vpop.f32.mrf.mxu0
        %v638 = vadd.f32 0.0, %v637
        %v639 = vpop.f32.mrf.mxu0
        %v640 = vadd.f32 0.0, %v639
        %641 = vmatmul.bf16.gmra.mxu0 %v562
        %v642 = vpop.f32.mrf.mxu0
        %v643 = vadd.f32 0.0, %v642
        %v644 = vpop.f32.mrf.mxu0
        %v645 = vadd.f32 0.0, %v644
        %646 = vmatmul.bf16.gmra.mxu0 %v565
        %v647 = vpop.f32.mrf.mxu0
        %v648 = vadd.f32 0.0, %v647
        %v649 = vpop.f32.mrf.mxu0
        %v650 = vadd.f32 0.0, %v649
        %651 = vmatmul.bf16.gmra.mxu0 %v568
        %v652 = vpop.f32.mrf.mxu0
        %v653 = vadd.f32 0.0, %v652
        %v654 = vpop.f32.mrf.mxu0
        %v655 = vadd.f32 0.0, %v654
        %656 = vmatmul.bf16.gmra.mxu0 %v571
        %v657 = vpop.f32.mrf.mxu0
        %v658 = vadd.f32 0.0, %v657
        %v659 = vpop.f32.mrf.mxu0
        %v660 = vadd.f32 0.0, %v659
        %661 = vdwg.mxu0
        %662 = vmatpush.bf16.msra.mxu0 0
        %663 = vmatpush.bf16.msra.mxu0 0
        %664 = vmatpush.bf16.msra.mxu0 0
        %665 = vmatpush.bf16.msra.mxu0 0
        %666 = vmatpush.bf16.msra.mxu0 0
        %667 = vmatpush.bf16.msra.mxu0 0
        %668 = vmatpush.bf16.msra.mxu0 0
        %669 = vmatpush.bf16.msra.mxu0 %v521
        %670 = vmatmul.bf16.gmra.mxu0 %v526
        %v671 = vpop.f32.mrf.mxu0
        %v672 = vadd.f32 0.0, %v671
        %v673 = vpop.f32.mrf.mxu0
        %v674 = vadd.f32 0.0, %v673
        %675 = vmatmul.bf16.gmra.mxu0 %v529
        %v676 = vpop.f32.mrf.mxu0
        %v677 = vadd.f32 0.0, %v676
        %v678 = vpop.f32.mrf.mxu0
        %v679 = vadd.f32 0.0, %v678
        %680 = vmatmul.bf16.gmra.mxu0 %v532
        %v681 = vpop.f32.mrf.mxu0
        %v682 = vadd.f32 0.0, %v681
        %v683 = vpop.f32.mrf.mxu0
        %v684 = vadd.f32 0.0, %v683
        %685 = vmatmul.bf16.gmra.mxu0 %v535
        %v686 = vpop.f32.mrf.mxu0
        %v687 = vadd.f32 0.0, %v686
        %v688 = vpop.f32.mrf.mxu0
        %v689 = vadd.f32 0.0, %v688
        %690 = vmatmul.bf16.gmra.mxu0 %v538
        %v691 = vpop.f32.mrf.mxu0
        %v692 = vadd.f32 0.0, %v691
        %v693 = vpop.f32.mrf.mxu0
        %v694 = vadd.f32 0.0, %v693
        %695 = vmatmul.bf16.gmra.mxu0 %v541
        %v696 = vpop.f32.mrf.mxu0
        %v697 = vadd.f32 0.0, %v696
        %v698 = vpop.f32.mrf.mxu0
        %v699 = vadd.f32 0.0, %v698
        %700 = vmatmul.bf16.gmra.mxu0 %v544
        %v701 = vpop.f32.mrf.mxu0
        %v702 = vadd.f32 0.0, %v701
        %v703 = vpop.f32.mrf.mxu0
        %v704 = vadd.f32 0.0, %v703
        %705 = vmatmul.bf16.gmra.mxu0 %v547
        %v706 = vpop.f32.mrf.mxu0
        %v707 = vadd.f32 0.0, %v706
        %v708 = vpop.f32.mrf.mxu0
        %v709 = vadd.f32 0.0, %v708
        %710 = vmatmul.bf16.gmra.mxu0 %v550
        %v711 = vpop.f32.mrf.mxu0
        %v712 = vadd.f32 0.0, %v711
        %v713 = vpop.f32.mrf.mxu0
        %v714 = vadd.f32 0.0, %v713
        %715 = vmatmul.bf16.gmra.mxu0 %v553
        %v716 = vpop.f32.mrf.mxu0
        %v717 = vadd.f32 0.0, %v716
        %v718 = vpop.f32.mrf.mxu0
        %v719 = vadd.f32 0.0, %v718
        %720 = vmatmul.bf16.gmra.mxu0 %v556
        %v721 = vpop.f32.mrf.mxu0
        %v722 = vadd.f32 0.0, %v721
        %v723 = vpop.f32.mrf.mxu0
        %v724 = vadd.f32 0.0, %v723
        %725 = vmatmul.bf16.gmra.mxu0 %v559
        %v726 = vpop.f32.mrf.mxu0
        %v727 = vadd.f32 0.0, %v726
        %v728 = vpop.f32.mrf.mxu0
        %v729 = vadd.f32 0.0, %v728
        %730 = vmatmul.bf16.gmra.mxu0 %v562
        %v731 = vpop.f32.mrf.mxu0
        %v732 = vadd.f32 0.0, %v731
        %v733 = vpop.f32.mrf.mxu0
        %v734 = vadd.f32 0.0, %v733
        %735 = vmatmul.bf16.gmra.mxu0 %v565
        %v736 = vpop.f32.mrf.mxu0
        %v737 = vadd.f32 0.0, %v736
        %v738 = vpop.f32.mrf.mxu0
        %v739 = vadd.f32 0.0, %v738
        %740 = vmatmul.bf16.gmra.mxu0 %v568
        %v741 = vpop.f32.mrf.mxu0
        %v742 = vadd.f32 0.0, %v741
        %v743 = vpop.f32.mrf.mxu0
        %v744 = vadd.f32 0.0, %v743
        %745 = vmatmul.bf16.gmra.mxu0 %v571
        %v746 = vpop.f32.mrf.mxu0
        %v747 = vadd.f32 0.0, %v746
        %v748 = vpop.f32.mrf.mxu0
        %v749 = vadd.f32 0.0, %v748
        %750 = vdwg.mxu0
        %v751 = vld [vmem:[%s388] sm:$0x1]
        %v753 = vperm.slane %v751, 0
        %v755 = vadd.f32 %v672, %v753
        %v756 = vadd.f32 %v674, %v753
        %v757 = vadd.f32 %v677, %v753
        %v758 = vadd.f32 %v679, %v753
        %v759 = vadd.f32 %v682, %v753
        %v760 = vadd.f32 %v684, %v753
        %v761 = vadd.f32 %v687, %v753
        %v762 = vadd.f32 %v689, %v753
        %v763 = vadd.f32 %v692, %v753
        %v764 = vadd.f32 %v694, %v753
        %v765 = vadd.f32 %v697, %v753
        %v766 = vadd.f32 %v699, %v753
        %v767 = vadd.f32 %v702, %v753
        %v768 = vadd.f32 %v704, %v753
        %v769 = vadd.f32 %v707, %v753
        %v770 = vadd.f32 %v709, %v753
        %v771 = vadd.f32 %v712, %v753
        %v772 = vadd.f32 %v714, %v753
        %v773 = vadd.f32 %v717, %v753
        %v774 = vadd.f32 %v719, %v753
        %v775 = vadd.f32 %v722, %v753
        %v776 = vadd.f32 %v724, %v753
        %v777 = vadd.f32 %v727, %v753
        %v778 = vadd.f32 %v729, %v753
        %v779 = vadd.f32 %v732, %v753
        %v780 = vadd.f32 %v734, %v753
        %v781 = vadd.f32 %v737, %v753
        %v782 = vadd.f32 %v739, %v753
        %v783 = vadd.f32 %v742, %v753
        %v784 = vadd.f32 %v744, %v753
        %v785 = vadd.f32 %v747, %v753
        %v786 = vadd.f32 %v749, %v753
        %v787 = vlaneseq
        %v788 = vand.u32 %v787, 127
        %vm789 = vcmask 31744
        %v790 = vsel %vm789, %v755, -inf
        %791 = vmax.xlane.f32.xlu0 %v790
        %v792 = vpop.xlane.xlu0 %791
        %v793 = vsel %vm789, %v756, -inf
        %794 = vmax.xlane.f32.xlu0 %v793
        %v795 = vpop.xlane.xlu0 %794
        %v796 = vsel %vm789, %v757, -inf
        %797 = vmax.xlane.f32.xlu0 %v796
        %v798 = vpop.xlane.xlu0 %797
        %v799 = vsel %vm789, %v758, -inf
        %800 = vmax.xlane.f32.xlu0 %v799
        %v801 = vpop.xlane.xlu0 %800
        %v802 = vsel %vm789, %v759, -inf
        %803 = vmax.xlane.f32.xlu0 %v802
        %v804 = vpop.xlane.xlu0 %803
        %v805 = vsel %vm789, %v760, -inf
        %806 = vmax.xlane.f32.xlu0 %v805
        %v807 = vpop.xlane.xlu0 %806
        %v808 = vsel %vm789, %v761, -inf
        %809 = vmax.xlane.f32.xlu0 %v808
        %v810 = vpop.xlane.xlu0 %809
        %v811 = vsel %vm789, %v762, -inf
        %812 = vmax.xlane.f32.xlu0 %v811
        %v813 = vpop.xlane.xlu0 %812
        %v814 = vsel %vm789, %v763, -inf
        %815 = vmax.xlane.f32.xlu0 %v814
        %v816 = vpop.xlane.xlu0 %815
        %v817 = vsel %vm789, %v764, -inf
        %818 = vmax.xlane.f32.xlu0 %v817
        %v819 = vpop.xlane.xlu0 %818
        %v820 = vsel %vm789, %v765, -inf
        %821 = vmax.xlane.f32.xlu0 %v820
        %v822 = vpop.xlane.xlu0 %821
        %v823 = vsel %vm789, %v766, -inf
        %824 = vmax.xlane.f32.xlu0 %v823
        %v825 = vpop.xlane.xlu0 %824
        %v826 = vsel %vm789, %v767, -inf
        %827 = vmax.xlane.f32.xlu0 %v826
        %v828 = vpop.xlane.xlu0 %827
        %v829 = vsel %vm789, %v768, -inf
        %830 = vmax.xlane.f32.xlu0 %v829
        %v831 = vpop.xlane.xlu0 %830
        %v832 = vsel %vm789, %v769, -inf
        %833 = vmax.xlane.f32.xlu0 %v832
        %v834 = vpop.xlane.xlu0 %833
        %v835 = vsel %vm789, %v770, -inf
        %836 = vmax.xlane.f32.xlu0 %v835
        %v837 = vpop.xlane.xlu0 %836
        %v838 = vsel %vm789, %v771, -inf
        %839 = vmax.xlane.f32.xlu0 %v838
        %v840 = vpop.xlane.xlu0 %839
        %v841 = vsel %vm789, %v772, -inf
        %842 = vmax.xlane.f32.xlu0 %v841
        %v843 = vpop.xlane.xlu0 %842
        %v844 = vsel %vm789, %v773, -inf
        %845 = vmax.xlane.f32.xlu0 %v844
        %v846 = vpop.xlane.xlu0 %845
        %v847 = vsel %vm789, %v774, -inf
        %848 = vmax.xlane.f32.xlu0 %v847
        %v849 = vpop.xlane.xlu0 %848
        %v850 = vsel %vm789, %v775, -inf
        %851 = vmax.xlane.f32.xlu0 %v850
        %v852 = vpop.xlane.xlu0 %851
        %v853 = vsel %vm789, %v776, -inf
        %854 = vmax.xlane.f32.xlu0 %v853
        %v855 = vpop.xlane.xlu0 %854
        %v856 = vsel %vm789, %v777, -inf
        %857 = vmax.xlane.f32.xlu0 %v856
        %v858 = vpop.xlane.xlu0 %857
        %v859 = vsel %vm789, %v778, -inf
        %860 = vmax.xlane.f32.xlu0 %v859
        %v861 = vpop.xlane.xlu0 %860
        %v862 = vsel %vm789, %v779, -inf
        %863 = vmax.xlane.f32.xlu0 %v862
        %v864 = vpop.xlane.xlu0 %863
        %v865 = vsel %vm789, %v780, -inf
        %866 = vmax.xlane.f32.xlu0 %v865
        %v867 = vpop.xlane.xlu0 %866
        %v868 = vsel %vm789, %v781, -inf
        %869 = vmax.xlane.f32.xlu0 %v868
        %v870 = vpop.xlane.xlu0 %869
        %v871 = vsel %vm789, %v782, -inf
        %872 = vmax.xlane.f32.xlu0 %v871
        %v873 = vpop.xlane.xlu0 %872
        %v874 = vsel %vm789, %v783, -inf
        %875 = vmax.xlane.f32.xlu0 %v874
        %v876 = vpop.xlane.xlu0 %875
        %v877 = vsel %vm789, %v784, -inf
        %878 = vmax.xlane.f32.xlu0 %v877
        %v879 = vpop.xlane.xlu0 %878
        %v880 = vsel %vm789, %v785, -inf
        %881 = vmax.xlane.f32.xlu0 %v880
        %v882 = vpop.xlane.xlu0 %881
        %v883 = vsel %vm789, %v786, -inf
        %884 = vmax.xlane.f32.xlu0 %v883
        %v885 = vpop.xlane.xlu0 %884
        %vm886 = vcmp.eq.f32.partialorder %v755, %v792
        %vm887 = vcmp.eq.f32.partialorder %v756, %v795
        %vm888 = vcmp.eq.f32.partialorder %v757, %v798
        %vm889 = vcmp.eq.f32.partialorder %v758, %v801
        %vm890 = vcmp.eq.f32.partialorder %v759, %v804
        %vm891 = vcmp.eq.f32.partialorder %v760, %v807
        %vm892 = vcmp.eq.f32.partialorder %v761, %v810
        %vm893 = vcmp.eq.f32.partialorder %v762, %v813
        %vm894 = vcmp.eq.f32.partialorder %v763, %v816
        %vm895 = vcmp.eq.f32.partialorder %v764, %v819
        %vm896 = vcmp.eq.f32.partialorder %v765, %v822
        %vm897 = vcmp.eq.f32.partialorder %v766, %v825
        %vm898 = vcmp.eq.f32.partialorder %v767, %v828
        %vm899 = vcmp.eq.f32.partialorder %v768, %v831
        %vm900 = vcmp.eq.f32.partialorder %v769, %v834
        %vm901 = vcmp.eq.f32.partialorder %v770, %v837
        %vm902 = vcmp.eq.f32.partialorder %v771, %v840
        %vm903 = vcmp.eq.f32.partialorder %v772, %v843
        %vm904 = vcmp.eq.f32.partialorder %v773, %v846
        %vm905 = vcmp.eq.f32.partialorder %v774, %v849
        %vm906 = vcmp.eq.f32.partialorder %v775, %v852
        %vm907 = vcmp.eq.f32.partialorder %v776, %v855
        %vm908 = vcmp.eq.f32.partialorder %v777, %v858
        %vm909 = vcmp.eq.f32.partialorder %v778, %v861
        %vm910 = vcmp.eq.f32.partialorder %v779, %v864
        %vm911 = vcmp.eq.f32.partialorder %v780, %v867
        %vm912 = vcmp.eq.f32.partialorder %v781, %v870
        %vm913 = vcmp.eq.f32.partialorder %v782, %v873
        %vm914 = vcmp.eq.f32.partialorder %v783, %v876
        %vm915 = vcmp.eq.f32.partialorder %v784, %v879
        %vm916 = vcmp.eq.f32.partialorder %v785, %v882
        %vm917 = vcmp.eq.f32.partialorder %v786, %v885
        %v918 = vsel %vm886, %v788, 4
        %v919 = vsel %vm887, %v788, 4
        %v920 = vsel %vm888, %v788, 4
        %v921 = vsel %vm889, %v788, 4
        %v922 = vsel %vm890, %v788, 4
        %v923 = vsel %vm891, %v788, 4
        %v924 = vsel %vm892, %v788, 4
        %v925 = vsel %vm893, %v788, 4
        %v926 = vsel %vm894, %v788, 4
        %v927 = vsel %vm895, %v788, 4
        %v928 = vsel %vm896, %v788, 4
        %v929 = vsel %vm897, %v788, 4
        %v930 = vsel %vm898, %v788, 4
        %v931 = vsel %vm899, %v788, 4
        %v932 = vsel %vm900, %v788, 4
        %v933 = vsel %vm901, %v788, 4
        %v934 = vsel %vm902, %v788, 4
        %v935 = vsel %vm903, %v788, 4
        %v936 = vsel %vm904, %v788, 4
        %v937 = vsel %vm905, %v788, 4
        %v938 = vsel %vm906, %v788, 4
        %v939 = vsel %vm907, %v788, 4
        %v940 = vsel %vm908, %v788, 4
        %v941 = vsel %vm909, %v788, 4
        %v942 = vsel %vm910, %v788, 4
        %v943 = vsel %vm911, %v788, 4
        %v944 = vsel %vm912, %v788, 4
        %v945 = vsel %vm913, %v788, 4
        %v946 = vsel %vm914, %v788, 4
        %v947 = vsel %vm915, %v788, 4
        %v948 = vsel %vm916, %v788, 4
        %v949 = vsel %vm917, %v788, 4
        %v950 = vsel %vm789, %v918, 2147483647
        %v951 = vand.u32 %v950, 65535
        %v952 = vshra.s32 %v950, 16
        %v953 = vcvt.s32.f32 %v951
        %v954 = vcvt.s32.f32 %v952
        %955 = vmin.xlane.f32.xlu0 %v954
        %v956 = vpop.xlane.xlu0 %955
        %vm957 = vcmp.eq.f32.partialorder %v954, %v956
        %v958 = vsel %vm957, %v953, inf
        %959 = vmin.xlane.f32.xlu0 %v958
        %v960 = vpop.xlane.xlu0 %959
        %v961 = vcvt.f32.s32 %v960
        %v962 = vcvt.f32.s32 %v956
        %v963 = vshll.u32 %v962, 16
        %v964 = vadd.s32 %v963, %v961
        %v965 = vsel %vm789, %v919, 2147483647
        %v966 = vand.u32 %v965, 65535
        %v967 = vshra.s32 %v965, 16
        %v968 = vcvt.s32.f32 %v966
        %v969 = vcvt.s32.f32 %v967
        %970 = vmin.xlane.f32.xlu0 %v969
        %v971 = vpop.xlane.xlu0 %970
        %vm972 = vcmp.eq.f32.partialorder %v969, %v971
        %v973 = vsel %vm972, %v968, inf
        %974 = vmin.xlane.f32.xlu0 %v973
        %v975 = vpop.xlane.xlu0 %974
        %v976 = vcvt.f32.s32 %v975
        %v977 = vcvt.f32.s32 %v971
        %v978 = vshll.u32 %v977, 16
        %v979 = vadd.s32 %v978, %v976
        %v980 = vsel %vm789, %v920, 2147483647
        %v981 = vand.u32 %v980, 65535
        %v982 = vshra.s32 %v980, 16
        %v983 = vcvt.s32.f32 %v981
        %v984 = vcvt.s32.f32 %v982
        %985 = vmin.xlane.f32.xlu0 %v984
        %v986 = vpop.xlane.xlu0 %985
        %vm987 = vcmp.eq.f32.partialorder %v984, %v986
        %v988 = vsel %vm987, %v983, inf
        %989 = vmin.xlane.f32.xlu0 %v988
        %v990 = vpop.xlane.xlu0 %989
        %v991 = vcvt.f32.s32 %v990
        %v992 = vcvt.f32.s32 %v986
        %v993 = vshll.u32 %v992, 16
        %v994 = vadd.s32 %v993, %v991
        %v995 = vsel %vm789, %v921, 2147483647
        %v996 = vand.u32 %v995, 65535
        %v997 = vshra.s32 %v995, 16
        %v998 = vcvt.s32.f32 %v996
        %v999 = vcvt.s32.f32 %v997
        %1000 = vmin.xlane.f32.xlu0 %v999
        %v1001 = vpop.xlane.xlu0 %1000
        %vm1002 = vcmp.eq.f32.partialorder %v999, %v1001
        %v1003 = vsel %vm1002, %v998, inf
        %1004 = vmin.xlane.f32.xlu0 %v1003
        %v1005 = vpop.xlane.xlu0 %1004
        %v1006 = vcvt.f32.s32 %v1005
        %v1007 = vcvt.f32.s32 %v1001
        %v1008 = vshll.u32 %v1007, 16
        %v1009 = vadd.s32 %v1008, %v1006
        %v1010 = vsel %vm789, %v922, 2147483647
        %v1011 = vand.u32 %v1010, 65535
        %v1012 = vshra.s32 %v1010, 16
        %v1013 = vcvt.s32.f32 %v1011
        %v1014 = vcvt.s32.f32 %v1012
        %1015 = vmin.xlane.f32.xlu0 %v1014
        %v1016 = vpop.xlane.xlu0 %1015
        %vm1017 = vcmp.eq.f32.partialorder %v1014, %v1016
        %v1018 = vsel %vm1017, %v1013, inf
        %1019 = vmin.xlane.f32.xlu0 %v1018
        %v1020 = vpop.xlane.xlu0 %1019
        %v1021 = vcvt.f32.s32 %v1020
        %v1022 = vcvt.f32.s32 %v1016
        %v1023 = vshll.u32 %v1022, 16
        %v1024 = vadd.s32 %v1023, %v1021
        %v1025 = vsel %vm789, %v923, 2147483647
        %v1026 = vand.u32 %v1025, 65535
        %v1027 = vshra.s32 %v1025, 16
        %v1028 = vcvt.s32.f32 %v1026
        %v1029 = vcvt.s32.f32 %v1027
        %1030 = vmin.xlane.f32.xlu0 %v1029
        %v1031 = vpop.xlane.xlu0 %1030
        %vm1032 = vcmp.eq.f32.partialorder %v1029, %v1031
        %v1033 = vsel %vm1032, %v1028, inf
        %1034 = vmin.xlane.f32.xlu0 %v1033
        %v1035 = vpop.xlane.xlu0 %1034
        %v1036 = vcvt.f32.s32 %v1035
        %v1037 = vcvt.f32.s32 %v1031
        %v1038 = vshll.u32 %v1037, 16
        %v1039 = vadd.s32 %v1038, %v1036
        %v1040 = vsel %vm789, %v924, 2147483647
        %v1041 = vand.u32 %v1040, 65535
        %v1042 = vshra.s32 %v1040, 16
        %v1043 = vcvt.s32.f32 %v1041
        %v1044 = vcvt.s32.f32 %v1042
        %1045 = vmin.xlane.f32.xlu0 %v1044
        %v1046 = vpop.xlane.xlu0 %1045
        %vm1047 = vcmp.eq.f32.partialorder %v1044, %v1046
        %v1048 = vsel %vm1047, %v1043, inf
        %1049 = vmin.xlane.f32.xlu0 %v1048
        %v1050 = vpop.xlane.xlu0 %1049
        %v1051 = vcvt.f32.s32 %v1050
        %v1052 = vcvt.f32.s32 %v1046
        %v1053 = vshll.u32 %v1052, 16
        %v1054 = vadd.s32 %v1053, %v1051
        %v1055 = vsel %vm789, %v925, 2147483647
        %v1056 = vand.u32 %v1055, 65535
        %v1057 = vshra.s32 %v1055, 16
        %v1058 = vcvt.s32.f32 %v1056
        %v1059 = vcvt.s32.f32 %v1057
        %1060 = vmin.xlane.f32.xlu0 %v1059
        %v1061 = vpop.xlane.xlu0 %1060
        %vm1062 = vcmp.eq.f32.partialorder %v1059, %v1061
        %v1063 = vsel %vm1062, %v1058, inf
        %1064 = vmin.xlane.f32.xlu0 %v1063
        %v1065 = vpop.xlane.xlu0 %1064
        %v1066 = vcvt.f32.s32 %v1065
        %v1067 = vcvt.f32.s32 %v1061
        %v1068 = vshll.u32 %v1067, 16
        %v1069 = vadd.s32 %v1068, %v1066
        %v1070 = vsel %vm789, %v926, 2147483647
        %v1071 = vand.u32 %v1070, 65535
        %v1072 = vshra.s32 %v1070, 16
        %v1073 = vcvt.s32.f32 %v1071
        %v1074 = vcvt.s32.f32 %v1072
        %1075 = vmin.xlane.f32.xlu0 %v1074
        %v1076 = vpop.xlane.xlu0 %1075
        %vm1077 = vcmp.eq.f32.partialorder %v1074, %v1076
        %v1078 = vsel %vm1077, %v1073, inf
        %1079 = vmin.xlane.f32.xlu0 %v1078
        %v1080 = vpop.xlane.xlu0 %1079
        %v1081 = vcvt.f32.s32 %v1080
        %v1082 = vcvt.f32.s32 %v1076
        %v1083 = vshll.u32 %v1082, 16
        %v1084 = vadd.s32 %v1083, %v1081
        %v1085 = vsel %vm789, %v927, 2147483647
        %v1086 = vand.u32 %v1085, 65535
        %v1087 = vshra.s32 %v1085, 16
        %v1088 = vcvt.s32.f32 %v1086
        %v1089 = vcvt.s32.f32 %v1087
        %1090 = vmin.xlane.f32.xlu0 %v1089
        %v1091 = vpop.xlane.xlu0 %1090
        %vm1092 = vcmp.eq.f32.partialorder %v1089, %v1091
        %v1093 = vsel %vm1092, %v1088, inf
        %1094 = vmin.xlane.f32.xlu0 %v1093
        %v1095 = vpop.xlane.xlu0 %1094
        %v1096 = vcvt.f32.s32 %v1095
        %v1097 = vcvt.f32.s32 %v1091
        %v1098 = vshll.u32 %v1097, 16
        %v1099 = vadd.s32 %v1098, %v1096
        %v1100 = vsel %vm789, %v928, 2147483647
        %v1101 = vand.u32 %v1100, 65535
        %v1102 = vshra.s32 %v1100, 16
        %v1103 = vcvt.s32.f32 %v1101
        %v1104 = vcvt.s32.f32 %v1102
        %1105 = vmin.xlane.f32.xlu0 %v1104
        %v1106 = vpop.xlane.xlu0 %1105
        %vm1107 = vcmp.eq.f32.partialorder %v1104, %v1106
        %v1108 = vsel %vm1107, %v1103, inf
        %1109 = vmin.xlane.f32.xlu0 %v1108
        %v1110 = vpop.xlane.xlu0 %1109
        %v1111 = vcvt.f32.s32 %v1110
        %v1112 = vcvt.f32.s32 %v1106
        %v1113 = vshll.u32 %v1112, 16
        %v1114 = vadd.s32 %v1113, %v1111
        %v1115 = vsel %vm789, %v929, 2147483647
        %v1116 = vand.u32 %v1115, 65535
        %v1117 = vshra.s32 %v1115, 16
        %v1118 = vcvt.s32.f32 %v1116
        %v1119 = vcvt.s32.f32 %v1117
        %1120 = vmin.xlane.f32.xlu0 %v1119
        %v1121 = vpop.xlane.xlu0 %1120
        %vm1122 = vcmp.eq.f32.partialorder %v1119, %v1121
        %v1123 = vsel %vm1122, %v1118, inf
        %1124 = vmin.xlane.f32.xlu0 %v1123
        %v1125 = vpop.xlane.xlu0 %1124
        %v1126 = vcvt.f32.s32 %v1125
        %v1127 = vcvt.f32.s32 %v1121
        %v1128 = vshll.u32 %v1127, 16
        %v1129 = vadd.s32 %v1128, %v1126
        %v1130 = vsel %vm789, %v930, 2147483647
        %v1131 = vand.u32 %v1130, 65535
        %v1132 = vshra.s32 %v1130, 16
        %v1133 = vcvt.s32.f32 %v1131
        %v1134 = vcvt.s32.f32 %v1132
        %1135 = vmin.xlane.f32.xlu0 %v1134
        %v1136 = vpop.xlane.xlu0 %1135
        %vm1137 = vcmp.eq.f32.partialorder %v1134, %v1136
        %v1138 = vsel %vm1137, %v1133, inf
        %1139 = vmin.xlane.f32.xlu0 %v1138
        %v1140 = vpop.xlane.xlu0 %1139
        %v1141 = vcvt.f32.s32 %v1140
        %v1142 = vcvt.f32.s32 %v1136
        %v1143 = vshll.u32 %v1142, 16
        %v1144 = vadd.s32 %v1143, %v1141
        %v1145 = vsel %vm789, %v931, 2147483647
        %v1146 = vand.u32 %v1145, 65535
        %v1147 = vshra.s32 %v1145, 16
        %v1148 = vcvt.s32.f32 %v1146
        %v1149 = vcvt.s32.f32 %v1147
        %1150 = vmin.xlane.f32.xlu0 %v1149
        %v1151 = vpop.xlane.xlu0 %1150
        %vm1152 = vcmp.eq.f32.partialorder %v1149, %v1151
        %v1153 = vsel %vm1152, %v1148, inf
        %1154 = vmin.xlane.f32.xlu0 %v1153
        %v1155 = vpop.xlane.xlu0 %1154
        %v1156 = vcvt.f32.s32 %v1155
        %v1157 = vcvt.f32.s32 %v1151
        %v1158 = vshll.u32 %v1157, 16
        %v1159 = vadd.s32 %v1158, %v1156
        %v1160 = vsel %vm789, %v932, 2147483647
        %v1161 = vand.u32 %v1160, 65535
        %v1162 = vshra.s32 %v1160, 16
        %v1163 = vcvt.s32.f32 %v1161
        %v1164 = vcvt.s32.f32 %v1162
        %1165 = vmin.xlane.f32.xlu0 %v1164
        %v1166 = vpop.xlane.xlu0 %1165
        %vm1167 = vcmp.eq.f32.partialorder %v1164, %v1166
        %v1168 = vsel %vm1167, %v1163, inf
        %1169 = vmin.xlane.f32.xlu0 %v1168
        %v1170 = vpop.xlane.xlu0 %1169
        %v1171 = vcvt.f32.s32 %v1170
        %v1172 = vcvt.f32.s32 %v1166
        %v1173 = vshll.u32 %v1172, 16
        %v1174 = vadd.s32 %v1173, %v1171
        %v1175 = vsel %vm789, %v933, 2147483647
        %v1176 = vand.u32 %v1175, 65535
        %v1177 = vshra.s32 %v1175, 16
        %v1178 = vcvt.s32.f32 %v1176
        %v1179 = vcvt.s32.f32 %v1177
        %1180 = vmin.xlane.f32.xlu0 %v1179
        %v1181 = vpop.xlane.xlu0 %1180
        %vm1182 = vcmp.eq.f32.partialorder %v1179, %v1181
        %v1183 = vsel %vm1182, %v1178, inf
        %1184 = vmin.xlane.f32.xlu0 %v1183
        %v1185 = vpop.xlane.xlu0 %1184
        %v1186 = vcvt.f32.s32 %v1185
        %v1187 = vcvt.f32.s32 %v1181
        %v1188 = vshll.u32 %v1187, 16
        %v1189 = vadd.s32 %v1188, %v1186
        %v1190 = vsel %vm789, %v934, 2147483647
        %v1191 = vand.u32 %v1190, 65535
        %v1192 = vshra.s32 %v1190, 16
        %v1193 = vcvt.s32.f32 %v1191
        %v1194 = vcvt.s32.f32 %v1192
        %1195 = vmin.xlane.f32.xlu0 %v1194
        %v1196 = vpop.xlane.xlu0 %1195
        %vm1197 = vcmp.eq.f32.partialorder %v1194, %v1196
        %v1198 = vsel %vm1197, %v1193, inf
        %1199 = vmin.xlane.f32.xlu0 %v1198
        %v1200 = vpop.xlane.xlu0 %1199
        %v1201 = vcvt.f32.s32 %v1200
        %v1202 = vcvt.f32.s32 %v1196
        %v1203 = vshll.u32 %v1202, 16
        %v1204 = vadd.s32 %v1203, %v1201
        %v1205 = vsel %vm789, %v935, 2147483647
        %v1206 = vand.u32 %v1205, 65535
        %v1207 = vshra.s32 %v1205, 16
        %v1208 = vcvt.s32.f32 %v1206
        %v1209 = vcvt.s32.f32 %v1207
        %1210 = vmin.xlane.f32.xlu0 %v1209
        %v1211 = vpop.xlane.xlu0 %1210
        %vm1212 = vcmp.eq.f32.partialorder %v1209, %v1211
        %v1213 = vsel %vm1212, %v1208, inf
        %1214 = vmin.xlane.f32.xlu0 %v1213
        %v1215 = vpop.xlane.xlu0 %1214
        %v1216 = vcvt.f32.s32 %v1215
        %v1217 = vcvt.f32.s32 %v1211
        %v1218 = vshll.u32 %v1217, 16
        %v1219 = vadd.s32 %v1218, %v1216
        %v1220 = vsel %vm789, %v936, 2147483647
        %v1221 = vand.u32 %v1220, 65535
        %v1222 = vshra.s32 %v1220, 16
        %v1223 = vcvt.s32.f32 %v1221
        %v1224 = vcvt.s32.f32 %v1222
        %1225 = vmin.xlane.f32.xlu0 %v1224
        %v1226 = vpop.xlane.xlu0 %1225
        %vm1227 = vcmp.eq.f32.partialorder %v1224, %v1226
        %v1228 = vsel %vm1227, %v1223, inf
        %1229 = vmin.xlane.f32.xlu0 %v1228
        %v1230 = vpop.xlane.xlu0 %1229
        %v1231 = vcvt.f32.s32 %v1230
        %v1232 = vcvt.f32.s32 %v1226
        %v1233 = vshll.u32 %v1232, 16
        %v1234 = vadd.s32 %v1233, %v1231
        %v1235 = vsel %vm789, %v937, 2147483647
        %v1236 = vand.u32 %v1235, 65535
        %v1237 = vshra.s32 %v1235, 16
        %v1238 = vcvt.s32.f32 %v1236
        %v1239 = vcvt.s32.f32 %v1237
        %1240 = vmin.xlane.f32.xlu0 %v1239
        %v1241 = vpop.xlane.xlu0 %1240
        %vm1242 = vcmp.eq.f32.partialorder %v1239, %v1241
        %v1243 = vsel %vm1242, %v1238, inf
        %1244 = vmin.xlane.f32.xlu0 %v1243
        %v1245 = vpop.xlane.xlu0 %1244
        %v1246 = vcvt.f32.s32 %v1245
        %v1247 = vcvt.f32.s32 %v1241
        %v1248 = vshll.u32 %v1247, 16
        %v1249 = vadd.s32 %v1248, %v1246
        %v1250 = vsel %vm789, %v938, 2147483647
        %v1251 = vand.u32 %v1250, 65535
        %v1252 = vshra.s32 %v1250, 16
        %v1253 = vcvt.s32.f32 %v1251
        %v1254 = vcvt.s32.f32 %v1252
        %1255 = vmin.xlane.f32.xlu0 %v1254
        %v1256 = vpop.xlane.xlu0 %1255
        %vm1257 = vcmp.eq.f32.partialorder %v1254, %v1256
        %v1258 = vsel %vm1257, %v1253, inf
        %1259 = vmin.xlane.f32.xlu0 %v1258
        %v1260 = vpop.xlane.xlu0 %1259
        %v1261 = vcvt.f32.s32 %v1260
        %v1262 = vcvt.f32.s32 %v1256
        %v1263 = vshll.u32 %v1262, 16
        %v1264 = vadd.s32 %v1263, %v1261
        %v1265 = vsel %vm789, %v939, 2147483647
        %v1266 = vand.u32 %v1265, 65535
        %v1267 = vshra.s32 %v1265, 16
        %v1268 = vcvt.s32.f32 %v1266
        %v1269 = vcvt.s32.f32 %v1267
        %1270 = vmin.xlane.f32.xlu0 %v1269
        %v1271 = vpop.xlane.xlu0 %1270
        %vm1272 = vcmp.eq.f32.partialorder %v1269, %v1271
        %v1273 = vsel %vm1272, %v1268, inf
        %1274 = vmin.xlane.f32.xlu0 %v1273
        %v1275 = vpop.xlane.xlu0 %1274
        %v1276 = vcvt.f32.s32 %v1275
        %v1277 = vcvt.f32.s32 %v1271
        %v1278 = vshll.u32 %v1277, 16
        %v1279 = vadd.s32 %v1278, %v1276
        %v1280 = vsel %vm789, %v940, 2147483647
        %v1281 = vand.u32 %v1280, 65535
        %v1282 = vshra.s32 %v1280, 16
        %v1283 = vcvt.s32.f32 %v1281
        %v1284 = vcvt.s32.f32 %v1282
        %1285 = vmin.xlane.f32.xlu0 %v1284
        %v1286 = vpop.xlane.xlu0 %1285
        %vm1287 = vcmp.eq.f32.partialorder %v1284, %v1286
        %v1288 = vsel %vm1287, %v1283, inf
        %1289 = vmin.xlane.f32.xlu0 %v1288
        %v1290 = vpop.xlane.xlu0 %1289
        %v1291 = vcvt.f32.s32 %v1290
        %v1292 = vcvt.f32.s32 %v1286
        %v1293 = vshll.u32 %v1292, 16
        %v1294 = vadd.s32 %v1293, %v1291
        %v1295 = vsel %vm789, %v941, 2147483647
        %v1296 = vand.u32 %v1295, 65535
        %v1297 = vshra.s32 %v1295, 16
        %v1298 = vcvt.s32.f32 %v1296
        %v1299 = vcvt.s32.f32 %v1297
        %1300 = vmin.xlane.f32.xlu0 %v1299
        %v1301 = vpop.xlane.xlu0 %1300
        %vm1302 = vcmp.eq.f32.partialorder %v1299, %v1301
        %v1303 = vsel %vm1302, %v1298, inf
        %1304 = vmin.xlane.f32.xlu0 %v1303
        %v1305 = vpop.xlane.xlu0 %1304
        %v1306 = vcvt.f32.s32 %v1305
        %v1307 = vcvt.f32.s32 %v1301
        %v1308 = vshll.u32 %v1307, 16
        %v1309 = vadd.s32 %v1308, %v1306
        %v1310 = vsel %vm789, %v942, 2147483647
        %v1311 = vand.u32 %v1310, 65535
        %v1312 = vshra.s32 %v1310, 16
        %v1313 = vcvt.s32.f32 %v1311
        %v1314 = vcvt.s32.f32 %v1312
        %1315 = vmin.xlane.f32.xlu0 %v1314
        %v1316 = vpop.xlane.xlu0 %1315
        %vm1317 = vcmp.eq.f32.partialorder %v1314, %v1316
        %v1318 = vsel %vm1317, %v1313, inf
        %1319 = vmin.xlane.f32.xlu0 %v1318
        %v1320 = vpop.xlane.xlu0 %1319
        %v1321 = vcvt.f32.s32 %v1320
        %v1322 = vcvt.f32.s32 %v1316
        %v1323 = vshll.u32 %v1322, 16
        %v1324 = vadd.s32 %v1323, %v1321
        %v1325 = vsel %vm789, %v943, 2147483647
        %v1326 = vand.u32 %v1325, 65535
        %v1327 = vshra.s32 %v1325, 16
        %v1328 = vcvt.s32.f32 %v1326
        %v1329 = vcvt.s32.f32 %v1327
        %1330 = vmin.xlane.f32.xlu0 %v1329
        %v1331 = vpop.xlane.xlu0 %1330
        %vm1332 = vcmp.eq.f32.partialorder %v1329, %v1331
        %v1333 = vsel %vm1332, %v1328, inf
        %1334 = vmin.xlane.f32.xlu0 %v1333
        %v1335 = vpop.xlane.xlu0 %1334
        %v1336 = vcvt.f32.s32 %v1335
        %v1337 = vcvt.f32.s32 %v1331
        %v1338 = vshll.u32 %v1337, 16
        %v1339 = vadd.s32 %v1338, %v1336
        %v1340 = vsel %vm789, %v944, 2147483647
        %v1341 = vand.u32 %v1340, 65535
        %v1342 = vshra.s32 %v1340, 16
        %v1343 = vcvt.s32.f32 %v1341
        %v1344 = vcvt.s32.f32 %v1342
        %1345 = vmin.xlane.f32.xlu0 %v1344
        %v1346 = vpop.xlane.xlu0 %1345
        %vm1347 = vcmp.eq.f32.partialorder %v1344, %v1346
        %v1348 = vsel %vm1347, %v1343, inf
        %1349 = vmin.xlane.f32.xlu0 %v1348
        %v1350 = vpop.xlane.xlu0 %1349
        %v1351 = vcvt.f32.s32 %v1350
        %v1352 = vcvt.f32.s32 %v1346
        %v1353 = vshll.u32 %v1352, 16
        %v1354 = vadd.s32 %v1353, %v1351
        %v1355 = vsel %vm789, %v945, 2147483647
        %v1356 = vand.u32 %v1355, 65535
        %v1357 = vshra.s32 %v1355, 16
        %v1358 = vcvt.s32.f32 %v1356
        %v1359 = vcvt.s32.f32 %v1357
        %1360 = vmin.xlane.f32.xlu0 %v1359
        %v1361 = vpop.xlane.xlu0 %1360
        %vm1362 = vcmp.eq.f32.partialorder %v1359, %v1361
        %v1363 = vsel %vm1362, %v1358, inf
        %1364 = vmin.xlane.f32.xlu0 %v1363
        %v1365 = vpop.xlane.xlu0 %1364
        %v1366 = vcvt.f32.s32 %v1365
        %v1367 = vcvt.f32.s32 %v1361
        %v1368 = vshll.u32 %v1367, 16
        %v1369 = vadd.s32 %v1368, %v1366
        %v1370 = vsel %vm789, %v946, 2147483647
        %v1371 = vand.u32 %v1370, 65535
        %v1372 = vshra.s32 %v1370, 16
        %v1373 = vcvt.s32.f32 %v1371
        %v1374 = vcvt.s32.f32 %v1372
        %1375 = vmin.xlane.f32.xlu0 %v1374
        %v1376 = vpop.xlane.xlu0 %1375
        %vm1377 = vcmp.eq.f32.partialorder %v1374, %v1376
        %v1378 = vsel %vm1377, %v1373, inf
        %1379 = vmin.xlane.f32.xlu0 %v1378
        %v1380 = vpop.xlane.xlu0 %1379
        %v1381 = vcvt.f32.s32 %v1380
        %v1382 = vcvt.f32.s32 %v1376
        %v1383 = vshll.u32 %v1382, 16
        %v1384 = vadd.s32 %v1383, %v1381
        %v1385 = vsel %vm789, %v947, 2147483647
        %v1386 = vand.u32 %v1385, 65535
        %v1387 = vshra.s32 %v1385, 16
        %v1388 = vcvt.s32.f32 %v1386
        %v1389 = vcvt.s32.f32 %v1387
        %1390 = vmin.xlane.f32.xlu0 %v1389
        %v1391 = vpop.xlane.xlu0 %1390
        %vm1392 = vcmp.eq.f32.partialorder %v1389, %v1391
        %v1393 = vsel %vm1392, %v1388, inf
        %1394 = vmin.xlane.f32.xlu0 %v1393
        %v1395 = vpop.xlane.xlu0 %1394
        %v1396 = vcvt.f32.s32 %v1395
        %v1397 = vcvt.f32.s32 %v1391
        %v1398 = vshll.u32 %v1397, 16
        %v1399 = vadd.s32 %v1398, %v1396
        %v1400 = vsel %vm789, %v948, 2147483647
        %v1401 = vand.u32 %v1400, 65535
        %v1402 = vshra.s32 %v1400, 16
        %v1403 = vcvt.s32.f32 %v1401
        %v1404 = vcvt.s32.f32 %v1402
        %1405 = vmin.xlane.f32.xlu0 %v1404
        %v1406 = vpop.xlane.xlu0 %1405
        %vm1407 = vcmp.eq.f32.partialorder %v1404, %v1406
        %v1408 = vsel %vm1407, %v1403, inf
        %1409 = vmin.xlane.f32.xlu0 %v1408
        %v1410 = vpop.xlane.xlu0 %1409
        %v1411 = vcvt.f32.s32 %v1410
        %v1412 = vcvt.f32.s32 %v1406
        %v1413 = vshll.u32 %v1412, 16
        %v1414 = vadd.s32 %v1413, %v1411
        %v1415 = vsel %vm789, %v949, 2147483647
        %v1416 = vand.u32 %v1415, 65535
        %v1417 = vshra.s32 %v1415, 16
        %v1418 = vcvt.s32.f32 %v1416
        %v1419 = vcvt.s32.f32 %v1417
        %1420 = vmin.xlane.f32.xlu0 %v1419
        %v1421 = vpop.xlane.xlu0 %1420
        %vm1422 = vcmp.eq.f32.partialorder %v1419, %v1421
        %v1423 = vsel %vm1422, %v1418, inf
        %1424 = vmin.xlane.f32.xlu0 %v1423
        %v1425 = vpop.xlane.xlu0 %1424
        %v1426 = vcvt.f32.s32 %v1425
        %v1427 = vcvt.f32.s32 %v1421
        %v1428 = vshll.u32 %v1427, 16
        %v1429 = vadd.s32 %v1428, %v1426
        %vm1430 = vcmp.eq.s32.totalorder %v788, %v964
        %vm1431 = vcmp.eq.s32.totalorder %v788, %v979
        %vm1432 = vcmp.eq.s32.totalorder %v788, %v994
        %vm1433 = vcmp.eq.s32.totalorder %v788, %v1009
        %vm1434 = vcmp.eq.s32.totalorder %v788, %v1024
        %vm1435 = vcmp.eq.s32.totalorder %v788, %v1039
        %vm1436 = vcmp.eq.s32.totalorder %v788, %v1054
        %vm1437 = vcmp.eq.s32.totalorder %v788, %v1069
        %vm1438 = vcmp.eq.s32.totalorder %v788, %v1084
        %vm1439 = vcmp.eq.s32.totalorder %v788, %v1099
        %vm1440 = vcmp.eq.s32.totalorder %v788, %v1114
        %vm1441 = vcmp.eq.s32.totalorder %v788, %v1129
        %vm1442 = vcmp.eq.s32.totalorder %v788, %v1144
        %vm1443 = vcmp.eq.s32.totalorder %v788, %v1159
        %vm1444 = vcmp.eq.s32.totalorder %v788, %v1174
        %vm1445 = vcmp.eq.s32.totalorder %v788, %v1189
        %vm1446 = vcmp.eq.s32.totalorder %v788, %v1204
        %vm1447 = vcmp.eq.s32.totalorder %v788, %v1219
        %vm1448 = vcmp.eq.s32.totalorder %v788, %v1234
        %vm1449 = vcmp.eq.s32.totalorder %v788, %v1249
        %vm1450 = vcmp.eq.s32.totalorder %v788, %v1264
        %vm1451 = vcmp.eq.s32.totalorder %v788, %v1279
        %vm1452 = vcmp.eq.s32.totalorder %v788, %v1294
        %vm1453 = vcmp.eq.s32.totalorder %v788, %v1309
        %vm1454 = vcmp.eq.s32.totalorder %v788, %v1324
        %vm1455 = vcmp.eq.s32.totalorder %v788, %v1339
        %vm1456 = vcmp.eq.s32.totalorder %v788, %v1354
        %vm1457 = vcmp.eq.s32.totalorder %v788, %v1369
        %vm1458 = vcmp.eq.s32.totalorder %v788, %v1384
        %vm1459 = vcmp.eq.s32.totalorder %v788, %v1399
        %vm1460 = vcmp.eq.s32.totalorder %v788, %v1414
        %vm1461 = vcmp.eq.s32.totalorder %v788, %v1429
        %v1462 = vsel %vm1430, -1e+30, %v755
        %v1463 = vsel %vm1431, -1e+30, %v756
        %v1464 = vsel %vm1432, -1e+30, %v757
        %v1465 = vsel %vm1433, -1e+30, %v758
        %v1466 = vsel %vm1434, -1e+30, %v759
        %v1467 = vsel %vm1435, -1e+30, %v760
        %v1468 = vsel %vm1436, -1e+30, %v761
        %v1469 = vsel %vm1437, -1e+30, %v762
        %v1470 = vsel %vm1438, -1e+30, %v763
        %v1471 = vsel %vm1439, -1e+30, %v764
        %v1472 = vsel %vm1440, -1e+30, %v765
        %v1473 = vsel %vm1441, -1e+30, %v766
        %v1474 = vsel %vm1442, -1e+30, %v767
        %v1475 = vsel %vm1443, -1e+30, %v768
        %v1476 = vsel %vm1444, -1e+30, %v769
        %v1477 = vsel %vm1445, -1e+30, %v770
        %v1478 = vsel %vm1446, -1e+30, %v771
        %v1479 = vsel %vm1447, -1e+30, %v772
        %v1480 = vsel %vm1448, -1e+30, %v773
        %v1481 = vsel %vm1449, -1e+30, %v774
        %v1482 = vsel %vm1450, -1e+30, %v775
        %v1483 = vsel %vm1451, -1e+30, %v776
        %v1484 = vsel %vm1452, -1e+30, %v777
        %v1485 = vsel %vm1453, -1e+30, %v778
        %v1486 = vsel %vm1454, -1e+30, %v779
        %v1487 = vsel %vm1455, -1e+30, %v780
        %v1488 = vsel %vm1456, -1e+30, %v781
        %v1489 = vsel %vm1457, -1e+30, %v782
        %v1490 = vsel %vm1458, -1e+30, %v783
        %v1491 = vsel %vm1459, -1e+30, %v784
        %v1492 = vsel %vm1460, -1e+30, %v785
        %v1493 = vsel %vm1461, -1e+30, %v786
        %v1494 = vsel %vm789, %v1462, -inf
        %1495 = vmax.xlane.f32.xlu0 %v1494
        %v1496 = vpop.xlane.xlu0 %1495
        %v1497 = vsel %vm789, %v1463, -inf
        %1498 = vmax.xlane.f32.xlu0 %v1497
        %v1499 = vpop.xlane.xlu0 %1498
        %v1500 = vsel %vm789, %v1464, -inf
        %1501 = vmax.xlane.f32.xlu0 %v1500
        %v1502 = vpop.xlane.xlu0 %1501
        %v1503 = vsel %vm789, %v1465, -inf
        %1504 = vmax.xlane.f32.xlu0 %v1503
        %v1505 = vpop.xlane.xlu0 %1504
        %v1506 = vsel %vm789, %v1466, -inf
        %1507 = vmax.xlane.f32.xlu0 %v1506
        %v1508 = vpop.xlane.xlu0 %1507
        %v1509 = vsel %vm789, %v1467, -inf
        %1510 = vmax.xlane.f32.xlu0 %v1509
        %v1511 = vpop.xlane.xlu0 %1510
        %v1512 = vsel %vm789, %v1468, -inf
        %1513 = vmax.xlane.f32.xlu0 %v1512
        %v1514 = vpop.xlane.xlu0 %1513
        %v1515 = vsel %vm789, %v1469, -inf
        %1516 = vmax.xlane.f32.xlu0 %v1515
        %v1517 = vpop.xlane.xlu0 %1516
        %v1518 = vsel %vm789, %v1470, -inf
        %1519 = vmax.xlane.f32.xlu0 %v1518
        %v1520 = vpop.xlane.xlu0 %1519
        %v1521 = vsel %vm789, %v1471, -inf
        %1522 = vmax.xlane.f32.xlu0 %v1521
        %v1523 = vpop.xlane.xlu0 %1522
        %v1524 = vsel %vm789, %v1472, -inf
        %1525 = vmax.xlane.f32.xlu0 %v1524
        %v1526 = vpop.xlane.xlu0 %1525
        %v1527 = vsel %vm789, %v1473, -inf
        %1528 = vmax.xlane.f32.xlu0 %v1527
        %v1529 = vpop.xlane.xlu0 %1528
        %v1530 = vsel %vm789, %v1474, -inf
        %1531 = vmax.xlane.f32.xlu0 %v1530
        %v1532 = vpop.xlane.xlu0 %1531
        %v1533 = vsel %vm789, %v1475, -inf
        %1534 = vmax.xlane.f32.xlu0 %v1533
        %v1535 = vpop.xlane.xlu0 %1534
        %v1536 = vsel %vm789, %v1476, -inf
        %1537 = vmax.xlane.f32.xlu0 %v1536
        %v1538 = vpop.xlane.xlu0 %1537
        %v1539 = vsel %vm789, %v1477, -inf
        %1540 = vmax.xlane.f32.xlu0 %v1539
        %v1541 = vpop.xlane.xlu0 %1540
        %v1542 = vsel %vm789, %v1478, -inf
        %1543 = vmax.xlane.f32.xlu0 %v1542
        %v1544 = vpop.xlane.xlu0 %1543
        %v1545 = vsel %vm789, %v1479, -inf
        %1546 = vmax.xlane.f32.xlu0 %v1545
        %v1547 = vpop.xlane.xlu0 %1546
        %v1548 = vsel %vm789, %v1480, -inf
        %1549 = vmax.xlane.f32.xlu0 %v1548
        %v1550 = vpop.xlane.xlu0 %1549
        %v1551 = vsel %vm789, %v1481, -inf
        %1552 = vmax.xlane.f32.xlu0 %v1551
        %v1553 = vpop.xlane.xlu0 %1552
        %v1554 = vsel %vm789, %v1482, -inf
        %1555 = vmax.xlane.f32.xlu0 %v1554
        %v1556 = vpop.xlane.xlu0 %1555
        %v1557 = vsel %vm789, %v1483, -inf
        %1558 = vmax.xlane.f32.xlu0 %v1557
        %v1559 = vpop.xlane.xlu0 %1558
        %v1560 = vsel %vm789, %v1484, -inf
        %1561 = vmax.xlane.f32.xlu0 %v1560
        %v1562 = vpop.xlane.xlu0 %1561
        %v1563 = vsel %vm789, %v1485, -inf
        %1564 = vmax.xlane.f32.xlu0 %v1563
        %v1565 = vpop.xlane.xlu0 %1564
        %v1566 = vsel %vm789, %v1486, -inf
        %1567 = vmax.xlane.f32.xlu0 %v1566
        %v1568 = vpop.xlane.xlu0 %1567
        %v1569 = vsel %vm789, %v1487, -inf
        %1570 = vmax.xlane.f32.xlu0 %v1569
        %v1571 = vpop.xlane.xlu0 %1570
        %v1572 = vsel %vm789, %v1488, -inf
        %1573 = vmax.xlane.f32.xlu0 %v1572
        %v1574 = vpop.xlane.xlu0 %1573
        %v1575 = vsel %vm789, %v1489, -inf
        %1576 = vmax.xlane.f32.xlu0 %v1575
        %v1577 = vpop.xlane.xlu0 %1576
        %v1578 = vsel %vm789, %v1490, -inf
        %1579 = vmax.xlane.f32.xlu0 %v1578
        %v1580 = vpop.xlane.xlu0 %1579
        %v1581 = vsel %vm789, %v1491, -inf
        %1582 = vmax.xlane.f32.xlu0 %v1581
        %v1583 = vpop.xlane.xlu0 %1582
        %v1584 = vsel %vm789, %v1492, -inf
        %1585 = vmax.xlane.f32.xlu0 %v1584
        %v1586 = vpop.xlane.xlu0 %1585
        %v1587 = vsel %vm789, %v1493, -inf
        %1588 = vmax.xlane.f32.xlu0 %v1587
        %v1589 = vpop.xlane.xlu0 %1588
        %vm1590 = vcmp.eq.f32.partialorder %v1462, %v1496
        %vm1591 = vcmp.eq.f32.partialorder %v1463, %v1499
        %vm1592 = vcmp.eq.f32.partialorder %v1464, %v1502
        %vm1593 = vcmp.eq.f32.partialorder %v1465, %v1505
        %vm1594 = vcmp.eq.f32.partialorder %v1466, %v1508
        %vm1595 = vcmp.eq.f32.partialorder %v1467, %v1511
        %vm1596 = vcmp.eq.f32.partialorder %v1468, %v1514
        %vm1597 = vcmp.eq.f32.partialorder %v1469, %v1517
        %vm1598 = vcmp.eq.f32.partialorder %v1470, %v1520
        %vm1599 = vcmp.eq.f32.partialorder %v1471, %v1523
        %vm1600 = vcmp.eq.f32.partialorder %v1472, %v1526
        %vm1601 = vcmp.eq.f32.partialorder %v1473, %v1529
        %vm1602 = vcmp.eq.f32.partialorder %v1474, %v1532
        %vm1603 = vcmp.eq.f32.partialorder %v1475, %v1535
        %vm1604 = vcmp.eq.f32.partialorder %v1476, %v1538
        %vm1605 = vcmp.eq.f32.partialorder %v1477, %v1541
        %vm1606 = vcmp.eq.f32.partialorder %v1478, %v1544
        %vm1607 = vcmp.eq.f32.partialorder %v1479, %v1547
        %vm1608 = vcmp.eq.f32.partialorder %v1480, %v1550
        %vm1609 = vcmp.eq.f32.partialorder %v1481, %v1553
        %vm1610 = vcmp.eq.f32.partialorder %v1482, %v1556
        %vm1611 = vcmp.eq.f32.partialorder %v1483, %v1559
        %vm1612 = vcmp.eq.f32.partialorder %v1484, %v1562
        %vm1613 = vcmp.eq.f32.partialorder %v1485, %v1565
        %vm1614 = vcmp.eq.f32.partialorder %v1486, %v1568
        %vm1615 = vcmp.eq.f32.partialorder %v1487, %v1571
        %vm1616 = vcmp.eq.f32.partialorder %v1488, %v1574
        %vm1617 = vcmp.eq.f32.partialorder %v1489, %v1577
        %vm1618 = vcmp.eq.f32.partialorder %v1490, %v1580
        %vm1619 = vcmp.eq.f32.partialorder %v1491, %v1583
        %vm1620 = vcmp.eq.f32.partialorder %v1492, %v1586
        %vm1621 = vcmp.eq.f32.partialorder %v1493, %v1589
        %v1622 = vsel %vm1590, %v788, 4
        %v1623 = vsel %vm1591, %v788, 4
        %v1624 = vsel %vm1592, %v788, 4
        %v1625 = vsel %vm1593, %v788, 4
        %v1626 = vsel %vm1594, %v788, 4
        %v1627 = vsel %vm1595, %v788, 4
        %v1628 = vsel %vm1596, %v788, 4
        %v1629 = vsel %vm1597, %v788, 4
        %v1630 = vsel %vm1598, %v788, 4
        %v1631 = vsel %vm1599, %v788, 4
        %v1632 = vsel %vm1600, %v788, 4
        %v1633 = vsel %vm1601, %v788, 4
        %v1634 = vsel %vm1602, %v788, 4
        %v1635 = vsel %vm1603, %v788, 4
        %v1636 = vsel %vm1604, %v788, 4
        %v1637 = vsel %vm1605, %v788, 4
        %v1638 = vsel %vm1606, %v788, 4
        %v1639 = vsel %vm1607, %v788, 4
        %v1640 = vsel %vm1608, %v788, 4
        %v1641 = vsel %vm1609, %v788, 4
        %v1642 = vsel %vm1610, %v788, 4
        %v1643 = vsel %vm1611, %v788, 4
        %v1644 = vsel %vm1612, %v788, 4
        %v1645 = vsel %vm1613, %v788, 4
        %v1646 = vsel %vm1614, %v788, 4
        %v1647 = vsel %vm1615, %v788, 4
        %v1648 = vsel %vm1616, %v788, 4
        %v1649 = vsel %vm1617, %v788, 4
        %v1650 = vsel %vm1618, %v788, 4
        %v1651 = vsel %vm1619, %v788, 4
        %v1652 = vsel %vm1620, %v788, 4
        %v1653 = vsel %vm1621, %v788, 4
        %v1654 = vsel %vm789, %v1622, 2147483647
        %v1655 = vand.u32 %v1654, 65535
        %v1656 = vshra.s32 %v1654, 16
        %v1657 = vcvt.s32.f32 %v1655
        %v1658 = vcvt.s32.f32 %v1656
        %1659 = vmin.xlane.f32.xlu0 %v1658
        %v1660 = vpop.xlane.xlu0 %1659
        %vm1661 = vcmp.eq.f32.partialorder %v1658, %v1660
        %v1662 = vsel %vm1661, %v1657, inf
        %1663 = vmin.xlane.f32.xlu0 %v1662
        %v1664 = vpop.xlane.xlu0 %1663
        %v1665 = vcvt.f32.s32 %v1664
        %v1666 = vcvt.f32.s32 %v1660
        %v1667 = vshll.u32 %v1666, 16
        %v1668 = vadd.s32 %v1667, %v1665
        %v1669 = vsel %vm789, %v1623, 2147483647
        %v1670 = vand.u32 %v1669, 65535
        %v1671 = vshra.s32 %v1669, 16
        %v1672 = vcvt.s32.f32 %v1670
        %v1673 = vcvt.s32.f32 %v1671
        %1674 = vmin.xlane.f32.xlu0 %v1673
        %v1675 = vpop.xlane.xlu0 %1674
        %vm1676 = vcmp.eq.f32.partialorder %v1673, %v1675
        %v1677 = vsel %vm1676, %v1672, inf
        %1678 = vmin.xlane.f32.xlu0 %v1677
        %v1679 = vpop.xlane.xlu0 %1678
        %v1680 = vcvt.f32.s32 %v1679
        %v1681 = vcvt.f32.s32 %v1675
        %v1682 = vshll.u32 %v1681, 16
        %v1683 = vadd.s32 %v1682, %v1680
        %v1684 = vsel %vm789, %v1624, 2147483647
        %v1685 = vand.u32 %v1684, 65535
        %v1686 = vshra.s32 %v1684, 16
        %v1687 = vcvt.s32.f32 %v1685
        %v1688 = vcvt.s32.f32 %v1686
        %1689 = vmin.xlane.f32.xlu0 %v1688
        %v1690 = vpop.xlane.xlu0 %1689
        %vm1691 = vcmp.eq.f32.partialorder %v1688, %v1690
        %v1692 = vsel %vm1691, %v1687, inf
        %1693 = vmin.xlane.f32.xlu0 %v1692
        %v1694 = vpop.xlane.xlu0 %1693
        %v1695 = vcvt.f32.s32 %v1694
        %v1696 = vcvt.f32.s32 %v1690
        %v1697 = vshll.u32 %v1696, 16
        %v1698 = vadd.s32 %v1697, %v1695
        %v1699 = vsel %vm789, %v1625, 2147483647
        %v1700 = vand.u32 %v1699, 65535
        %v1701 = vshra.s32 %v1699, 16
        %v1702 = vcvt.s32.f32 %v1700
        %v1703 = vcvt.s32.f32 %v1701
        %1704 = vmin.xlane.f32.xlu0 %v1703
        %v1705 = vpop.xlane.xlu0 %1704
        %vm1706 = vcmp.eq.f32.partialorder %v1703, %v1705
        %v1707 = vsel %vm1706, %v1702, inf
        %1708 = vmin.xlane.f32.xlu0 %v1707
        %v1709 = vpop.xlane.xlu0 %1708
        %v1710 = vcvt.f32.s32 %v1709
        %v1711 = vcvt.f32.s32 %v1705
        %v1712 = vshll.u32 %v1711, 16
        %v1713 = vadd.s32 %v1712, %v1710
        %v1714 = vsel %vm789, %v1626, 2147483647
        %v1715 = vand.u32 %v1714, 65535
        %v1716 = vshra.s32 %v1714, 16
        %v1717 = vcvt.s32.f32 %v1715
        %v1718 = vcvt.s32.f32 %v1716
        %1719 = vmin.xlane.f32.xlu0 %v1718
        %v1720 = vpop.xlane.xlu0 %1719
        %vm1721 = vcmp.eq.f32.partialorder %v1718, %v1720
        %v1722 = vsel %vm1721, %v1717, inf
        %1723 = vmin.xlane.f32.xlu0 %v1722
        %v1724 = vpop.xlane.xlu0 %1723
        %v1725 = vcvt.f32.s32 %v1724
        %v1726 = vcvt.f32.s32 %v1720
        %v1727 = vshll.u32 %v1726, 16
        %v1728 = vadd.s32 %v1727, %v1725
        %v1729 = vsel %vm789, %v1627, 2147483647
        %v1730 = vand.u32 %v1729, 65535
        %v1731 = vshra.s32 %v1729, 16
        %v1732 = vcvt.s32.f32 %v1730
        %v1733 = vcvt.s32.f32 %v1731
        %1734 = vmin.xlane.f32.xlu0 %v1733
        %v1735 = vpop.xlane.xlu0 %1734
        %vm1736 = vcmp.eq.f32.partialorder %v1733, %v1735
        %v1737 = vsel %vm1736, %v1732, inf
        %1738 = vmin.xlane.f32.xlu0 %v1737
        %v1739 = vpop.xlane.xlu0 %1738
        %v1740 = vcvt.f32.s32 %v1739
        %v1741 = vcvt.f32.s32 %v1735
        %v1742 = vshll.u32 %v1741, 16
        %v1743 = vadd.s32 %v1742, %v1740
        %v1744 = vsel %vm789, %v1628, 2147483647
        %v1745 = vand.u32 %v1744, 65535
        %v1746 = vshra.s32 %v1744, 16
        %v1747 = vcvt.s32.f32 %v1745
        %v1748 = vcvt.s32.f32 %v1746
        %1749 = vmin.xlane.f32.xlu0 %v1748
        %v1750 = vpop.xlane.xlu0 %1749
        %vm1751 = vcmp.eq.f32.partialorder %v1748, %v1750
        %v1752 = vsel %vm1751, %v1747, inf
        %1753 = vmin.xlane.f32.xlu0 %v1752
        %v1754 = vpop.xlane.xlu0 %1753
        %v1755 = vcvt.f32.s32 %v1754
        %v1756 = vcvt.f32.s32 %v1750
        %v1757 = vshll.u32 %v1756, 16
        %v1758 = vadd.s32 %v1757, %v1755
        %v1759 = vsel %vm789, %v1629, 2147483647
        %v1760 = vand.u32 %v1759, 65535
        %v1761 = vshra.s32 %v1759, 16
        %v1762 = vcvt.s32.f32 %v1760
        %v1763 = vcvt.s32.f32 %v1761
        %1764 = vmin.xlane.f32.xlu0 %v1763
        %v1765 = vpop.xlane.xlu0 %1764
        %vm1766 = vcmp.eq.f32.partialorder %v1763, %v1765
        %v1767 = vsel %vm1766, %v1762, inf
        %1768 = vmin.xlane.f32.xlu0 %v1767
        %v1769 = vpop.xlane.xlu0 %1768
        %v1770 = vcvt.f32.s32 %v1769
        %v1771 = vcvt.f32.s32 %v1765
        %v1772 = vshll.u32 %v1771, 16
        %v1773 = vadd.s32 %v1772, %v1770
        %v1774 = vsel %vm789, %v1630, 2147483647
        %v1775 = vand.u32 %v1774, 65535
        %v1776 = vshra.s32 %v1774, 16
        %v1777 = vcvt.s32.f32 %v1775
        %v1778 = vcvt.s32.f32 %v1776
        %1779 = vmin.xlane.f32.xlu0 %v1778
        %v1780 = vpop.xlane.xlu0 %1779
        %vm1781 = vcmp.eq.f32.partialorder %v1778, %v1780
        %v1782 = vsel %vm1781, %v1777, inf
        %1783 = vmin.xlane.f32.xlu0 %v1782
        %v1784 = vpop.xlane.xlu0 %1783
        %v1785 = vcvt.f32.s32 %v1784
        %v1786 = vcvt.f32.s32 %v1780
        %v1787 = vshll.u32 %v1786, 16
        %v1788 = vadd.s32 %v1787, %v1785
        %v1789 = vsel %vm789, %v1631, 2147483647
        %v1790 = vand.u32 %v1789, 65535
        %v1791 = vshra.s32 %v1789, 16
        %v1792 = vcvt.s32.f32 %v1790
        %v1793 = vcvt.s32.f32 %v1791
        %1794 = vmin.xlane.f32.xlu0 %v1793
        %v1795 = vpop.xlane.xlu0 %1794
        %vm1796 = vcmp.eq.f32.partialorder %v1793, %v1795
        %v1797 = vsel %vm1796, %v1792, inf
        %1798 = vmin.xlane.f32.xlu0 %v1797
        %v1799 = vpop.xlane.xlu0 %1798
        %v1800 = vcvt.f32.s32 %v1799
        %v1801 = vcvt.f32.s32 %v1795
        %v1802 = vshll.u32 %v1801, 16
        %v1803 = vadd.s32 %v1802, %v1800
        %v1804 = vsel %vm789, %v1632, 2147483647
        %v1805 = vand.u32 %v1804, 65535
        %v1806 = vshra.s32 %v1804, 16
        %v1807 = vcvt.s32.f32 %v1805
        %v1808 = vcvt.s32.f32 %v1806
        %1809 = vmin.xlane.f32.xlu0 %v1808
        %v1810 = vpop.xlane.xlu0 %1809
        %vm1811 = vcmp.eq.f32.partialorder %v1808, %v1810
        %v1812 = vsel %vm1811, %v1807, inf
        %1813 = vmin.xlane.f32.xlu0 %v1812
        %v1814 = vpop.xlane.xlu0 %1813
        %v1815 = vcvt.f32.s32 %v1814
        %v1816 = vcvt.f32.s32 %v1810
        %v1817 = vshll.u32 %v1816, 16
        %v1818 = vadd.s32 %v1817, %v1815
        %v1819 = vsel %vm789, %v1633, 2147483647
        %v1820 = vand.u32 %v1819, 65535
        %v1821 = vshra.s32 %v1819, 16
        %v1822 = vcvt.s32.f32 %v1820
        %v1823 = vcvt.s32.f32 %v1821
        %1824 = vmin.xlane.f32.xlu0 %v1823
        %v1825 = vpop.xlane.xlu0 %1824
        %vm1826 = vcmp.eq.f32.partialorder %v1823, %v1825
        %v1827 = vsel %vm1826, %v1822, inf
        %1828 = vmin.xlane.f32.xlu0 %v1827
        %v1829 = vpop.xlane.xlu0 %1828
        %v1830 = vcvt.f32.s32 %v1829
        %v1831 = vcvt.f32.s32 %v1825
        %v1832 = vshll.u32 %v1831, 16
        %v1833 = vadd.s32 %v1832, %v1830
        %v1834 = vsel %vm789, %v1634, 2147483647
        %v1835 = vand.u32 %v1834, 65535
        %v1836 = vshra.s32 %v1834, 16
        %v1837 = vcvt.s32.f32 %v1835
        %v1838 = vcvt.s32.f32 %v1836
        %1839 = vmin.xlane.f32.xlu0 %v1838
        %v1840 = vpop.xlane.xlu0 %1839
        %vm1841 = vcmp.eq.f32.partialorder %v1838, %v1840
        %v1842 = vsel %vm1841, %v1837, inf
        %1843 = vmin.xlane.f32.xlu0 %v1842
        %v1844 = vpop.xlane.xlu0 %1843
        %v1845 = vcvt.f32.s32 %v1844
        %v1846 = vcvt.f32.s32 %v1840
        %v1847 = vshll.u32 %v1846, 16
        %v1848 = vadd.s32 %v1847, %v1845
        %v1849 = vsel %vm789, %v1635, 2147483647
        %v1850 = vand.u32 %v1849, 65535
        %v1851 = vshra.s32 %v1849, 16
        %v1852 = vcvt.s32.f32 %v1850
        %v1853 = vcvt.s32.f32 %v1851
        %1854 = vmin.xlane.f32.xlu0 %v1853
        %v1855 = vpop.xlane.xlu0 %1854
        %vm1856 = vcmp.eq.f32.partialorder %v1853, %v1855
        %v1857 = vsel %vm1856, %v1852, inf
        %1858 = vmin.xlane.f32.xlu0 %v1857
        %v1859 = vpop.xlane.xlu0 %1858
        %v1860 = vcvt.f32.s32 %v1859
        %v1861 = vcvt.f32.s32 %v1855
        %v1862 = vshll.u32 %v1861, 16
        %v1863 = vadd.s32 %v1862, %v1860
        %v1864 = vsel %vm789, %v1636, 2147483647
        %v1865 = vand.u32 %v1864, 65535
        %v1866 = vshra.s32 %v1864, 16
        %v1867 = vcvt.s32.f32 %v1865
        %v1868 = vcvt.s32.f32 %v1866
        %1869 = vmin.xlane.f32.xlu0 %v1868
        %v1870 = vpop.xlane.xlu0 %1869
        %vm1871 = vcmp.eq.f32.partialorder %v1868, %v1870
        %v1872 = vsel %vm1871, %v1867, inf
        %1873 = vmin.xlane.f32.xlu0 %v1872
        %v1874 = vpop.xlane.xlu0 %1873
        %v1875 = vcvt.f32.s32 %v1874
        %v1876 = vcvt.f32.s32 %v1870
        %v1877 = vshll.u32 %v1876, 16
        %v1878 = vadd.s32 %v1877, %v1875
        %v1879 = vsel %vm789, %v1637, 2147483647
        %v1880 = vand.u32 %v1879, 65535
        %v1881 = vshra.s32 %v1879, 16
        %v1882 = vcvt.s32.f32 %v1880
        %v1883 = vcvt.s32.f32 %v1881
        %1884 = vmin.xlane.f32.xlu0 %v1883
        %v1885 = vpop.xlane.xlu0 %1884
        %vm1886 = vcmp.eq.f32.partialorder %v1883, %v1885
        %v1887 = vsel %vm1886, %v1882, inf
        %1888 = vmin.xlane.f32.xlu0 %v1887
        %v1889 = vpop.xlane.xlu0 %1888
        %v1890 = vcvt.f32.s32 %v1889
        %v1891 = vcvt.f32.s32 %v1885
        %v1892 = vshll.u32 %v1891, 16
        %v1893 = vadd.s32 %v1892, %v1890
        %v1894 = vsel %vm789, %v1638, 2147483647
        %v1895 = vand.u32 %v1894, 65535
        %v1896 = vshra.s32 %v1894, 16
        %v1897 = vcvt.s32.f32 %v1895
        %v1898 = vcvt.s32.f32 %v1896
        %1899 = vmin.xlane.f32.xlu0 %v1898
        %v1900 = vpop.xlane.xlu0 %1899
        %vm1901 = vcmp.eq.f32.partialorder %v1898, %v1900
        %v1902 = vsel %vm1901, %v1897, inf
        %1903 = vmin.xlane.f32.xlu0 %v1902
        %v1904 = vpop.xlane.xlu0 %1903
        %v1905 = vcvt.f32.s32 %v1904
        %v1906 = vcvt.f32.s32 %v1900
        %v1907 = vshll.u32 %v1906, 16
        %v1908 = vadd.s32 %v1907, %v1905
        %v1909 = vsel %vm789, %v1639, 2147483647
        %v1910 = vand.u32 %v1909, 65535
        %v1911 = vshra.s32 %v1909, 16
        %v1912 = vcvt.s32.f32 %v1910
        %v1913 = vcvt.s32.f32 %v1911
        %1914 = vmin.xlane.f32.xlu0 %v1913
        %v1915 = vpop.xlane.xlu0 %1914
        %vm1916 = vcmp.eq.f32.partialorder %v1913, %v1915
        %v1917 = vsel %vm1916, %v1912, inf
        %1918 = vmin.xlane.f32.xlu0 %v1917
        %v1919 = vpop.xlane.xlu0 %1918
        %v1920 = vcvt.f32.s32 %v1919
        %v1921 = vcvt.f32.s32 %v1915
        %v1922 = vshll.u32 %v1921, 16
        %v1923 = vadd.s32 %v1922, %v1920
        %v1924 = vsel %vm789, %v1640, 2147483647
        %v1925 = vand.u32 %v1924, 65535
        %v1926 = vshra.s32 %v1924, 16
        %v1927 = vcvt.s32.f32 %v1925
        %v1928 = vcvt.s32.f32 %v1926
        %1929 = vmin.xlane.f32.xlu0 %v1928
        %v1930 = vpop.xlane.xlu0 %1929
        %vm1931 = vcmp.eq.f32.partialorder %v1928, %v1930
        %v1932 = vsel %vm1931, %v1927, inf
        %1933 = vmin.xlane.f32.xlu0 %v1932
        %v1934 = vpop.xlane.xlu0 %1933
        %v1935 = vcvt.f32.s32 %v1934
        %v1936 = vcvt.f32.s32 %v1930
        %v1937 = vshll.u32 %v1936, 16
        %v1938 = vadd.s32 %v1937, %v1935
        %v1939 = vsel %vm789, %v1641, 2147483647
        %v1940 = vand.u32 %v1939, 65535
        %v1941 = vshra.s32 %v1939, 16
        %v1942 = vcvt.s32.f32 %v1940
        %v1943 = vcvt.s32.f32 %v1941
        %1944 = vmin.xlane.f32.xlu0 %v1943
        %v1945 = vpop.xlane.xlu0 %1944
        %vm1946 = vcmp.eq.f32.partialorder %v1943, %v1945
        %v1947 = vsel %vm1946, %v1942, inf
        %1948 = vmin.xlane.f32.xlu0 %v1947
        %v1949 = vpop.xlane.xlu0 %1948
        %v1950 = vcvt.f32.s32 %v1949
        %v1951 = vcvt.f32.s32 %v1945
        %v1952 = vshll.u32 %v1951, 16
        %v1953 = vadd.s32 %v1952, %v1950
        %v1954 = vsel %vm789, %v1642, 2147483647
        %v1955 = vand.u32 %v1954, 65535
        %v1956 = vshra.s32 %v1954, 16
        %v1957 = vcvt.s32.f32 %v1955
        %v1958 = vcvt.s32.f32 %v1956
        %1959 = vmin.xlane.f32.xlu0 %v1958
        %v1960 = vpop.xlane.xlu0 %1959
        %vm1961 = vcmp.eq.f32.partialorder %v1958, %v1960
        %v1962 = vsel %vm1961, %v1957, inf
        %1963 = vmin.xlane.f32.xlu0 %v1962
        %v1964 = vpop.xlane.xlu0 %1963
        %v1965 = vcvt.f32.s32 %v1964
        %v1966 = vcvt.f32.s32 %v1960
        %v1967 = vshll.u32 %v1966, 16
        %v1968 = vadd.s32 %v1967, %v1965
        %v1969 = vsel %vm789, %v1643, 2147483647
        %v1970 = vand.u32 %v1969, 65535
        %v1971 = vshra.s32 %v1969, 16
        %v1972 = vcvt.s32.f32 %v1970
        %v1973 = vcvt.s32.f32 %v1971
        %1974 = vmin.xlane.f32.xlu0 %v1973
        %v1975 = vpop.xlane.xlu0 %1974
        %vm1976 = vcmp.eq.f32.partialorder %v1973, %v1975
        %v1977 = vsel %vm1976, %v1972, inf
        %1978 = vmin.xlane.f32.xlu0 %v1977
        %v1979 = vpop.xlane.xlu0 %1978
        %v1980 = vcvt.f32.s32 %v1979
        %v1981 = vcvt.f32.s32 %v1975
        %v1982 = vshll.u32 %v1981, 16
        %v1983 = vadd.s32 %v1982, %v1980
        %v1984 = vsel %vm789, %v1644, 2147483647
        %v1985 = vand.u32 %v1984, 65535
        %v1986 = vshra.s32 %v1984, 16
        %v1987 = vcvt.s32.f32 %v1985
        %v1988 = vcvt.s32.f32 %v1986
        %1989 = vmin.xlane.f32.xlu0 %v1988
        %v1990 = vpop.xlane.xlu0 %1989
        %vm1991 = vcmp.eq.f32.partialorder %v1988, %v1990
        %v1992 = vsel %vm1991, %v1987, inf
        %1993 = vmin.xlane.f32.xlu0 %v1992
        %v1994 = vpop.xlane.xlu0 %1993
        %v1995 = vcvt.f32.s32 %v1994
        %v1996 = vcvt.f32.s32 %v1990
        %v1997 = vshll.u32 %v1996, 16
        %v1998 = vadd.s32 %v1997, %v1995
        %v1999 = vsel %vm789, %v1645, 2147483647
        %v2000 = vand.u32 %v1999, 65535
        %v2001 = vshra.s32 %v1999, 16
        %v2002 = vcvt.s32.f32 %v2000
        %v2003 = vcvt.s32.f32 %v2001
        %2004 = vmin.xlane.f32.xlu0 %v2003
        %v2005 = vpop.xlane.xlu0 %2004
        %vm2006 = vcmp.eq.f32.partialorder %v2003, %v2005
        %v2007 = vsel %vm2006, %v2002, inf
        %2008 = vmin.xlane.f32.xlu0 %v2007
        %v2009 = vpop.xlane.xlu0 %2008
        %v2010 = vcvt.f32.s32 %v2009
        %v2011 = vcvt.f32.s32 %v2005
        %v2012 = vshll.u32 %v2011, 16
        %v2013 = vadd.s32 %v2012, %v2010
        %v2014 = vsel %vm789, %v1646, 2147483647
        %v2015 = vand.u32 %v2014, 65535
        %v2016 = vshra.s32 %v2014, 16
        %v2017 = vcvt.s32.f32 %v2015
        %v2018 = vcvt.s32.f32 %v2016
        %2019 = vmin.xlane.f32.xlu0 %v2018
        %v2020 = vpop.xlane.xlu0 %2019
        %vm2021 = vcmp.eq.f32.partialorder %v2018, %v2020
        %v2022 = vsel %vm2021, %v2017, inf
        %2023 = vmin.xlane.f32.xlu0 %v2022
        %v2024 = vpop.xlane.xlu0 %2023
        %v2025 = vcvt.f32.s32 %v2024
        %v2026 = vcvt.f32.s32 %v2020
        %v2027 = vshll.u32 %v2026, 16
        %v2028 = vadd.s32 %v2027, %v2025
        %v2029 = vsel %vm789, %v1647, 2147483647
        %v2030 = vand.u32 %v2029, 65535
        %v2031 = vshra.s32 %v2029, 16
        %v2032 = vcvt.s32.f32 %v2030
        %v2033 = vcvt.s32.f32 %v2031
        %2034 = vmin.xlane.f32.xlu0 %v2033
        %v2035 = vpop.xlane.xlu0 %2034
        %vm2036 = vcmp.eq.f32.partialorder %v2033, %v2035
        %v2037 = vsel %vm2036, %v2032, inf
        %2038 = vmin.xlane.f32.xlu0 %v2037
        %v2039 = vpop.xlane.xlu0 %2038
        %v2040 = vcvt.f32.s32 %v2039
        %v2041 = vcvt.f32.s32 %v2035
        %v2042 = vshll.u32 %v2041, 16
        %v2043 = vadd.s32 %v2042, %v2040
        %v2044 = vsel %vm789, %v1648, 2147483647
        %v2045 = vand.u32 %v2044, 65535
        %v2046 = vshra.s32 %v2044, 16
        %v2047 = vcvt.s32.f32 %v2045
        %v2048 = vcvt.s32.f32 %v2046
        %2049 = vmin.xlane.f32.xlu0 %v2048
        %v2050 = vpop.xlane.xlu0 %2049
        %vm2051 = vcmp.eq.f32.partialorder %v2048, %v2050
        %v2052 = vsel %vm2051, %v2047, inf
        %2053 = vmin.xlane.f32.xlu0 %v2052
        %v2054 = vpop.xlane.xlu0 %2053
        %v2055 = vcvt.f32.s32 %v2054
        %v2056 = vcvt.f32.s32 %v2050
        %v2057 = vshll.u32 %v2056, 16
        %v2058 = vadd.s32 %v2057, %v2055
        %v2059 = vsel %vm789, %v1649, 2147483647
        %v2060 = vand.u32 %v2059, 65535
        %v2061 = vshra.s32 %v2059, 16
        %v2062 = vcvt.s32.f32 %v2060
        %v2063 = vcvt.s32.f32 %v2061
        %2064 = vmin.xlane.f32.xlu0 %v2063
        %v2065 = vpop.xlane.xlu0 %2064
        %vm2066 = vcmp.eq.f32.partialorder %v2063, %v2065
        %v2067 = vsel %vm2066, %v2062, inf
        %2068 = vmin.xlane.f32.xlu0 %v2067
        %v2069 = vpop.xlane.xlu0 %2068
        %v2070 = vcvt.f32.s32 %v2069
        %v2071 = vcvt.f32.s32 %v2065
        %v2072 = vshll.u32 %v2071, 16
        %v2073 = vadd.s32 %v2072, %v2070
        %v2074 = vsel %vm789, %v1650, 2147483647
        %v2075 = vand.u32 %v2074, 65535
        %v2076 = vshra.s32 %v2074, 16
        %v2077 = vcvt.s32.f32 %v2075
        %v2078 = vcvt.s32.f32 %v2076
        %2079 = vmin.xlane.f32.xlu0 %v2078
        %v2080 = vpop.xlane.xlu0 %2079
        %vm2081 = vcmp.eq.f32.partialorder %v2078, %v2080
        %v2082 = vsel %vm2081, %v2077, inf
        %2083 = vmin.xlane.f32.xlu0 %v2082
        %v2084 = vpop.xlane.xlu0 %2083
        %v2085 = vcvt.f32.s32 %v2084
        %v2086 = vcvt.f32.s32 %v2080
        %v2087 = vshll.u32 %v2086, 16
        %v2088 = vadd.s32 %v2087, %v2085
        %v2089 = vsel %vm789, %v1651, 2147483647
        %v2090 = vand.u32 %v2089, 65535
        %v2091 = vshra.s32 %v2089, 16
        %v2092 = vcvt.s32.f32 %v2090
        %v2093 = vcvt.s32.f32 %v2091
        %2094 = vmin.xlane.f32.xlu0 %v2093
        %v2095 = vpop.xlane.xlu0 %2094
        %vm2096 = vcmp.eq.f32.partialorder %v2093, %v2095
        %v2097 = vsel %vm2096, %v2092, inf
        %2098 = vmin.xlane.f32.xlu0 %v2097
        %v2099 = vpop.xlane.xlu0 %2098
        %v2100 = vcvt.f32.s32 %v2099
        %v2101 = vcvt.f32.s32 %v2095
        %v2102 = vshll.u32 %v2101, 16
        %v2103 = vadd.s32 %v2102, %v2100
        %v2104 = vsel %vm789, %v1652, 2147483647
        %v2105 = vand.u32 %v2104, 65535
        %v2106 = vshra.s32 %v2104, 16
        %v2107 = vcvt.s32.f32 %v2105
        %v2108 = vcvt.s32.f32 %v2106
        %2109 = vmin.xlane.f32.xlu0 %v2108
        %v2110 = vpop.xlane.xlu0 %2109
        %vm2111 = vcmp.eq.f32.partialorder %v2108, %v2110
        %v2112 = vsel %vm2111, %v2107, inf
        %2113 = vmin.xlane.f32.xlu0 %v2112
        %v2114 = vpop.xlane.xlu0 %2113
        %v2115 = vcvt.f32.s32 %v2114
        %v2116 = vcvt.f32.s32 %v2110
        %v2117 = vshll.u32 %v2116, 16
        %v2118 = vadd.s32 %v2117, %v2115
        %v2119 = vsel %vm789, %v1653, 2147483647
        %v2120 = vand.u32 %v2119, 65535
        %v2121 = vshra.s32 %v2119, 16
        %v2122 = vcvt.s32.f32 %v2120
        %v2123 = vcvt.s32.f32 %v2121
        %2124 = vmin.xlane.f32.xlu0 %v2123
        %v2125 = vpop.xlane.xlu0 %2124
        %vm2126 = vcmp.eq.f32.partialorder %v2123, %v2125
        %v2127 = vsel %vm2126, %v2122, inf
        %2128 = vmin.xlane.f32.xlu0 %v2127
        %v2129 = vpop.xlane.xlu0 %2128
        %v2130 = vcvt.f32.s32 %v2129
        %v2131 = vcvt.f32.s32 %v2125
        %v2132 = vshll.u32 %v2131, 16
        %v2133 = vadd.s32 %v2132, %v2130
        %vm2134 = vcmp.eq.s32.totalorder %v788, %v1668
        %vm2135 = vcmp.eq.s32.totalorder %v788, %v1683
        %vm2136 = vcmp.eq.s32.totalorder %v788, %v1698
        %vm2137 = vcmp.eq.s32.totalorder %v788, %v1713
        %vm2138 = vcmp.eq.s32.totalorder %v788, %v1728
        %vm2139 = vcmp.eq.s32.totalorder %v788, %v1743
        %vm2140 = vcmp.eq.s32.totalorder %v788, %v1758
        %vm2141 = vcmp.eq.s32.totalorder %v788, %v1773
        %vm2142 = vcmp.eq.s32.totalorder %v788, %v1788
        %vm2143 = vcmp.eq.s32.totalorder %v788, %v1803
        %vm2144 = vcmp.eq.s32.totalorder %v788, %v1818
        %vm2145 = vcmp.eq.s32.totalorder %v788, %v1833
        %vm2146 = vcmp.eq.s32.totalorder %v788, %v1848
        %vm2147 = vcmp.eq.s32.totalorder %v788, %v1863
        %vm2148 = vcmp.eq.s32.totalorder %v788, %v1878
        %vm2149 = vcmp.eq.s32.totalorder %v788, %v1893
        %vm2150 = vcmp.eq.s32.totalorder %v788, %v1908
        %vm2151 = vcmp.eq.s32.totalorder %v788, %v1923
        %vm2152 = vcmp.eq.s32.totalorder %v788, %v1938
        %vm2153 = vcmp.eq.s32.totalorder %v788, %v1953
        %vm2154 = vcmp.eq.s32.totalorder %v788, %v1968
        %vm2155 = vcmp.eq.s32.totalorder %v788, %v1983
        %vm2156 = vcmp.eq.s32.totalorder %v788, %v1998
        %vm2157 = vcmp.eq.s32.totalorder %v788, %v2013
        %vm2158 = vcmp.eq.s32.totalorder %v788, %v2028
        %vm2159 = vcmp.eq.s32.totalorder %v788, %v2043
        %vm2160 = vcmp.eq.s32.totalorder %v788, %v2058
        %vm2161 = vcmp.eq.s32.totalorder %v788, %v2073
        %vm2162 = vcmp.eq.s32.totalorder %v788, %v2088
        %vm2163 = vcmp.eq.s32.totalorder %v788, %v2103
        %vm2164 = vcmp.eq.s32.totalorder %v788, %v2118
        %vm2165 = vcmp.eq.s32.totalorder %v788, %v2133
        %vm2166 = vmor %vm1430, %vm2134
        %vm2167 = vmor %vm1431, %vm2135
        %vm2168 = vmor %vm1432, %vm2136
        %vm2169 = vmor %vm1433, %vm2137
        %vm2170 = vmor %vm1434, %vm2138
        %vm2171 = vmor %vm1435, %vm2139
        %vm2172 = vmor %vm1436, %vm2140
        %vm2173 = vmor %vm1437, %vm2141
        %vm2174 = vmor %vm1438, %vm2142
        %vm2175 = vmor %vm1439, %vm2143
        %vm2176 = vmor %vm1440, %vm2144
        %vm2177 = vmor %vm1441, %vm2145
        %vm2178 = vmor %vm1442, %vm2146
        %vm2179 = vmor %vm1443, %vm2147
        %vm2180 = vmor %vm1444, %vm2148
        %vm2181 = vmor %vm1445, %vm2149
        %vm2182 = vmor %vm1446, %vm2150
        %vm2183 = vmor %vm1447, %vm2151
        %vm2184 = vmor %vm1448, %vm2152
        %vm2185 = vmor %vm1449, %vm2153
        %vm2186 = vmor %vm1450, %vm2154
        %vm2187 = vmor %vm1451, %vm2155
        %vm2188 = vmor %vm1452, %vm2156
        %vm2189 = vmor %vm1453, %vm2157
        %vm2190 = vmor %vm1454, %vm2158
        %vm2191 = vmor %vm1455, %vm2159
        %vm2192 = vmor %vm1456, %vm2160
        %vm2193 = vmor %vm1457, %vm2161
        %vm2194 = vmor %vm1458, %vm2162
        %vm2195 = vmor %vm1459, %vm2163
        %vm2196 = vmor %vm1460, %vm2164
        %vm2197 = vmor %vm1461, %vm2165
        %v2198 = vsel %vm2166, %v755, -1e+30
        %v2199 = vsel %vm2167, %v756, -1e+30
        %v2200 = vsel %vm2168, %v757, -1e+30
        %v2201 = vsel %vm2169, %v758, -1e+30
        %v2202 = vsel %vm2170, %v759, -1e+30
        %v2203 = vsel %vm2171, %v760, -1e+30
        %v2204 = vsel %vm2172, %v761, -1e+30
        %v2205 = vsel %vm2173, %v762, -1e+30
        %v2206 = vsel %vm2174, %v763, -1e+30
        %v2207 = vsel %vm2175, %v764, -1e+30
        %v2208 = vsel %vm2176, %v765, -1e+30
        %v2209 = vsel %vm2177, %v766, -1e+30
        %v2210 = vsel %vm2178, %v767, -1e+30
        %v2211 = vsel %vm2179, %v768, -1e+30
        %v2212 = vsel %vm2180, %v769, -1e+30
        %v2213 = vsel %vm2181, %v770, -1e+30
        %v2214 = vsel %vm2182, %v771, -1e+30
        %v2215 = vsel %vm2183, %v772, -1e+30
        %v2216 = vsel %vm2184, %v773, -1e+30
        %v2217 = vsel %vm2185, %v774, -1e+30
        %v2218 = vsel %vm2186, %v775, -1e+30
        %v2219 = vsel %vm2187, %v776, -1e+30
        %v2220 = vsel %vm2188, %v777, -1e+30
        %v2221 = vsel %vm2189, %v778, -1e+30
        %v2222 = vsel %vm2190, %v779, -1e+30
        %v2223 = vsel %vm2191, %v780, -1e+30
        %v2224 = vsel %vm2192, %v781, -1e+30
        %v2225 = vsel %vm2193, %v782, -1e+30
        %v2226 = vsel %vm2194, %v783, -1e+30
        %v2227 = vsel %vm2195, %v784, -1e+30
        %v2228 = vsel %vm2196, %v785, -1e+30
        %v2229 = vsel %vm2197, %v786, -1e+30
        %v2230 = vsel %vm789, %v2198, -inf
        %2231 = vmax.xlane.f32.xlu0 %v2230
        %v2232 = vpop.xlane.xlu0 %2231
        %v2233 = vsel %vm789, %v2199, -inf
        %2234 = vmax.xlane.f32.xlu0 %v2233
        %v2235 = vpop.xlane.xlu0 %2234
        %v2236 = vsel %vm789, %v2200, -inf
        %2237 = vmax.xlane.f32.xlu0 %v2236
        %v2238 = vpop.xlane.xlu0 %2237
        %v2239 = vsel %vm789, %v2201, -inf
        %2240 = vmax.xlane.f32.xlu0 %v2239
        %v2241 = vpop.xlane.xlu0 %2240
        %v2242 = vsel %vm789, %v2202, -inf
        %2243 = vmax.xlane.f32.xlu0 %v2242
        %v2244 = vpop.xlane.xlu0 %2243
        %v2245 = vsel %vm789, %v2203, -inf
        %2246 = vmax.xlane.f32.xlu0 %v2245
        %v2247 = vpop.xlane.xlu0 %2246
        %v2248 = vsel %vm789, %v2204, -inf
        %2249 = vmax.xlane.f32.xlu0 %v2248
        %v2250 = vpop.xlane.xlu0 %2249
        %v2251 = vsel %vm789, %v2205, -inf
        %2252 = vmax.xlane.f32.xlu0 %v2251
        %v2253 = vpop.xlane.xlu0 %2252
        %v2254 = vsel %vm789, %v2206, -inf
        %2255 = vmax.xlane.f32.xlu0 %v2254
        %v2256 = vpop.xlane.xlu0 %2255
        %v2257 = vsel %vm789, %v2207, -inf
        %2258 = vmax.xlane.f32.xlu0 %v2257
        %v2259 = vpop.xlane.xlu0 %2258
        %v2260 = vsel %vm789, %v2208, -inf
        %2261 = vmax.xlane.f32.xlu0 %v2260
        %v2262 = vpop.xlane.xlu0 %2261
        %v2263 = vsel %vm789, %v2209, -inf
        %2264 = vmax.xlane.f32.xlu0 %v2263
        %v2265 = vpop.xlane.xlu0 %2264
        %v2266 = vsel %vm789, %v2210, -inf
        %2267 = vmax.xlane.f32.xlu0 %v2266
        %v2268 = vpop.xlane.xlu0 %2267
        %v2269 = vsel %vm789, %v2211, -inf
        %2270 = vmax.xlane.f32.xlu0 %v2269
        %v2271 = vpop.xlane.xlu0 %2270
        %v2272 = vsel %vm789, %v2212, -inf
        %2273 = vmax.xlane.f32.xlu0 %v2272
        %v2274 = vpop.xlane.xlu0 %2273
        %v2275 = vsel %vm789, %v2213, -inf
        %2276 = vmax.xlane.f32.xlu0 %v2275
        %v2277 = vpop.xlane.xlu0 %2276
        %v2278 = vsel %vm789, %v2214, -inf
        %2279 = vmax.xlane.f32.xlu0 %v2278
        %v2280 = vpop.xlane.xlu0 %2279
        %v2281 = vsel %vm789, %v2215, -inf
        %2282 = vmax.xlane.f32.xlu0 %v2281
        %v2283 = vpop.xlane.xlu0 %2282
        %v2284 = vsel %vm789, %v2216, -inf
        %2285 = vmax.xlane.f32.xlu0 %v2284
        %v2286 = vpop.xlane.xlu0 %2285
        %v2287 = vsel %vm789, %v2217, -inf
        %2288 = vmax.xlane.f32.xlu0 %v2287
        %v2289 = vpop.xlane.xlu0 %2288
        %v2290 = vsel %vm789, %v2218, -inf
        %2291 = vmax.xlane.f32.xlu0 %v2290
        %v2292 = vpop.xlane.xlu0 %2291
        %v2293 = vsel %vm789, %v2219, -inf
        %2294 = vmax.xlane.f32.xlu0 %v2293
        %v2295 = vpop.xlane.xlu0 %2294
        %v2296 = vsel %vm789, %v2220, -inf
        %2297 = vmax.xlane.f32.xlu0 %v2296
        %v2298 = vpop.xlane.xlu0 %2297
        %v2299 = vsel %vm789, %v2221, -inf
        %2300 = vmax.xlane.f32.xlu0 %v2299
        %v2301 = vpop.xlane.xlu0 %2300
        %v2302 = vsel %vm789, %v2222, -inf
        %2303 = vmax.xlane.f32.xlu0 %v2302
        %v2304 = vpop.xlane.xlu0 %2303
        %v2305 = vsel %vm789, %v2223, -inf
        %2306 = vmax.xlane.f32.xlu0 %v2305
        %v2307 = vpop.xlane.xlu0 %2306
        %v2308 = vsel %vm789, %v2224, -inf
        %2309 = vmax.xlane.f32.xlu0 %v2308
        %v2310 = vpop.xlane.xlu0 %2309
        %v2311 = vsel %vm789, %v2225, -inf
        %2312 = vmax.xlane.f32.xlu0 %v2311
        %v2313 = vpop.xlane.xlu0 %2312
        %v2314 = vsel %vm789, %v2226, -inf
        %2315 = vmax.xlane.f32.xlu0 %v2314
        %v2316 = vpop.xlane.xlu0 %2315
        %v2317 = vsel %vm789, %v2227, -inf
        %2318 = vmax.xlane.f32.xlu0 %v2317
        %v2319 = vpop.xlane.xlu0 %2318
        %v2320 = vsel %vm789, %v2228, -inf
        %2321 = vmax.xlane.f32.xlu0 %v2320
        %v2322 = vpop.xlane.xlu0 %2321
        %v2323 = vsel %vm789, %v2229, -inf
        %2324 = vmax.xlane.f32.xlu0 %v2323
        %v2325 = vpop.xlane.xlu0 %2324
        %v2326 = vsub.f32 %v2198, %v2232
        %v2327 = vsub.f32 %v2199, %v2235
        %v2328 = vsub.f32 %v2200, %v2238
        %v2329 = vsub.f32 %v2201, %v2241
        %v2330 = vsub.f32 %v2202, %v2244
        %v2331 = vsub.f32 %v2203, %v2247
        %v2332 = vsub.f32 %v2204, %v2250
        %v2333 = vsub.f32 %v2205, %v2253
        %v2334 = vsub.f32 %v2206, %v2256
        %v2335 = vsub.f32 %v2207, %v2259
        %v2336 = vsub.f32 %v2208, %v2262
        %v2337 = vsub.f32 %v2209, %v2265
        %v2338 = vsub.f32 %v2210, %v2268
        %v2339 = vsub.f32 %v2211, %v2271
        %v2340 = vsub.f32 %v2212, %v2274
        %v2341 = vsub.f32 %v2213, %v2277
        %v2342 = vsub.f32 %v2214, %v2280
        %v2343 = vsub.f32 %v2215, %v2283
        %v2344 = vsub.f32 %v2216, %v2286
        %v2345 = vsub.f32 %v2217, %v2289
        %v2346 = vsub.f32 %v2218, %v2292
        %v2347 = vsub.f32 %v2219, %v2295
        %v2348 = vsub.f32 %v2220, %v2298
        %v2349 = vsub.f32 %v2221, %v2301
        %v2350 = vsub.f32 %v2222, %v2304
        %v2351 = vsub.f32 %v2223, %v2307
        %v2352 = vsub.f32 %v2224, %v2310
        %v2353 = vsub.f32 %v2225, %v2313
        %v2354 = vsub.f32 %v2226, %v2316
        %v2355 = vsub.f32 %v2227, %v2319
        %v2356 = vsub.f32 %v2228, %v2322
        %v2357 = vsub.f32 %v2229, %v2325
        %v2358 = vmul.f32 %v2326, 1.442695
        %v2359 = vpow.pop %v2358
        %v2360 = vmul.f32 %v2327, 1.442695
        %v2361 = vpow.pop %v2360
        %v2362 = vmul.f32 %v2328, 1.442695
        %v2363 = vpow.pop %v2362
        %v2364 = vmul.f32 %v2329, 1.442695
        %v2365 = vpow.pop %v2364
        %v2366 = vmul.f32 %v2330, 1.442695
        %v2367 = vpow.pop %v2366
        %v2368 = vmul.f32 %v2331, 1.442695
        %v2369 = vpow.pop %v2368
        %v2370 = vmul.f32 %v2332, 1.442695
        %v2371 = vpow.pop %v2370
        %v2372 = vmul.f32 %v2333, 1.442695
        %v2373 = vpow.pop %v2372
        %v2374 = vmul.f32 %v2334, 1.442695
        %v2375 = vpow.pop %v2374
        %v2376 = vmul.f32 %v2335, 1.442695
        %v2377 = vpow.pop %v2376
        %v2378 = vmul.f32 %v2336, 1.442695
        %v2379 = vpow.pop %v2378
        %v2380 = vmul.f32 %v2337, 1.442695
        %v2381 = vpow.pop %v2380
        %v2382 = vmul.f32 %v2338, 1.442695
        %v2383 = vpow.pop %v2382
        %v2384 = vmul.f32 %v2339, 1.442695
        %v2385 = vpow.pop %v2384
        %v2386 = vmul.f32 %v2340, 1.442695
        %v2387 = vpow.pop %v2386
        %v2388 = vmul.f32 %v2341, 1.442695
        %v2389 = vpow.pop %v2388
        %v2390 = vmul.f32 %v2342, 1.442695
        %v2391 = vpow.pop %v2390
        %v2392 = vmul.f32 %v2343, 1.442695
        %v2393 = vpow.pop %v2392
        %v2394 = vmul.f32 %v2344, 1.442695
        %v2395 = vpow.pop %v2394
        %v2396 = vmul.f32 %v2345, 1.442695
        %v2397 = vpow.pop %v2396
        %v2398 = vmul.f32 %v2346, 1.442695
        %v2399 = vpow.pop %v2398
        %v2400 = vmul.f32 %v2347, 1.442695
        %v2401 = vpow.pop %v2400
        %v2402 = vmul.f32 %v2348, 1.442695
        %v2403 = vpow.pop %v2402
        %v2404 = vmul.f32 %v2349, 1.442695
        %v2405 = vpow.pop %v2404
        %v2406 = vmul.f32 %v2350, 1.442695
        %v2407 = vpow.pop %v2406
        %v2408 = vmul.f32 %v2351, 1.442695
        %v2409 = vpow.pop %v2408
        %v2410 = vmul.f32 %v2352, 1.442695
        %v2411 = vpow.pop %v2410
        %v2412 = vmul.f32 %v2353, 1.442695
        %v2413 = vpow.pop %v2412
        %v2414 = vmul.f32 %v2354, 1.442695
        %v2415 = vpow.pop %v2414
        %v2416 = vmul.f32 %v2355, 1.442695
        %v2417 = vpow.pop %v2416
        %v2418 = vmul.f32 %v2356, 1.442695
        %v2419 = vpow.pop %v2418
        %v2420 = vmul.f32 %v2357, 1.442695
        %v2421 = vpow.pop %v2420
        %v2422 = vsel %vm2166, %v2359, 0.0
        %v2423 = vsel %vm2167, %v2361, 0.0
        %v2424 = vsel %vm2168, %v2363, 0.0
        %v2425 = vsel %vm2169, %v2365, 0.0
        %v2426 = vsel %vm2170, %v2367, 0.0
        %v2427 = vsel %vm2171, %v2369, 0.0
        %v2428 = vsel %vm2172, %v2371, 0.0
        %v2429 = vsel %vm2173, %v2373, 0.0
        %v2430 = vsel %vm2174, %v2375, 0.0
        %v2431 = vsel %vm2175, %v2377, 0.0
        %v2432 = vsel %vm2176, %v2379, 0.0
        %v2433 = vsel %vm2177, %v2381, 0.0
        %v2434 = vsel %vm2178, %v2383, 0.0
        %v2435 = vsel %vm2179, %v2385, 0.0
        %v2436 = vsel %vm2180, %v2387, 0.0
        %v2437 = vsel %vm2181, %v2389, 0.0
        %v2438 = vsel %vm2182, %v2391, 0.0
        %v2439 = vsel %vm2183, %v2393, 0.0
        %v2440 = vsel %vm2184, %v2395, 0.0
        %v2441 = vsel %vm2185, %v2397, 0.0
        %v2442 = vsel %vm2186, %v2399, 0.0
        %v2443 = vsel %vm2187, %v2401, 0.0
        %v2444 = vsel %vm2188, %v2403, 0.0
        %v2445 = vsel %vm2189, %v2405, 0.0
        %v2446 = vsel %vm2190, %v2407, 0.0
        %v2447 = vsel %vm2191, %v2409, 0.0
        %v2448 = vsel %vm2192, %v2411, 0.0
        %v2449 = vsel %vm2193, %v2413, 0.0
        %v2450 = vsel %vm2194, %v2415, 0.0
        %v2451 = vsel %vm2195, %v2417, 0.0
        %v2452 = vsel %vm2196, %v2419, 0.0
        %v2453 = vsel %vm2197, %v2421, 0.0
        %v2454 = vsel %vm789, %v2422, 0.0
        %2455 = vadd.xlane.f32.xlu0 %v2454
        %v2456 = vpop.xlane.xlu0 %2455
        %v2457 = vsel %vm789, %v2423, 0.0
        %2458 = vadd.xlane.f32.xlu0 %v2457
        %v2459 = vpop.xlane.xlu0 %2458
        %v2460 = vsel %vm789, %v2424, 0.0
        %2461 = vadd.xlane.f32.xlu0 %v2460
        %v2462 = vpop.xlane.xlu0 %2461
        %v2463 = vsel %vm789, %v2425, 0.0
        %2464 = vadd.xlane.f32.xlu0 %v2463
        %v2465 = vpop.xlane.xlu0 %2464
        %v2466 = vsel %vm789, %v2426, 0.0
        %2467 = vadd.xlane.f32.xlu0 %v2466
        %v2468 = vpop.xlane.xlu0 %2467
        %v2469 = vsel %vm789, %v2427, 0.0
        %2470 = vadd.xlane.f32.xlu0 %v2469
        %v2471 = vpop.xlane.xlu0 %2470
        %v2472 = vsel %vm789, %v2428, 0.0
        %2473 = vadd.xlane.f32.xlu0 %v2472
        %v2474 = vpop.xlane.xlu0 %2473
        %v2475 = vsel %vm789, %v2429, 0.0
        %2476 = vadd.xlane.f32.xlu0 %v2475
        %v2477 = vpop.xlane.xlu0 %2476
        %v2478 = vsel %vm789, %v2430, 0.0
        %2479 = vadd.xlane.f32.xlu0 %v2478
        %v2480 = vpop.xlane.xlu0 %2479
        %v2481 = vsel %vm789, %v2431, 0.0
        %2482 = vadd.xlane.f32.xlu0 %v2481
        %v2483 = vpop.xlane.xlu0 %2482
        %v2484 = vsel %vm789, %v2432, 0.0
        %2485 = vadd.xlane.f32.xlu0 %v2484
        %v2486 = vpop.xlane.xlu0 %2485
        %v2487 = vsel %vm789, %v2433, 0.0
        %2488 = vadd.xlane.f32.xlu0 %v2487
        %v2489 = vpop.xlane.xlu0 %2488
        %v2490 = vsel %vm789, %v2434, 0.0
        %2491 = vadd.xlane.f32.xlu0 %v2490
        %v2492 = vpop.xlane.xlu0 %2491
        %v2493 = vsel %vm789, %v2435, 0.0
        %2494 = vadd.xlane.f32.xlu0 %v2493
        %v2495 = vpop.xlane.xlu0 %2494
        %v2496 = vsel %vm789, %v2436, 0.0
        %2497 = vadd.xlane.f32.xlu0 %v2496
        %v2498 = vpop.xlane.xlu0 %2497
        %v2499 = vsel %vm789, %v2437, 0.0
        %2500 = vadd.xlane.f32.xlu0 %v2499
        %v2501 = vpop.xlane.xlu0 %2500
        %v2502 = vsel %vm789, %v2438, 0.0
        %2503 = vadd.xlane.f32.xlu0 %v2502
        %v2504 = vpop.xlane.xlu0 %2503
        %v2505 = vsel %vm789, %v2439, 0.0
        %2506 = vadd.xlane.f32.xlu0 %v2505
        %v2507 = vpop.xlane.xlu0 %2506
        %v2508 = vsel %vm789, %v2440, 0.0
        %2509 = vadd.xlane.f32.xlu0 %v2508
        %v2510 = vpop.xlane.xlu0 %2509
        %v2511 = vsel %vm789, %v2441, 0.0
        %2512 = vadd.xlane.f32.xlu0 %v2511
        %v2513 = vpop.xlane.xlu0 %2512
        %v2514 = vsel %vm789, %v2442, 0.0
        %2515 = vadd.xlane.f32.xlu0 %v2514
        %v2516 = vpop.xlane.xlu0 %2515
        %v2517 = vsel %vm789, %v2443, 0.0
        %2518 = vadd.xlane.f32.xlu0 %v2517
        %v2519 = vpop.xlane.xlu0 %2518
        %v2520 = vsel %vm789, %v2444, 0.0
        %2521 = vadd.xlane.f32.xlu0 %v2520
        %v2522 = vpop.xlane.xlu0 %2521
        %v2523 = vsel %vm789, %v2445, 0.0
        %2524 = vadd.xlane.f32.xlu0 %v2523
        %v2525 = vpop.xlane.xlu0 %2524
        %v2526 = vsel %vm789, %v2446, 0.0
        %2527 = vadd.xlane.f32.xlu0 %v2526
        %v2528 = vpop.xlane.xlu0 %2527
        %v2529 = vsel %vm789, %v2447, 0.0
        %2530 = vadd.xlane.f32.xlu0 %v2529
        %v2531 = vpop.xlane.xlu0 %2530
        %v2532 = vsel %vm789, %v2448, 0.0
        %2533 = vadd.xlane.f32.xlu0 %v2532
        %v2534 = vpop.xlane.xlu0 %2533
        %v2535 = vsel %vm789, %v2449, 0.0
        %2536 = vadd.xlane.f32.xlu0 %v2535
        %v2537 = vpop.xlane.xlu0 %2536
        %v2538 = vsel %vm789, %v2450, 0.0
        %2539 = vadd.xlane.f32.xlu0 %v2538
        %v2540 = vpop.xlane.xlu0 %2539
        %v2541 = vsel %vm789, %v2451, 0.0
        %2542 = vadd.xlane.f32.xlu0 %v2541
        %v2543 = vpop.xlane.xlu0 %2542
        %v2544 = vsel %vm789, %v2452, 0.0
        %2545 = vadd.xlane.f32.xlu0 %v2544
        %v2546 = vpop.xlane.xlu0 %2545
        %v2547 = vsel %vm789, %v2453, 0.0
        %2548 = vadd.xlane.f32.xlu0 %v2547
        %v2549 = vpop.xlane.xlu0 %2548
        %v2550 = vrcp.pop %v2456
        %v2551 = vmul.f32 %v2456, %v2550
        %v2552 = vsub.f32 1.0, %v2551
        %v2553 = vmul.f32 %v2550, %v2552
        %v2554 = vadd.f32 %v2550, %v2553
        %vm2555 = vweird.f32 %v2456
        %vm2556 = vweird.f32 %v2550
        %vm2557 = vmor %vm2555, %vm2556
        %v2558 = vsel %vm2557, %v2550, %v2554
        %v2559 = vand.u32 2147483647, %v2456
        %vm2560 = vcmp.eq.f32.partialorder %v2559, 8.507059e+37
        %v2561 = vand.u32 %v2456, 2147483648
        %v2562 = vor.u32 1.1754944e-38, %v2561
        %v2563 = vsel %vm2560, %v2562, %v2558
        %v2564 = vmul.f32 %v2422, %v2563
        %v2565 = vrcp.pop %v2459
        %v2566 = vmul.f32 %v2459, %v2565
        %v2567 = vsub.f32 1.0, %v2566
        %v2568 = vmul.f32 %v2565, %v2567
        %v2569 = vadd.f32 %v2565, %v2568
        %vm2570 = vweird.f32 %v2459
        %vm2571 = vweird.f32 %v2565
        %vm2572 = vmor %vm2570, %vm2571
        %v2573 = vsel %vm2572, %v2565, %v2569
        %v2574 = vand.u32 2147483647, %v2459
        %vm2575 = vcmp.eq.f32.partialorder %v2574, 8.507059e+37
        %v2576 = vand.u32 %v2459, 2147483648
        %v2577 = vor.u32 1.1754944e-38, %v2576
        %v2578 = vsel %vm2575, %v2577, %v2573
        %v2579 = vmul.f32 %v2423, %v2578
        %v2580 = vrcp.pop %v2462
        %v2581 = vmul.f32 %v2462, %v2580
        %v2582 = vsub.f32 1.0, %v2581
        %v2583 = vmul.f32 %v2580, %v2582
        %v2584 = vadd.f32 %v2580, %v2583
        %vm2585 = vweird.f32 %v2462
        %vm2586 = vweird.f32 %v2580
        %vm2587 = vmor %vm2585, %vm2586
        %v2588 = vsel %vm2587, %v2580, %v2584
        %v2589 = vand.u32 2147483647, %v2462
        %vm2590 = vcmp.eq.f32.partialorder %v2589, 8.507059e+37
        %v2591 = vand.u32 %v2462, 2147483648
        %v2592 = vor.u32 1.1754944e-38, %v2591
        %v2593 = vsel %vm2590, %v2592, %v2588
        %v2594 = vmul.f32 %v2424, %v2593
        %v2595 = vrcp.pop %v2465
        %v2596 = vmul.f32 %v2465, %v2595
        %v2597 = vsub.f32 1.0, %v2596
        %v2598 = vmul.f32 %v2595, %v2597
        %v2599 = vadd.f32 %v2595, %v2598
        %vm2600 = vweird.f32 %v2465
        %vm2601 = vweird.f32 %v2595
        %vm2602 = vmor %vm2600, %vm2601
        %v2603 = vsel %vm2602, %v2595, %v2599
        %v2604 = vand.u32 2147483647, %v2465
        %vm2605 = vcmp.eq.f32.partialorder %v2604, 8.507059e+37
        %v2606 = vand.u32 %v2465, 2147483648
        %v2607 = vor.u32 1.1754944e-38, %v2606
        %v2608 = vsel %vm2605, %v2607, %v2603
        %v2609 = vmul.f32 %v2425, %v2608
        %v2610 = vrcp.pop %v2468
        %v2611 = vmul.f32 %v2468, %v2610
        %v2612 = vsub.f32 1.0, %v2611
        %v2613 = vmul.f32 %v2610, %v2612
        %v2614 = vadd.f32 %v2610, %v2613
        %vm2615 = vweird.f32 %v2468
        %vm2616 = vweird.f32 %v2610
        %vm2617 = vmor %vm2615, %vm2616
        %v2618 = vsel %vm2617, %v2610, %v2614
        %v2619 = vand.u32 2147483647, %v2468
        %vm2620 = vcmp.eq.f32.partialorder %v2619, 8.507059e+37
        %v2621 = vand.u32 %v2468, 2147483648
        %v2622 = vor.u32 1.1754944e-38, %v2621
        %v2623 = vsel %vm2620, %v2622, %v2618
        %v2624 = vmul.f32 %v2426, %v2623
        %v2625 = vrcp.pop %v2471
        %v2626 = vmul.f32 %v2471, %v2625
        %v2627 = vsub.f32 1.0, %v2626
        %v2628 = vmul.f32 %v2625, %v2627
        %v2629 = vadd.f32 %v2625, %v2628
        %vm2630 = vweird.f32 %v2471
        %vm2631 = vweird.f32 %v2625
        %vm2632 = vmor %vm2630, %vm2631
        %v2633 = vsel %vm2632, %v2625, %v2629
        %v2634 = vand.u32 2147483647, %v2471
        %vm2635 = vcmp.eq.f32.partialorder %v2634, 8.507059e+37
        %v2636 = vand.u32 %v2471, 2147483648
        %v2637 = vor.u32 1.1754944e-38, %v2636
        %v2638 = vsel %vm2635, %v2637, %v2633
        %v2639 = vmul.f32 %v2427, %v2638
        %v2640 = vrcp.pop %v2474
        %v2641 = vmul.f32 %v2474, %v2640
        %v2642 = vsub.f32 1.0, %v2641
        %v2643 = vmul.f32 %v2640, %v2642
        %v2644 = vadd.f32 %v2640, %v2643
        %vm2645 = vweird.f32 %v2474
        %vm2646 = vweird.f32 %v2640
        %vm2647 = vmor %vm2645, %vm2646
        %v2648 = vsel %vm2647, %v2640, %v2644
        %v2649 = vand.u32 2147483647, %v2474
        %vm2650 = vcmp.eq.f32.partialorder %v2649, 8.507059e+37
        %v2651 = vand.u32 %v2474, 2147483648
        %v2652 = vor.u32 1.1754944e-38, %v2651
        %v2653 = vsel %vm2650, %v2652, %v2648
        %v2654 = vmul.f32 %v2428, %v2653
        %v2655 = vrcp.pop %v2477
        %v2656 = vmul.f32 %v2477, %v2655
        %v2657 = vsub.f32 1.0, %v2656
        %v2658 = vmul.f32 %v2655, %v2657
        %v2659 = vadd.f32 %v2655, %v2658
        %vm2660 = vweird.f32 %v2477
        %vm2661 = vweird.f32 %v2655
        %vm2662 = vmor %vm2660, %vm2661
        %v2663 = vsel %vm2662, %v2655, %v2659
        %v2664 = vand.u32 2147483647, %v2477
        %vm2665 = vcmp.eq.f32.partialorder %v2664, 8.507059e+37
        %v2666 = vand.u32 %v2477, 2147483648
        %v2667 = vor.u32 1.1754944e-38, %v2666
        %v2668 = vsel %vm2665, %v2667, %v2663
        %v2669 = vmul.f32 %v2429, %v2668
        %v2670 = vrcp.pop %v2480
        %v2671 = vmul.f32 %v2480, %v2670
        %v2672 = vsub.f32 1.0, %v2671
        %v2673 = vmul.f32 %v2670, %v2672
        %v2674 = vadd.f32 %v2670, %v2673
        %vm2675 = vweird.f32 %v2480
        %vm2676 = vweird.f32 %v2670
        %vm2677 = vmor %vm2675, %vm2676
        %v2678 = vsel %vm2677, %v2670, %v2674
        %v2679 = vand.u32 2147483647, %v2480
        %vm2680 = vcmp.eq.f32.partialorder %v2679, 8.507059e+37
        %v2681 = vand.u32 %v2480, 2147483648
        %v2682 = vor.u32 1.1754944e-38, %v2681
        %v2683 = vsel %vm2680, %v2682, %v2678
        %v2684 = vmul.f32 %v2430, %v2683
        %v2685 = vrcp.pop %v2483
        %v2686 = vmul.f32 %v2483, %v2685
        %v2687 = vsub.f32 1.0, %v2686
        %v2688 = vmul.f32 %v2685, %v2687
        %v2689 = vadd.f32 %v2685, %v2688
        %vm2690 = vweird.f32 %v2483
        %vm2691 = vweird.f32 %v2685
        %vm2692 = vmor %vm2690, %vm2691
        %v2693 = vsel %vm2692, %v2685, %v2689
        %v2694 = vand.u32 2147483647, %v2483
        %vm2695 = vcmp.eq.f32.partialorder %v2694, 8.507059e+37
        %v2696 = vand.u32 %v2483, 2147483648
        %v2697 = vor.u32 1.1754944e-38, %v2696
        %v2698 = vsel %vm2695, %v2697, %v2693
        %v2699 = vmul.f32 %v2431, %v2698
        %v2700 = vrcp.pop %v2486
        %v2701 = vmul.f32 %v2486, %v2700
        %v2702 = vsub.f32 1.0, %v2701
        %v2703 = vmul.f32 %v2700, %v2702
        %v2704 = vadd.f32 %v2700, %v2703
        %vm2705 = vweird.f32 %v2486
        %vm2706 = vweird.f32 %v2700
        %vm2707 = vmor %vm2705, %vm2706
        %v2708 = vsel %vm2707, %v2700, %v2704
        %v2709 = vand.u32 2147483647, %v2486
        %vm2710 = vcmp.eq.f32.partialorder %v2709, 8.507059e+37
        %v2711 = vand.u32 %v2486, 2147483648
        %v2712 = vor.u32 1.1754944e-38, %v2711
        %v2713 = vsel %vm2710, %v2712, %v2708
        %v2714 = vmul.f32 %v2432, %v2713
        %v2715 = vrcp.pop %v2489
        %v2716 = vmul.f32 %v2489, %v2715
        %v2717 = vsub.f32 1.0, %v2716
        %v2718 = vmul.f32 %v2715, %v2717
        %v2719 = vadd.f32 %v2715, %v2718
        %vm2720 = vweird.f32 %v2489
        %vm2721 = vweird.f32 %v2715
        %vm2722 = vmor %vm2720, %vm2721
        %v2723 = vsel %vm2722, %v2715, %v2719
        %v2724 = vand.u32 2147483647, %v2489
        %vm2725 = vcmp.eq.f32.partialorder %v2724, 8.507059e+37
        %v2726 = vand.u32 %v2489, 2147483648
        %v2727 = vor.u32 1.1754944e-38, %v2726
        %v2728 = vsel %vm2725, %v2727, %v2723
        %v2729 = vmul.f32 %v2433, %v2728
        %v2730 = vrcp.pop %v2492
        %v2731 = vmul.f32 %v2492, %v2730
        %v2732 = vsub.f32 1.0, %v2731
        %v2733 = vmul.f32 %v2730, %v2732
        %v2734 = vadd.f32 %v2730, %v2733
        %vm2735 = vweird.f32 %v2492
        %vm2736 = vweird.f32 %v2730
        %vm2737 = vmor %vm2735, %vm2736
        %v2738 = vsel %vm2737, %v2730, %v2734
        %v2739 = vand.u32 2147483647, %v2492
        %vm2740 = vcmp.eq.f32.partialorder %v2739, 8.507059e+37
        %v2741 = vand.u32 %v2492, 2147483648
        %v2742 = vor.u32 1.1754944e-38, %v2741
        %v2743 = vsel %vm2740, %v2742, %v2738
        %v2744 = vmul.f32 %v2434, %v2743
        %v2745 = vrcp.pop %v2495
        %v2746 = vmul.f32 %v2495, %v2745
        %v2747 = vsub.f32 1.0, %v2746
        %v2748 = vmul.f32 %v2745, %v2747
        %v2749 = vadd.f32 %v2745, %v2748
        %vm2750 = vweird.f32 %v2495
        %vm2751 = vweird.f32 %v2745
        %vm2752 = vmor %vm2750, %vm2751
        %v2753 = vsel %vm2752, %v2745, %v2749
        %v2754 = vand.u32 2147483647, %v2495
        %vm2755 = vcmp.eq.f32.partialorder %v2754, 8.507059e+37
        %v2756 = vand.u32 %v2495, 2147483648
        %v2757 = vor.u32 1.1754944e-38, %v2756
        %v2758 = vsel %vm2755, %v2757, %v2753
        %v2759 = vmul.f32 %v2435, %v2758
        %v2760 = vrcp.pop %v2498
        %v2761 = vmul.f32 %v2498, %v2760
        %v2762 = vsub.f32 1.0, %v2761
        %v2763 = vmul.f32 %v2760, %v2762
        %v2764 = vadd.f32 %v2760, %v2763
        %vm2765 = vweird.f32 %v2498
        %vm2766 = vweird.f32 %v2760
        %vm2767 = vmor %vm2765, %vm2766
        %v2768 = vsel %vm2767, %v2760, %v2764
        %v2769 = vand.u32 2147483647, %v2498
        %vm2770 = vcmp.eq.f32.partialorder %v2769, 8.507059e+37
        %v2771 = vand.u32 %v2498, 2147483648
        %v2772 = vor.u32 1.1754944e-38, %v2771
        %v2773 = vsel %vm2770, %v2772, %v2768
        %v2774 = vmul.f32 %v2436, %v2773
        %v2775 = vrcp.pop %v2501
        %v2776 = vmul.f32 %v2501, %v2775
        %v2777 = vsub.f32 1.0, %v2776
        %v2778 = vmul.f32 %v2775, %v2777
        %v2779 = vadd.f32 %v2775, %v2778
        %vm2780 = vweird.f32 %v2501
        %vm2781 = vweird.f32 %v2775
        %vm2782 = vmor %vm2780, %vm2781
        %v2783 = vsel %vm2782, %v2775, %v2779
        %v2784 = vand.u32 2147483647, %v2501
        %vm2785 = vcmp.eq.f32.partialorder %v2784, 8.507059e+37
        %v2786 = vand.u32 %v2501, 2147483648
        %v2787 = vor.u32 1.1754944e-38, %v2786
        %v2788 = vsel %vm2785, %v2787, %v2783
        %v2789 = vmul.f32 %v2437, %v2788
        %v2790 = vrcp.pop %v2504
        %v2791 = vmul.f32 %v2504, %v2790
        %v2792 = vsub.f32 1.0, %v2791
        %v2793 = vmul.f32 %v2790, %v2792
        %v2794 = vadd.f32 %v2790, %v2793
        %vm2795 = vweird.f32 %v2504
        %vm2796 = vweird.f32 %v2790
        %vm2797 = vmor %vm2795, %vm2796
        %v2798 = vsel %vm2797, %v2790, %v2794
        %v2799 = vand.u32 2147483647, %v2504
        %vm2800 = vcmp.eq.f32.partialorder %v2799, 8.507059e+37
        %v2801 = vand.u32 %v2504, 2147483648
        %v2802 = vor.u32 1.1754944e-38, %v2801
        %v2803 = vsel %vm2800, %v2802, %v2798
        %v2804 = vmul.f32 %v2438, %v2803
        %v2805 = vrcp.pop %v2507
        %v2806 = vmul.f32 %v2507, %v2805
        %v2807 = vsub.f32 1.0, %v2806
        %v2808 = vmul.f32 %v2805, %v2807
        %v2809 = vadd.f32 %v2805, %v2808
        %vm2810 = vweird.f32 %v2507
        %vm2811 = vweird.f32 %v2805
        %vm2812 = vmor %vm2810, %vm2811
        %v2813 = vsel %vm2812, %v2805, %v2809
        %v2814 = vand.u32 2147483647, %v2507
        %vm2815 = vcmp.eq.f32.partialorder %v2814, 8.507059e+37
        %v2816 = vand.u32 %v2507, 2147483648
        %v2817 = vor.u32 1.1754944e-38, %v2816
        %v2818 = vsel %vm2815, %v2817, %v2813
        %v2819 = vmul.f32 %v2439, %v2818
        %v2820 = vrcp.pop %v2510
        %v2821 = vmul.f32 %v2510, %v2820
        %v2822 = vsub.f32 1.0, %v2821
        %v2823 = vmul.f32 %v2820, %v2822
        %v2824 = vadd.f32 %v2820, %v2823
        %vm2825 = vweird.f32 %v2510
        %vm2826 = vweird.f32 %v2820
        %vm2827 = vmor %vm2825, %vm2826
        %v2828 = vsel %vm2827, %v2820, %v2824
        %v2829 = vand.u32 2147483647, %v2510
        %vm2830 = vcmp.eq.f32.partialorder %v2829, 8.507059e+37
        %v2831 = vand.u32 %v2510, 2147483648
        %v2832 = vor.u32 1.1754944e-38, %v2831
        %v2833 = vsel %vm2830, %v2832, %v2828
        %v2834 = vmul.f32 %v2440, %v2833
        %v2835 = vrcp.pop %v2513
        %v2836 = vmul.f32 %v2513, %v2835
        %v2837 = vsub.f32 1.0, %v2836
        %v2838 = vmul.f32 %v2835, %v2837
        %v2839 = vadd.f32 %v2835, %v2838
        %vm2840 = vweird.f32 %v2513
        %vm2841 = vweird.f32 %v2835
        %vm2842 = vmor %vm2840, %vm2841
        %v2843 = vsel %vm2842, %v2835, %v2839
        %v2844 = vand.u32 2147483647, %v2513
        %vm2845 = vcmp.eq.f32.partialorder %v2844, 8.507059e+37
        %v2846 = vand.u32 %v2513, 2147483648
        %v2847 = vor.u32 1.1754944e-38, %v2846
        %v2848 = vsel %vm2845, %v2847, %v2843
        %v2849 = vmul.f32 %v2441, %v2848
        %v2850 = vrcp.pop %v2516
        %v2851 = vmul.f32 %v2516, %v2850
        %v2852 = vsub.f32 1.0, %v2851
        %v2853 = vmul.f32 %v2850, %v2852
        %v2854 = vadd.f32 %v2850, %v2853
        %vm2855 = vweird.f32 %v2516
        %vm2856 = vweird.f32 %v2850
        %vm2857 = vmor %vm2855, %vm2856
        %v2858 = vsel %vm2857, %v2850, %v2854
        %v2859 = vand.u32 2147483647, %v2516
        %vm2860 = vcmp.eq.f32.partialorder %v2859, 8.507059e+37
        %v2861 = vand.u32 %v2516, 2147483648
        %v2862 = vor.u32 1.1754944e-38, %v2861
        %v2863 = vsel %vm2860, %v2862, %v2858
        %v2864 = vmul.f32 %v2442, %v2863
        %v2865 = vrcp.pop %v2519
        %v2866 = vmul.f32 %v2519, %v2865
        %v2867 = vsub.f32 1.0, %v2866
        %v2868 = vmul.f32 %v2865, %v2867
        %v2869 = vadd.f32 %v2865, %v2868
        %vm2870 = vweird.f32 %v2519
        %vm2871 = vweird.f32 %v2865
        %vm2872 = vmor %vm2870, %vm2871
        %v2873 = vsel %vm2872, %v2865, %v2869
        %v2874 = vand.u32 2147483647, %v2519
        %vm2875 = vcmp.eq.f32.partialorder %v2874, 8.507059e+37
        %v2876 = vand.u32 %v2519, 2147483648
        %v2877 = vor.u32 1.1754944e-38, %v2876
        %v2878 = vsel %vm2875, %v2877, %v2873
        %v2879 = vmul.f32 %v2443, %v2878
        %v2880 = vrcp.pop %v2522
        %v2881 = vmul.f32 %v2522, %v2880
        %v2882 = vsub.f32 1.0, %v2881
        %v2883 = vmul.f32 %v2880, %v2882
        %v2884 = vadd.f32 %v2880, %v2883
        %vm2885 = vweird.f32 %v2522
        %vm2886 = vweird.f32 %v2880
        %vm2887 = vmor %vm2885, %vm2886
        %v2888 = vsel %vm2887, %v2880, %v2884
        %v2889 = vand.u32 2147483647, %v2522
        %vm2890 = vcmp.eq.f32.partialorder %v2889, 8.507059e+37
        %v2891 = vand.u32 %v2522, 2147483648
        %v2892 = vor.u32 1.1754944e-38, %v2891
        %v2893 = vsel %vm2890, %v2892, %v2888
        %v2894 = vmul.f32 %v2444, %v2893
        %v2895 = vrcp.pop %v2525
        %v2896 = vmul.f32 %v2525, %v2895
        %v2897 = vsub.f32 1.0, %v2896
        %v2898 = vmul.f32 %v2895, %v2897
        %v2899 = vadd.f32 %v2895, %v2898
        %vm2900 = vweird.f32 %v2525
        %vm2901 = vweird.f32 %v2895
        %vm2902 = vmor %vm2900, %vm2901
        %v2903 = vsel %vm2902, %v2895, %v2899
        %v2904 = vand.u32 2147483647, %v2525
        %vm2905 = vcmp.eq.f32.partialorder %v2904, 8.507059e+37
        %v2906 = vand.u32 %v2525, 2147483648
        %v2907 = vor.u32 1.1754944e-38, %v2906
        %v2908 = vsel %vm2905, %v2907, %v2903
        %v2909 = vmul.f32 %v2445, %v2908
        %v2910 = vrcp.pop %v2528
        %v2911 = vmul.f32 %v2528, %v2910
        %v2912 = vsub.f32 1.0, %v2911
        %v2913 = vmul.f32 %v2910, %v2912
        %v2914 = vadd.f32 %v2910, %v2913
        %vm2915 = vweird.f32 %v2528
        %vm2916 = vweird.f32 %v2910
        %vm2917 = vmor %vm2915, %vm2916
        %v2918 = vsel %vm2917, %v2910, %v2914
        %v2919 = vand.u32 2147483647, %v2528
        %vm2920 = vcmp.eq.f32.partialorder %v2919, 8.507059e+37
        %v2921 = vand.u32 %v2528, 2147483648
        %v2922 = vor.u32 1.1754944e-38, %v2921
        %v2923 = vsel %vm2920, %v2922, %v2918
        %v2924 = vmul.f32 %v2446, %v2923
        %v2925 = vrcp.pop %v2531
        %v2926 = vmul.f32 %v2531, %v2925
        %v2927 = vsub.f32 1.0, %v2926
        %v2928 = vmul.f32 %v2925, %v2927
        %v2929 = vadd.f32 %v2925, %v2928
        %vm2930 = vweird.f32 %v2531
        %vm2931 = vweird.f32 %v2925
        %vm2932 = vmor %vm2930, %vm2931
        %v2933 = vsel %vm2932, %v2925, %v2929
        %v2934 = vand.u32 2147483647, %v2531
        %vm2935 = vcmp.eq.f32.partialorder %v2934, 8.507059e+37
        %v2936 = vand.u32 %v2531, 2147483648
        %v2937 = vor.u32 1.1754944e-38, %v2936
        %v2938 = vsel %vm2935, %v2937, %v2933
        %v2939 = vmul.f32 %v2447, %v2938
        %v2940 = vrcp.pop %v2534
        %v2941 = vmul.f32 %v2534, %v2940
        %v2942 = vsub.f32 1.0, %v2941
        %v2943 = vmul.f32 %v2940, %v2942
        %v2944 = vadd.f32 %v2940, %v2943
        %vm2945 = vweird.f32 %v2534
        %vm2946 = vweird.f32 %v2940
        %vm2947 = vmor %vm2945, %vm2946
        %v2948 = vsel %vm2947, %v2940, %v2944
        %v2949 = vand.u32 2147483647, %v2534
        %vm2950 = vcmp.eq.f32.partialorder %v2949, 8.507059e+37
        %v2951 = vand.u32 %v2534, 2147483648
        %v2952 = vor.u32 1.1754944e-38, %v2951
        %v2953 = vsel %vm2950, %v2952, %v2948
        %v2954 = vmul.f32 %v2448, %v2953
        %v2955 = vrcp.pop %v2537
        %v2956 = vmul.f32 %v2537, %v2955
        %v2957 = vsub.f32 1.0, %v2956
        %v2958 = vmul.f32 %v2955, %v2957
        %v2959 = vadd.f32 %v2955, %v2958
        %vm2960 = vweird.f32 %v2537
        %vm2961 = vweird.f32 %v2955
        %vm2962 = vmor %vm2960, %vm2961
        %v2963 = vsel %vm2962, %v2955, %v2959
        %v2964 = vand.u32 2147483647, %v2537
        %vm2965 = vcmp.eq.f32.partialorder %v2964, 8.507059e+37
        %v2966 = vand.u32 %v2537, 2147483648
        %v2967 = vor.u32 1.1754944e-38, %v2966
        %v2968 = vsel %vm2965, %v2967, %v2963
        %v2969 = vmul.f32 %v2449, %v2968
        %v2970 = vrcp.pop %v2540
        %v2971 = vmul.f32 %v2540, %v2970
        %v2972 = vsub.f32 1.0, %v2971
        %v2973 = vmul.f32 %v2970, %v2972
        %v2974 = vadd.f32 %v2970, %v2973
        %vm2975 = vweird.f32 %v2540
        %vm2976 = vweird.f32 %v2970
        %vm2977 = vmor %vm2975, %vm2976
        %v2978 = vsel %vm2977, %v2970, %v2974
        %v2979 = vand.u32 2147483647, %v2540
        %vm2980 = vcmp.eq.f32.partialorder %v2979, 8.507059e+37
        %v2981 = vand.u32 %v2540, 2147483648
        %v2982 = vor.u32 1.1754944e-38, %v2981
        %v2983 = vsel %vm2980, %v2982, %v2978
        %v2984 = vmul.f32 %v2450, %v2983
        %v2985 = vrcp.pop %v2543
        %v2986 = vmul.f32 %v2543, %v2985
        %v2987 = vsub.f32 1.0, %v2986
        %v2988 = vmul.f32 %v2985, %v2987
        %v2989 = vadd.f32 %v2985, %v2988
        %vm2990 = vweird.f32 %v2543
        %vm2991 = vweird.f32 %v2985
        %vm2992 = vmor %vm2990, %vm2991
        %v2993 = vsel %vm2992, %v2985, %v2989
        %v2994 = vand.u32 2147483647, %v2543
        %vm2995 = vcmp.eq.f32.partialorder %v2994, 8.507059e+37
        %v2996 = vand.u32 %v2543, 2147483648
        %v2997 = vor.u32 1.1754944e-38, %v2996
        %v2998 = vsel %vm2995, %v2997, %v2993
        %v2999 = vmul.f32 %v2451, %v2998
        %v3000 = vrcp.pop %v2546
        %v3001 = vmul.f32 %v2546, %v3000
        %v3002 = vsub.f32 1.0, %v3001
        %v3003 = vmul.f32 %v3000, %v3002
        %v3004 = vadd.f32 %v3000, %v3003
        %vm3005 = vweird.f32 %v2546
        %vm3006 = vweird.f32 %v3000
        %vm3007 = vmor %vm3005, %vm3006
        %v3008 = vsel %vm3007, %v3000, %v3004
        %v3009 = vand.u32 2147483647, %v2546
        %vm3010 = vcmp.eq.f32.partialorder %v3009, 8.507059e+37
        %v3011 = vand.u32 %v2546, 2147483648
        %v3012 = vor.u32 1.1754944e-38, %v3011
        %v3013 = vsel %vm3010, %v3012, %v3008
        %v3014 = vmul.f32 %v2452, %v3013
        %v3015 = vrcp.pop %v2549
        %v3016 = vmul.f32 %v2549, %v3015
        %v3017 = vsub.f32 1.0, %v3016
        %v3018 = vmul.f32 %v3015, %v3017
        %v3019 = vadd.f32 %v3015, %v3018
        %vm3020 = vweird.f32 %v2549
        %vm3021 = vweird.f32 %v3015
        %vm3022 = vmor %vm3020, %vm3021
        %v3023 = vsel %vm3022, %v3015, %v3019
        %v3024 = vand.u32 2147483647, %v2549
        %vm3025 = vcmp.eq.f32.partialorder %v3024, 8.507059e+37
        %v3026 = vand.u32 %v2549, 2147483648
        %v3027 = vor.u32 1.1754944e-38, %v3026
        %v3028 = vsel %vm3025, %v3027, %v3023
        %v3029 = vmul.f32 %v2453, %v3028
        %v3030 = vld [vmem:[%s3] sm:$0x1]
        %v3032 = vperm.slane %v3030, 0
        %v3034 = vadd.f32 %v583, %v3032
        %v3035 = vadd.f32 %v585, %v3032
        %v3036 = vadd.f32 %v588, %v3032
        %v3037 = vadd.f32 %v590, %v3032
        %v3038 = vadd.f32 %v593, %v3032
        %v3039 = vadd.f32 %v595, %v3032
        %v3040 = vadd.f32 %v598, %v3032
        %v3041 = vadd.f32 %v600, %v3032
        %v3042 = vadd.f32 %v603, %v3032
        %v3043 = vadd.f32 %v605, %v3032
        %v3044 = vadd.f32 %v608, %v3032
        %v3045 = vadd.f32 %v610, %v3032
        %v3046 = vadd.f32 %v613, %v3032
        %v3047 = vadd.f32 %v615, %v3032
        %v3048 = vadd.f32 %v618, %v3032
        %v3049 = vadd.f32 %v620, %v3032
        %v3050 = vadd.f32 %v623, %v3032
        %v3051 = vadd.f32 %v625, %v3032
        %v3052 = vadd.f32 %v628, %v3032
        %v3053 = vadd.f32 %v630, %v3032
        %v3054 = vadd.f32 %v633, %v3032
        %v3055 = vadd.f32 %v635, %v3032
        %v3056 = vadd.f32 %v638, %v3032
        %v3057 = vadd.f32 %v640, %v3032
        %v3058 = vadd.f32 %v643, %v3032
        %v3059 = vadd.f32 %v645, %v3032
        %v3060 = vadd.f32 %v648, %v3032
        %v3061 = vadd.f32 %v650, %v3032
        %v3062 = vadd.f32 %v653, %v3032
        %v3063 = vadd.f32 %v655, %v3032
        %v3064 = vadd.f32 %v658, %v3032
        %v3065 = vadd.f32 %v660, %v3032
        %v3066 = vmul.f32 %v3034, 0.5
        %v3067 = vmul.f32 %v3035, 0.5
        %v3068 = vmul.f32 %v3036, 0.5
        %v3069 = vmul.f32 %v3037, 0.5
        %v3070 = vmul.f32 %v3038, 0.5
        %v3071 = vmul.f32 %v3039, 0.5
        %v3072 = vmul.f32 %v3040, 0.5
        %v3073 = vmul.f32 %v3041, 0.5
        %v3074 = vmul.f32 %v3042, 0.5
        %v3075 = vmul.f32 %v3043, 0.5
        %v3076 = vmul.f32 %v3044, 0.5
        %v3077 = vmul.f32 %v3045, 0.5
        %v3078 = vmul.f32 %v3046, 0.5
        %v3079 = vmul.f32 %v3047, 0.5
        %v3080 = vmul.f32 %v3048, 0.5
        %v3081 = vmul.f32 %v3049, 0.5
        %v3082 = vmul.f32 %v3050, 0.5
        %v3083 = vmul.f32 %v3051, 0.5
        %v3084 = vmul.f32 %v3052, 0.5
        %v3085 = vmul.f32 %v3053, 0.5
        %v3086 = vmul.f32 %v3054, 0.5
        %v3087 = vmul.f32 %v3055, 0.5
        %v3088 = vmul.f32 %v3056, 0.5
        %v3089 = vmul.f32 %v3057, 0.5
        %v3090 = vmul.f32 %v3058, 0.5
        %v3091 = vmul.f32 %v3059, 0.5
        %v3092 = vmul.f32 %v3060, 0.5
        %v3093 = vmul.f32 %v3061, 0.5
        %v3094 = vmul.f32 %v3062, 0.5
        %v3095 = vmul.f32 %v3063, 0.5
        %v3096 = vmul.f32 %v3064, 0.5
        %v3097 = vmul.f32 %v3065, 0.5
        %v3098 = vmul.f32 %v3034, 0.044715
        %v3099 = vmul.f32 %v3035, 0.044715
        %v3100 = vmul.f32 %v3036, 0.044715
        %v3101 = vmul.f32 %v3037, 0.044715
        %v3102 = vmul.f32 %v3038, 0.044715
        %v3103 = vmul.f32 %v3039, 0.044715
        %v3104 = vmul.f32 %v3040, 0.044715
        %v3105 = vmul.f32 %v3041, 0.044715
        %v3106 = vmul.f32 %v3042, 0.044715
        %v3107 = vmul.f32 %v3043, 0.044715
        %v3108 = vmul.f32 %v3044, 0.044715
        %v3109 = vmul.f32 %v3045, 0.044715
        %v3110 = vmul.f32 %v3046, 0.044715
        %v3111 = vmul.f32 %v3047, 0.044715
        %v3112 = vmul.f32 %v3048, 0.044715
        %v3113 = vmul.f32 %v3049, 0.044715
        %v3114 = vmul.f32 %v3050, 0.044715
        %v3115 = vmul.f32 %v3051, 0.044715
        %v3116 = vmul.f32 %v3052, 0.044715
        %v3117 = vmul.f32 %v3053, 0.044715
        %v3118 = vmul.f32 %v3054, 0.044715
        %v3119 = vmul.f32 %v3055, 0.044715
        %v3120 = vmul.f32 %v3056, 0.044715
        %v3121 = vmul.f32 %v3057, 0.044715
        %v3122 = vmul.f32 %v3058, 0.044715
        %v3123 = vmul.f32 %v3059, 0.044715
        %v3124 = vmul.f32 %v3060, 0.044715
        %v3125 = vmul.f32 %v3061, 0.044715
        %v3126 = vmul.f32 %v3062, 0.044715
        %v3127 = vmul.f32 %v3063, 0.044715
        %v3128 = vmul.f32 %v3064, 0.044715
        %v3129 = vmul.f32 %v3065, 0.044715
        %v3130 = vmul.f32 %v3098, %v3034
        %v3131 = vmul.f32 %v3099, %v3035
        %v3132 = vmul.f32 %v3100, %v3036
        %v3133 = vmul.f32 %v3101, %v3037
        %v3134 = vmul.f32 %v3102, %v3038
        %v3135 = vmul.f32 %v3103, %v3039
        %v3136 = vmul.f32 %v3104, %v3040
        %v3137 = vmul.f32 %v3105, %v3041
        %v3138 = vmul.f32 %v3106, %v3042
        %v3139 = vmul.f32 %v3107, %v3043
        %v3140 = vmul.f32 %v3108, %v3044
        %v3141 = vmul.f32 %v3109, %v3045
        %v3142 = vmul.f32 %v3110, %v3046
        %v3143 = vmul.f32 %v3111, %v3047
        %v3144 = vmul.f32 %v3112, %v3048
        %v3145 = vmul.f32 %v3113, %v3049
        %v3146 = vmul.f32 %v3114, %v3050
        %v3147 = vmul.f32 %v3115, %v3051
        %v3148 = vmul.f32 %v3116, %v3052
        %v3149 = vmul.f32 %v3117, %v3053
        %v3150 = vmul.f32 %v3118, %v3054
        %v3151 = vmul.f32 %v3119, %v3055
        %v3152 = vmul.f32 %v3120, %v3056
        %v3153 = vmul.f32 %v3121, %v3057
        %v3154 = vmul.f32 %v3122, %v3058
        %v3155 = vmul.f32 %v3123, %v3059
        %v3156 = vmul.f32 %v3124, %v3060
        %v3157 = vmul.f32 %v3125, %v3061
        %v3158 = vmul.f32 %v3126, %v3062
        %v3159 = vmul.f32 %v3127, %v3063
        %v3160 = vmul.f32 %v3128, %v3064
        %v3161 = vmul.f32 %v3129, %v3065
        %v3162 = vmul.f32 %v3130, %v3034
        %v3163 = vmul.f32 %v3131, %v3035
        %v3164 = vmul.f32 %v3132, %v3036
        %v3165 = vmul.f32 %v3133, %v3037
        %v3166 = vmul.f32 %v3134, %v3038
        %v3167 = vmul.f32 %v3135, %v3039
        %v3168 = vmul.f32 %v3136, %v3040
        %v3169 = vmul.f32 %v3137, %v3041
        %v3170 = vmul.f32 %v3138, %v3042
        %v3171 = vmul.f32 %v3139, %v3043
        %v3172 = vmul.f32 %v3140, %v3044
        %v3173 = vmul.f32 %v3141, %v3045
        %v3174 = vmul.f32 %v3142, %v3046
        %v3175 = vmul.f32 %v3143, %v3047
        %v3176 = vmul.f32 %v3144, %v3048
        %v3177 = vmul.f32 %v3145, %v3049
        %v3178 = vmul.f32 %v3146, %v3050
        %v3179 = vmul.f32 %v3147, %v3051
        %v3180 = vmul.f32 %v3148, %v3052
        %v3181 = vmul.f32 %v3149, %v3053
        %v3182 = vmul.f32 %v3150, %v3054
        %v3183 = vmul.f32 %v3151, %v3055
        %v3184 = vmul.f32 %v3152, %v3056
        %v3185 = vmul.f32 %v3153, %v3057
        %v3186 = vmul.f32 %v3154, %v3058
        %v3187 = vmul.f32 %v3155, %v3059
        %v3188 = vmul.f32 %v3156, %v3060
        %v3189 = vmul.f32 %v3157, %v3061
        %v3190 = vmul.f32 %v3158, %v3062
        %v3191 = vmul.f32 %v3159, %v3063
        %v3192 = vmul.f32 %v3160, %v3064
        %v3193 = vmul.f32 %v3161, %v3065
        %v3194 = vadd.f32 %v3034, %v3162
        %v3195 = vadd.f32 %v3035, %v3163
        %v3196 = vadd.f32 %v3036, %v3164
        %v3197 = vadd.f32 %v3037, %v3165
        %v3198 = vadd.f32 %v3038, %v3166
        %v3199 = vadd.f32 %v3039, %v3167
        %v3200 = vadd.f32 %v3040, %v3168
        %v3201 = vadd.f32 %v3041, %v3169
        %v3202 = vadd.f32 %v3042, %v3170
        %v3203 = vadd.f32 %v3043, %v3171
        %v3204 = vadd.f32 %v3044, %v3172
        %v3205 = vadd.f32 %v3045, %v3173
        %v3206 = vadd.f32 %v3046, %v3174
        %v3207 = vadd.f32 %v3047, %v3175
        %v3208 = vadd.f32 %v3048, %v3176
        %v3209 = vadd.f32 %v3049, %v3177
        %v3210 = vadd.f32 %v3050, %v3178
        %v3211 = vadd.f32 %v3051, %v3179
        %v3212 = vadd.f32 %v3052, %v3180
        %v3213 = vadd.f32 %v3053, %v3181
        %v3214 = vadd.f32 %v3054, %v3182
        %v3215 = vadd.f32 %v3055, %v3183
        %v3216 = vadd.f32 %v3056, %v3184
        %v3217 = vadd.f32 %v3057, %v3185
        %v3218 = vadd.f32 %v3058, %v3186
        %v3219 = vadd.f32 %v3059, %v3187
        %v3220 = vadd.f32 %v3060, %v3188
        %v3221 = vadd.f32 %v3061, %v3189
        %v3222 = vadd.f32 %v3062, %v3190
        %v3223 = vadd.f32 %v3063, %v3191
        %v3224 = vadd.f32 %v3064, %v3192
        %v3225 = vadd.f32 %v3065, %v3193
        %v3226 = vmul.f32 %v3194, 0.7978846
        %v3227 = vmul.f32 %v3195, 0.7978846
        %v3228 = vmul.f32 %v3196, 0.7978846
        %v3229 = vmul.f32 %v3197, 0.7978846
        %v3230 = vmul.f32 %v3198, 0.7978846
        %v3231 = vmul.f32 %v3199, 0.7978846
        %v3232 = vmul.f32 %v3200, 0.7978846
        %v3233 = vmul.f32 %v3201, 0.7978846
        %v3234 = vmul.f32 %v3202, 0.7978846
        %v3235 = vmul.f32 %v3203, 0.7978846
        %v3236 = vmul.f32 %v3204, 0.7978846
        %v3237 = vmul.f32 %v3205, 0.7978846
        %v3238 = vmul.f32 %v3206, 0.7978846
        %v3239 = vmul.f32 %v3207, 0.7978846
        %v3240 = vmul.f32 %v3208, 0.7978846
        %v3241 = vmul.f32 %v3209, 0.7978846
        %v3242 = vmul.f32 %v3210, 0.7978846
        %v3243 = vmul.f32 %v3211, 0.7978846
        %v3244 = vmul.f32 %v3212, 0.7978846
        %v3245 = vmul.f32 %v3213, 0.7978846
        %v3246 = vmul.f32 %v3214, 0.7978846
        %v3247 = vmul.f32 %v3215, 0.7978846
        %v3248 = vmul.f32 %v3216, 0.7978846
        %v3249 = vmul.f32 %v3217, 0.7978846
        %v3250 = vmul.f32 %v3218, 0.7978846
        %v3251 = vmul.f32 %v3219, 0.7978846
        %v3252 = vmul.f32 %v3220, 0.7978846
        %v3253 = vmul.f32 %v3221, 0.7978846
        %v3254 = vmul.f32 %v3222, 0.7978846
        %v3255 = vmul.f32 %v3223, 0.7978846
        %v3256 = vmul.f32 %v3224, 0.7978846
        %v3257 = vmul.f32 %v3225, 0.7978846
        %v3258 = vtanh.pop %v3226
        %v3259 = vtanh.pop %v3227
        %v3260 = vtanh.pop %v3228
        %v3261 = vtanh.pop %v3229
        %v3262 = vtanh.pop %v3230
        %v3263 = vtanh.pop %v3231
        %v3264 = vtanh.pop %v3232
        %v3265 = vtanh.pop %v3233
        %v3266 = vtanh.pop %v3234
        %v3267 = vtanh.pop %v3235
        %v3268 = vtanh.pop %v3236
        %v3269 = vtanh.pop %v3237
        %v3270 = vtanh.pop %v3238
        %v3271 = vtanh.pop %v3239
        %v3272 = vtanh.pop %v3240
        %v3273 = vtanh.pop %v3241
        %v3274 = vtanh.pop %v3242
        %v3275 = vtanh.pop %v3243
        %v3276 = vtanh.pop %v3244
        %v3277 = vtanh.pop %v3245
        %v3278 = vtanh.pop %v3246
        %v3279 = vtanh.pop %v3247
        %v3280 = vtanh.pop %v3248
        %v3281 = vtanh.pop %v3249
        %v3282 = vtanh.pop %v3250
        %v3283 = vtanh.pop %v3251
        %v3284 = vtanh.pop %v3252
        %v3285 = vtanh.pop %v3253
        %v3286 = vtanh.pop %v3254
        %v3287 = vtanh.pop %v3255
        %v3288 = vtanh.pop %v3256
        %v3289 = vtanh.pop %v3257
        %v3290 = vadd.f32 %v3258, 1.0
        %v3291 = vadd.f32 %v3259, 1.0
        %v3292 = vadd.f32 %v3260, 1.0
        %v3293 = vadd.f32 %v3261, 1.0
        %v3294 = vadd.f32 %v3262, 1.0
        %v3295 = vadd.f32 %v3263, 1.0
        %v3296 = vadd.f32 %v3264, 1.0
        %v3297 = vadd.f32 %v3265, 1.0
        %v3298 = vadd.f32 %v3266, 1.0
        %v3299 = vadd.f32 %v3267, 1.0
        %v3300 = vadd.f32 %v3268, 1.0
        %v3301 = vadd.f32 %v3269, 1.0
        %v3302 = vadd.f32 %v3270, 1.0
        %v3303 = vadd.f32 %v3271, 1.0
        %v3304 = vadd.f32 %v3272, 1.0
        %v3305 = vadd.f32 %v3273, 1.0
        %v3306 = vadd.f32 %v3274, 1.0
        %v3307 = vadd.f32 %v3275, 1.0
        %v3308 = vadd.f32 %v3276, 1.0
        %v3309 = vadd.f32 %v3277, 1.0
        %v3310 = vadd.f32 %v3278, 1.0
        %v3311 = vadd.f32 %v3279, 1.0
        %v3312 = vadd.f32 %v3280, 1.0
        %v3313 = vadd.f32 %v3281, 1.0
        %v3314 = vadd.f32 %v3282, 1.0
        %v3315 = vadd.f32 %v3283, 1.0
        %v3316 = vadd.f32 %v3284, 1.0
        %v3317 = vadd.f32 %v3285, 1.0
        %v3318 = vadd.f32 %v3286, 1.0
        %v3319 = vadd.f32 %v3287, 1.0
        %v3320 = vadd.f32 %v3288, 1.0
        %v3321 = vadd.f32 %v3289, 1.0
        %v3322 = vmul.f32 %v3066, %v3290
        %v3323 = vmul.f32 %v3067, %v3291
        %v3324 = vmul.f32 %v3068, %v3292
        %v3325 = vmul.f32 %v3069, %v3293
        %v3326 = vmul.f32 %v3070, %v3294
        %v3327 = vmul.f32 %v3071, %v3295
        %v3328 = vmul.f32 %v3072, %v3296
        %v3329 = vmul.f32 %v3073, %v3297
        %v3330 = vmul.f32 %v3074, %v3298
        %v3331 = vmul.f32 %v3075, %v3299
        %v3332 = vmul.f32 %v3076, %v3300
        %v3333 = vmul.f32 %v3077, %v3301
        %v3334 = vmul.f32 %v3078, %v3302
        %v3335 = vmul.f32 %v3079, %v3303
        %v3336 = vmul.f32 %v3080, %v3304
        %v3337 = vmul.f32 %v3081, %v3305
        %v3338 = vmul.f32 %v3082, %v3306
        %v3339 = vmul.f32 %v3083, %v3307
        %v3340 = vmul.f32 %v3084, %v3308
        %v3341 = vmul.f32 %v3085, %v3309
        %v3342 = vmul.f32 %v3086, %v3310
        %v3343 = vmul.f32 %v3087, %v3311
        %v3344 = vmul.f32 %v3088, %v3312
        %v3345 = vmul.f32 %v3089, %v3313
        %v3346 = vmul.f32 %v3090, %v3314
        %v3347 = vmul.f32 %v3091, %v3315
        %v3348 = vmul.f32 %v3092, %v3316
        %v3349 = vmul.f32 %v3093, %v3317
        %v3350 = vmul.f32 %v3094, %v3318
        %v3351 = vmul.f32 %v3095, %v3319
        %v3352 = vmul.f32 %v3096, %v3320
        %v3353 = vmul.f32 %v3097, %v3321
        %v3354 = vpack.c.bf16 %v3323, %v3322
        %v3355 = vpack.c.bf16 %v3325, %v3324
        %v3356 = vpack.c.bf16 %v3327, %v3326
        %v3357 = vpack.c.bf16 %v3329, %v3328
        %v3358 = vpack.c.bf16 %v3331, %v3330
        %v3359 = vpack.c.bf16 %v3333, %v3332
        %v3360 = vpack.c.bf16 %v3335, %v3334
        %v3361 = vpack.c.bf16 %v3337, %v3336
        %v3362 = vpack.c.bf16 %v3339, %v3338
        %v3363 = vpack.c.bf16 %v3341, %v3340
        %v3364 = vpack.c.bf16 %v3343, %v3342
        %v3365 = vpack.c.bf16 %v3345, %v3344
        %v3366 = vpack.c.bf16 %v3347, %v3346
        %v3367 = vpack.c.bf16 %v3349, %v3348
        %v3368 = vpack.c.bf16 %v3351, %v3350
        %v3369 = vpack.c.bf16 %v3353, %v3352
        %v3370 = vld [vmem:[%s4] sm:$0xf]
        %v3371 = vld [vmem:[%s4 + $0x4] sm:$0xf]
        %v3372 = vld [vmem:[%s4 + $0x8] sm:$0xf]
        %v3373 = vld [vmem:[%s4 + $0xc] sm:$0xf]
        %v3374 = vld [vmem:[%s4 + $0x10] sm:$0xf]
        %v3375 = vld [vmem:[%s4 + $0x14] sm:$0xf]
        %v3376 = vld [vmem:[%s4 + $0x18] sm:$0xf]
        %v3377 = vld [vmem:[%s4 + $0x1c] sm:$0xf]
        %v3378 = vld [vmem:[%s4 + $0x20] sm:$0xf]
        %v3379 = vld [vmem:[%s4 + $0x24] sm:$0xf]
        %v3380 = vld [vmem:[%s4 + $0x28] sm:$0xf]
        %v3381 = vld [vmem:[%s4 + $0x2c] sm:$0xf]
        %v3382 = vld [vmem:[%s4 + $0x30] sm:$0xf]
        %v3383 = vld [vmem:[%s4 + $0x34] sm:$0xf]
        %v3384 = vld [vmem:[%s4 + $0x38] sm:$0xf]
        %v3385 = vld [vmem:[%s4 + $0x3c] sm:$0xf]
        %v3386 = vld [vmem:[%s5] sm:$0x1]
        %v3388 = vperm.slane %v3386, 0
        %v3406 = vunpack.c.l.b16 %v3370
        %v3407 = vunpack.c.l.b16 %v3371
        %v3408 = vunpack.c.l.b16 %v3372
        %v3409 = vunpack.c.l.b16 %v3373
        %v3410 = vunpack.c.l.b16 %v3374
        %v3411 = vunpack.c.l.b16 %v3375
        %v3412 = vunpack.c.l.b16 %v3376
        %v3413 = vunpack.c.l.b16 %v3377
        %v3414 = vunpack.c.l.b16 %v3378
        %v3415 = vunpack.c.l.b16 %v3379
        %v3416 = vunpack.c.l.b16 %v3380
        %v3417 = vunpack.c.l.b16 %v3381
        %v3418 = vunpack.c.l.b16 %v3382
        %v3419 = vunpack.c.l.b16 %v3383
        %v3420 = vunpack.c.l.b16 %v3384
        %v3421 = vunpack.c.l.b16 %v3385
        %v3422 = vpack.c.b16 %v3407, %v3406
        %v3423 = vpack.c.b16 %v3409, %v3408
        %v3424 = vpack.c.b16 %v3411, %v3410
        %v3425 = vpack.c.b16 %v3413, %v3412
        %v3426 = vpack.c.b16 %v3415, %v3414
        %v3427 = vpack.c.b16 %v3417, %v3416
        %v3428 = vpack.c.b16 %v3419, %v3418
        %v3429 = vpack.c.b16 %v3421, %v3420
        %3438 = vmatpush.bf16.msra.mxu0 %v3429
        %3439 = vmatpush.bf16.msra.mxu0 %v3428
        %3440 = vmatpush.bf16.msra.mxu0 %v3427
        %3441 = vmatpush.bf16.msra.mxu0 %v3426
        %3442 = vmatpush.bf16.msra.mxu0 %v3425
        %3443 = vmatpush.bf16.msra.mxu0 %v3424
        %3444 = vmatpush.bf16.msra.mxu0 %v3423
        %3445 = vmatpush.bf16.msra.mxu0 %v3422
        %3446 = vmatmul.bf16.gmra.mxu0 %v3354
        %v3447 = vpop.f32.mrf.mxu0
        %v3448 = vadd.f32 %v3388, %v3447
        %v3449 = vpop.f32.mrf.mxu0
        %v3450 = vadd.f32 %v3388, %v3449
        %3451 = vmatmul.bf16.gmra.mxu0 %v3355
        %v3452 = vpop.f32.mrf.mxu0
        %v3453 = vadd.f32 %v3388, %v3452
        %v3454 = vpop.f32.mrf.mxu0
        %v3455 = vadd.f32 %v3388, %v3454
        %3456 = vmatmul.bf16.gmra.mxu0 %v3356
        %v3457 = vpop.f32.mrf.mxu0
        %v3458 = vadd.f32 %v3388, %v3457
        %v3459 = vpop.f32.mrf.mxu0
        %v3460 = vadd.f32 %v3388, %v3459
        %3461 = vmatmul.bf16.gmra.mxu0 %v3357
        %v3462 = vpop.f32.mrf.mxu0
        %v3463 = vadd.f32 %v3388, %v3462
        %v3464 = vpop.f32.mrf.mxu0
        %v3465 = vadd.f32 %v3388, %v3464
        %3466 = vmatmul.bf16.gmra.mxu0 %v3358
        %v3467 = vpop.f32.mrf.mxu0
        %v3468 = vadd.f32 %v3388, %v3467
        %v3469 = vpop.f32.mrf.mxu0
        %v3470 = vadd.f32 %v3388, %v3469
        %3471 = vmatmul.bf16.gmra.mxu0 %v3359
        %v3472 = vpop.f32.mrf.mxu0
        %v3473 = vadd.f32 %v3388, %v3472
        %v3474 = vpop.f32.mrf.mxu0
        %v3475 = vadd.f32 %v3388, %v3474
        %3476 = vmatmul.bf16.gmra.mxu0 %v3360
        %v3477 = vpop.f32.mrf.mxu0
        %v3478 = vadd.f32 %v3388, %v3477
        %v3479 = vpop.f32.mrf.mxu0
        %v3480 = vadd.f32 %v3388, %v3479
        %3481 = vmatmul.bf16.gmra.mxu0 %v3361
        %v3482 = vpop.f32.mrf.mxu0
        %v3483 = vadd.f32 %v3388, %v3482
        %v3484 = vpop.f32.mrf.mxu0
        %v3485 = vadd.f32 %v3388, %v3484
        %3486 = vmatmul.bf16.gmra.mxu0 %v3362
        %v3487 = vpop.f32.mrf.mxu0
        %v3488 = vadd.f32 %v3388, %v3487
        %v3489 = vpop.f32.mrf.mxu0
        %v3490 = vadd.f32 %v3388, %v3489
        %3491 = vmatmul.bf16.gmra.mxu0 %v3363
        %v3492 = vpop.f32.mrf.mxu0
        %v3493 = vadd.f32 %v3388, %v3492
        %v3494 = vpop.f32.mrf.mxu0
        %v3495 = vadd.f32 %v3388, %v3494
        %3496 = vmatmul.bf16.gmra.mxu0 %v3364
        %v3497 = vpop.f32.mrf.mxu0
        %v3498 = vadd.f32 %v3388, %v3497
        %v3499 = vpop.f32.mrf.mxu0
        %v3500 = vadd.f32 %v3388, %v3499
        %3501 = vmatmul.bf16.gmra.mxu0 %v3365
        %v3502 = vpop.f32.mrf.mxu0
        %v3503 = vadd.f32 %v3388, %v3502
        %v3504 = vpop.f32.mrf.mxu0
        %v3505 = vadd.f32 %v3388, %v3504
        %3506 = vmatmul.bf16.gmra.mxu0 %v3366
        %v3507 = vpop.f32.mrf.mxu0
        %v3508 = vadd.f32 %v3388, %v3507
        %v3509 = vpop.f32.mrf.mxu0
        %v3510 = vadd.f32 %v3388, %v3509
        %3511 = vmatmul.bf16.gmra.mxu0 %v3367
        %v3512 = vpop.f32.mrf.mxu0
        %v3513 = vadd.f32 %v3388, %v3512
        %v3514 = vpop.f32.mrf.mxu0
        %v3515 = vadd.f32 %v3388, %v3514
        %3516 = vmatmul.bf16.gmra.mxu0 %v3368
        %v3517 = vpop.f32.mrf.mxu0
        %v3518 = vadd.f32 %v3388, %v3517
        %v3519 = vpop.f32.mrf.mxu0
        %v3520 = vadd.f32 %v3388, %v3519
        %3521 = vmatmul.bf16.gmra.mxu0 %v3369
        %v3522 = vpop.f32.mrf.mxu0
        %v3523 = vadd.f32 %v3388, %v3522
        %v3524 = vpop.f32.mrf.mxu0
        %v3525 = vadd.f32 %v3388, %v3524
        %3526 = vdwg.mxu0
        %vm3527 = vcmask 523264
        %v3528 = vsel %vm3527, %v3448, -inf
        %3529 = vmax.xlane.f32.xlu0 %v3528
        %v3530 = vpop.xlane.xlu0 %3529
        %v3531 = vsel %vm3527, %v3450, -inf
        %3532 = vmax.xlane.f32.xlu0 %v3531
        %v3533 = vpop.xlane.xlu0 %3532
        %v3534 = vsel %vm3527, %v3453, -inf
        %3535 = vmax.xlane.f32.xlu0 %v3534
        %v3536 = vpop.xlane.xlu0 %3535
        %v3537 = vsel %vm3527, %v3455, -inf
        %3538 = vmax.xlane.f32.xlu0 %v3537
        %v3539 = vpop.xlane.xlu0 %3538
        %v3540 = vsel %vm3527, %v3458, -inf
        %3541 = vmax.xlane.f32.xlu0 %v3540
        %v3542 = vpop.xlane.xlu0 %3541
        %v3543 = vsel %vm3527, %v3460, -inf
        %3544 = vmax.xlane.f32.xlu0 %v3543
        %v3545 = vpop.xlane.xlu0 %3544
        %v3546 = vsel %vm3527, %v3463, -inf
        %3547 = vmax.xlane.f32.xlu0 %v3546
        %v3548 = vpop.xlane.xlu0 %3547
        %v3549 = vsel %vm3527, %v3465, -inf
        %3550 = vmax.xlane.f32.xlu0 %v3549
        %v3551 = vpop.xlane.xlu0 %3550
        %v3552 = vsel %vm3527, %v3468, -inf
        %3553 = vmax.xlane.f32.xlu0 %v3552
        %v3554 = vpop.xlane.xlu0 %3553
        %v3555 = vsel %vm3527, %v3470, -inf
        %3556 = vmax.xlane.f32.xlu0 %v3555
        %v3557 = vpop.xlane.xlu0 %3556
        %v3558 = vsel %vm3527, %v3473, -inf
        %3559 = vmax.xlane.f32.xlu0 %v3558
        %v3560 = vpop.xlane.xlu0 %3559
        %v3561 = vsel %vm3527, %v3475, -inf
        %3562 = vmax.xlane.f32.xlu0 %v3561
        %v3563 = vpop.xlane.xlu0 %3562
        %v3564 = vsel %vm3527, %v3478, -inf
        %3565 = vmax.xlane.f32.xlu0 %v3564
        %v3566 = vpop.xlane.xlu0 %3565
        %v3567 = vsel %vm3527, %v3480, -inf
        %3568 = vmax.xlane.f32.xlu0 %v3567
        %v3569 = vpop.xlane.xlu0 %3568
        %v3570 = vsel %vm3527, %v3483, -inf
        %3571 = vmax.xlane.f32.xlu0 %v3570
        %v3572 = vpop.xlane.xlu0 %3571
        %v3573 = vsel %vm3527, %v3485, -inf
        %3574 = vmax.xlane.f32.xlu0 %v3573
        %v3575 = vpop.xlane.xlu0 %3574
        %v3576 = vsel %vm3527, %v3488, -inf
        %3577 = vmax.xlane.f32.xlu0 %v3576
        %v3578 = vpop.xlane.xlu0 %3577
        %v3579 = vsel %vm3527, %v3490, -inf
        %3580 = vmax.xlane.f32.xlu0 %v3579
        %v3581 = vpop.xlane.xlu0 %3580
        %v3582 = vsel %vm3527, %v3493, -inf
        %3583 = vmax.xlane.f32.xlu0 %v3582
        %v3584 = vpop.xlane.xlu0 %3583
        %v3585 = vsel %vm3527, %v3495, -inf
        %3586 = vmax.xlane.f32.xlu0 %v3585
        %v3587 = vpop.xlane.xlu0 %3586
        %v3588 = vsel %vm3527, %v3498, -inf
        %3589 = vmax.xlane.f32.xlu0 %v3588
        %v3590 = vpop.xlane.xlu0 %3589
        %v3591 = vsel %vm3527, %v3500, -inf
        %3592 = vmax.xlane.f32.xlu0 %v3591
        %v3593 = vpop.xlane.xlu0 %3592
        %v3594 = vsel %vm3527, %v3503, -inf
        %3595 = vmax.xlane.f32.xlu0 %v3594
        %v3596 = vpop.xlane.xlu0 %3595
        %v3597 = vsel %vm3527, %v3505, -inf
        %3598 = vmax.xlane.f32.xlu0 %v3597
        %v3599 = vpop.xlane.xlu0 %3598
        %v3600 = vsel %vm3527, %v3508, -inf
        %3601 = vmax.xlane.f32.xlu0 %v3600
        %v3602 = vpop.xlane.xlu0 %3601
        %v3603 = vsel %vm3527, %v3510, -inf
        %3604 = vmax.xlane.f32.xlu0 %v3603
        %v3605 = vpop.xlane.xlu0 %3604
        %v3606 = vsel %vm3527, %v3513, -inf
        %3607 = vmax.xlane.f32.xlu0 %v3606
        %v3608 = vpop.xlane.xlu0 %3607
        %v3609 = vsel %vm3527, %v3515, -inf
        %3610 = vmax.xlane.f32.xlu0 %v3609
        %v3611 = vpop.xlane.xlu0 %3610
        %v3612 = vsel %vm3527, %v3518, -inf
        %3613 = vmax.xlane.f32.xlu0 %v3612
        %v3614 = vpop.xlane.xlu0 %3613
        %v3615 = vsel %vm3527, %v3520, -inf
        %3616 = vmax.xlane.f32.xlu0 %v3615
        %v3617 = vpop.xlane.xlu0 %3616
        %v3618 = vsel %vm3527, %v3523, -inf
        %3619 = vmax.xlane.f32.xlu0 %v3618
        %v3620 = vpop.xlane.xlu0 %3619
        %v3621 = vsel %vm3527, %v3525, -inf
        %3622 = vmax.xlane.f32.xlu0 %v3621
        %v3623 = vpop.xlane.xlu0 %3622
        %v3624 = vsub.f32 %v3448, %v3530
        %v3625 = vsub.f32 %v3450, %v3533
        %v3626 = vsub.f32 %v3453, %v3536
        %v3627 = vsub.f32 %v3455, %v3539
        %v3628 = vsub.f32 %v3458, %v3542
        %v3629 = vsub.f32 %v3460, %v3545
        %v3630 = vsub.f32 %v3463, %v3548
        %v3631 = vsub.f32 %v3465, %v3551
        %v3632 = vsub.f32 %v3468, %v3554
        %v3633 = vsub.f32 %v3470, %v3557
        %v3634 = vsub.f32 %v3473, %v3560
        %v3635 = vsub.f32 %v3475, %v3563
        %v3636 = vsub.f32 %v3478, %v3566
        %v3637 = vsub.f32 %v3480, %v3569
        %v3638 = vsub.f32 %v3483, %v3572
        %v3639 = vsub.f32 %v3485, %v3575
        %v3640 = vsub.f32 %v3488, %v3578
        %v3641 = vsub.f32 %v3490, %v3581
        %v3642 = vsub.f32 %v3493, %v3584
        %v3643 = vsub.f32 %v3495, %v3587
        %v3644 = vsub.f32 %v3498, %v3590
        %v3645 = vsub.f32 %v3500, %v3593
        %v3646 = vsub.f32 %v3503, %v3596
        %v3647 = vsub.f32 %v3505, %v3599
        %v3648 = vsub.f32 %v3508, %v3602
        %v3649 = vsub.f32 %v3510, %v3605
        %v3650 = vsub.f32 %v3513, %v3608
        %v3651 = vsub.f32 %v3515, %v3611
        %v3652 = vsub.f32 %v3518, %v3614
        %v3653 = vsub.f32 %v3520, %v3617
        %v3654 = vsub.f32 %v3523, %v3620
        %v3655 = vsub.f32 %v3525, %v3623
        %v3656 = vmul.f32 %v3624, 1.442695
        %v3657 = vpow.pop %v3656
        %v3658 = vmul.f32 %v3625, 1.442695
        %v3659 = vpow.pop %v3658
        %v3660 = vmul.f32 %v3626, 1.442695
        %v3661 = vpow.pop %v3660
        %v3662 = vmul.f32 %v3627, 1.442695
        %v3663 = vpow.pop %v3662
        %v3664 = vmul.f32 %v3628, 1.442695
        %v3665 = vpow.pop %v3664
        %v3666 = vmul.f32 %v3629, 1.442695
        %v3667 = vpow.pop %v3666
        %v3668 = vmul.f32 %v3630, 1.442695
        %v3669 = vpow.pop %v3668
        %v3670 = vmul.f32 %v3631, 1.442695
        %v3671 = vpow.pop %v3670
        %v3672 = vmul.f32 %v3632, 1.442695
        %v3673 = vpow.pop %v3672
        %v3674 = vmul.f32 %v3633, 1.442695
        %v3675 = vpow.pop %v3674
        %v3676 = vmul.f32 %v3634, 1.442695
        %v3677 = vpow.pop %v3676
        %v3678 = vmul.f32 %v3635, 1.442695
        %v3679 = vpow.pop %v3678
        %v3680 = vmul.f32 %v3636, 1.442695
        %v3681 = vpow.pop %v3680
        %v3682 = vmul.f32 %v3637, 1.442695
        %v3683 = vpow.pop %v3682
        %v3684 = vmul.f32 %v3638, 1.442695
        %v3685 = vpow.pop %v3684
        %v3686 = vmul.f32 %v3639, 1.442695
        %v3687 = vpow.pop %v3686
        %v3688 = vmul.f32 %v3640, 1.442695
        %v3689 = vpow.pop %v3688
        %v3690 = vmul.f32 %v3641, 1.442695
        %v3691 = vpow.pop %v3690
        %v3692 = vmul.f32 %v3642, 1.442695
        %v3693 = vpow.pop %v3692
        %v3694 = vmul.f32 %v3643, 1.442695
        %v3695 = vpow.pop %v3694
        %v3696 = vmul.f32 %v3644, 1.442695
        %v3697 = vpow.pop %v3696
        %v3698 = vmul.f32 %v3645, 1.442695
        %v3699 = vpow.pop %v3698
        %v3700 = vmul.f32 %v3646, 1.442695
        %v3701 = vpow.pop %v3700
        %v3702 = vmul.f32 %v3647, 1.442695
        %v3703 = vpow.pop %v3702
        %v3704 = vmul.f32 %v3648, 1.442695
        %v3705 = vpow.pop %v3704
        %v3706 = vmul.f32 %v3649, 1.442695
        %v3707 = vpow.pop %v3706
        %v3708 = vmul.f32 %v3650, 1.442695
        %v3709 = vpow.pop %v3708
        %v3710 = vmul.f32 %v3651, 1.442695
        %v3711 = vpow.pop %v3710
        %v3712 = vmul.f32 %v3652, 1.442695
        %v3713 = vpow.pop %v3712
        %v3714 = vmul.f32 %v3653, 1.442695
        %v3715 = vpow.pop %v3714
        %v3716 = vmul.f32 %v3654, 1.442695
        %v3717 = vpow.pop %v3716
        %v3718 = vmul.f32 %v3655, 1.442695
        %v3719 = vpow.pop %v3718
        %v3720 = vld [vmem:[%s6] sm:$0xf]
        %v3722 = vsel %vm789, %v2564, 0
        %v3725 = vsel %vm789, %v2579, 0
        %v3728 = vsel %vm789, %v2594, 0
        %v3731 = vsel %vm789, %v2609, 0
        %v3734 = vsel %vm789, %v2624, 0
        %v3737 = vsel %vm789, %v2639, 0
        %v3740 = vsel %vm789, %v2654, 0
        %v3743 = vsel %vm789, %v2669, 0
        %v3746 = vsel %vm789, %v2684, 0
        %v3749 = vsel %vm789, %v2699, 0
        %v3752 = vsel %vm789, %v2714, 0
        %v3755 = vsel %vm789, %v2729, 0
        %v3758 = vsel %vm789, %v2744, 0
        %v3761 = vsel %vm789, %v2759, 0
        %v3764 = vsel %vm789, %v2774, 0
        %v3767 = vsel %vm789, %v2789, 0
        %v3770 = vsel %vm789, %v2804, 0
        %v3773 = vsel %vm789, %v2819, 0
        %v3776 = vsel %vm789, %v2834, 0
        %v3779 = vsel %vm789, %v2849, 0
        %v3782 = vsel %vm789, %v2864, 0
        %v3785 = vsel %vm789, %v2879, 0
        %v3788 = vsel %vm789, %v2894, 0
        %v3791 = vsel %vm789, %v2909, 0
        %v3794 = vsel %vm789, %v2924, 0
        %v3797 = vsel %vm789, %v2939, 0
        %v3800 = vsel %vm789, %v2954, 0
        %v3803 = vsel %vm789, %v2969, 0
        %v3806 = vsel %vm789, %v2984, 0
        %v3809 = vsel %vm789, %v2999, 0
        %v3812 = vsel %vm789, %v3014, 0
        %v3815 = vsel %vm789, %v3029, 0
        %vm3817 = vcmask 1043456
        %v3819 = vsel %vm3817, %v3720, 0
        %3821 = vmatpush.msra.mxu0 0.0
        %3822 = vmatpush.msra.mxu0 0.0
        %3823 = vmatpush.msra.mxu0 0.0
        %3824 = vmatpush.msra.mxu0 0.0
        %3825 = vmatpush.msra.mxu0 0.0
        %3826 = vmatpush.msra.mxu0 0.0
        %3827 = vmatpush.msra.mxu0 0.0
        %3828 = vmatpush.msra.mxu0 0.0
        %3829 = vmatpush.msra.mxu0 0.0
        %3830 = vmatpush.msra.mxu0 0.0
        %3831 = vmatpush.msra.mxu0 0.0
        %3832 = vmatpush.msra.mxu0 0.0
        %3833 = vmatpush.msra.mxu0 0.0
        %3834 = vmatpush.msra.mxu0 0.0
        %3835 = vmatpush.msra.mxu0 0.0
        %3836 = vmatpush.msra.mxu0 %v3819
        %3837 = vmatmul.f32.gmra.mxu0 %v3722
        %v3838 = vpop.f32.mrf.mxu0
        %v3839 = vadd.f32 0.0, %v3838
        %3840 = vmatmul.f32.gmra.mxu0 %v3725
        %v3841 = vpop.f32.mrf.mxu0
        %v3842 = vadd.f32 0.0, %v3841
        %3843 = vmatmul.f32.gmra.mxu0 %v3728
        %v3844 = vpop.f32.mrf.mxu0
        %v3845 = vadd.f32 0.0, %v3844
        %3846 = vmatmul.f32.gmra.mxu0 %v3731
        %v3847 = vpop.f32.mrf.mxu0
        %v3848 = vadd.f32 0.0, %v3847
        %3849 = vmatmul.f32.gmra.mxu0 %v3734
        %v3850 = vpop.f32.mrf.mxu0
        %v3851 = vadd.f32 0.0, %v3850
        %3852 = vmatmul.f32.gmra.mxu0 %v3737
        %v3853 = vpop.f32.mrf.mxu0
        %v3854 = vadd.f32 0.0, %v3853
        %3855 = vmatmul.f32.gmra.mxu0 %v3740
        %v3856 = vpop.f32.mrf.mxu0
        %v3857 = vadd.f32 0.0, %v3856
        %3858 = vmatmul.f32.gmra.mxu0 %v3743
        %v3859 = vpop.f32.mrf.mxu0
        %v3860 = vadd.f32 0.0, %v3859
        %3861 = vmatmul.f32.gmra.mxu0 %v3746
        %v3862 = vpop.f32.mrf.mxu0
        %v3863 = vadd.f32 0.0, %v3862
        %3864 = vmatmul.f32.gmra.mxu0 %v3749
        %v3865 = vpop.f32.mrf.mxu0
        %v3866 = vadd.f32 0.0, %v3865
        %3867 = vmatmul.f32.gmra.mxu0 %v3752
        %v3868 = vpop.f32.mrf.mxu0
        %v3869 = vadd.f32 0.0, %v3868
        %3870 = vmatmul.f32.gmra.mxu0 %v3755
        %v3871 = vpop.f32.mrf.mxu0
        %v3872 = vadd.f32 0.0, %v3871
        %3873 = vmatmul.f32.gmra.mxu0 %v3758
        %v3874 = vpop.f32.mrf.mxu0
        %v3875 = vadd.f32 0.0, %v3874
        %3876 = vmatmul.f32.gmra.mxu0 %v3761
        %v3877 = vpop.f32.mrf.mxu0
        %v3878 = vadd.f32 0.0, %v3877
        %3879 = vmatmul.f32.gmra.mxu0 %v3764
        %v3880 = vpop.f32.mrf.mxu0
        %v3881 = vadd.f32 0.0, %v3880
        %3882 = vmatmul.f32.gmra.mxu0 %v3767
        %v3883 = vpop.f32.mrf.mxu0
        %v3884 = vadd.f32 0.0, %v3883
        %3885 = vmatmul.f32.gmra.mxu0 %v3770
        %v3886 = vpop.f32.mrf.mxu0
        %v3887 = vadd.f32 0.0, %v3886
        %3888 = vmatmul.f32.gmra.mxu0 %v3773
        %v3889 = vpop.f32.mrf.mxu0
        %v3890 = vadd.f32 0.0, %v3889
        %3891 = vmatmul.f32.gmra.mxu0 %v3776
        %v3892 = vpop.f32.mrf.mxu0
        %v3893 = vadd.f32 0.0, %v3892
        %3894 = vmatmul.f32.gmra.mxu0 %v3779
        %v3895 = vpop.f32.mrf.mxu0
        %v3896 = vadd.f32 0.0, %v3895
        %3897 = vmatmul.f32.gmra.mxu0 %v3782
        %v3898 = vpop.f32.mrf.mxu0
        %v3899 = vadd.f32 0.0, %v3898
        %3900 = vmatmul.f32.gmra.mxu0 %v3785
        %v3901 = vpop.f32.mrf.mxu0
        %v3902 = vadd.f32 0.0, %v3901
        %3903 = vmatmul.f32.gmra.mxu0 %v3788
        %v3904 = vpop.f32.mrf.mxu0
        %v3905 = vadd.f32 0.0, %v3904
        %3906 = vmatmul.f32.gmra.mxu0 %v3791
        %v3907 = vpop.f32.mrf.mxu0
        %v3908 = vadd.f32 0.0, %v3907
        %3909 = vmatmul.f32.gmra.mxu0 %v3794
        %v3910 = vpop.f32.mrf.mxu0
        %v3911 = vadd.f32 0.0, %v3910
        %3912 = vmatmul.f32.gmra.mxu0 %v3797
        %v3913 = vpop.f32.mrf.mxu0
        %v3914 = vadd.f32 0.0, %v3913
        %3915 = vmatmul.f32.gmra.mxu0 %v3800
        %v3916 = vpop.f32.mrf.mxu0
        %v3917 = vadd.f32 0.0, %v3916
        %3918 = vmatmul.f32.gmra.mxu0 %v3803
        %v3919 = vpop.f32.mrf.mxu0
        %v3920 = vadd.f32 0.0, %v3919
        %3921 = vmatmul.f32.gmra.mxu0 %v3806
        %v3922 = vpop.f32.mrf.mxu0
        %v3923 = vadd.f32 0.0, %v3922
        %3924 = vmatmul.f32.gmra.mxu0 %v3809
        %v3925 = vpop.f32.mrf.mxu0
        %v3926 = vadd.f32 0.0, %v3925
        %3927 = vmatmul.f32.gmra.mxu0 %v3812
        %v3928 = vpop.f32.mrf.mxu0
        %v3929 = vadd.f32 0.0, %v3928
        %3930 = vmatmul.f32.gmra.mxu0 %v3815
        %v3931 = vpop.f32.mrf.mxu0
        %v3932 = vadd.f32 0.0, %v3931
        %3933 = vdwg.mxu0
        %v3934 = vmul.f32 %v3657, %v3839
        %v3935 = vmul.f32 %v3659, %v3842
        %v3936 = vmul.f32 %v3661, %v3845
        %v3937 = vmul.f32 %v3663, %v3848
        %v3938 = vmul.f32 %v3665, %v3851
        %v3939 = vmul.f32 %v3667, %v3854
        %v3940 = vmul.f32 %v3669, %v3857
        %v3941 = vmul.f32 %v3671, %v3860
        %v3942 = vmul.f32 %v3673, %v3863
        %v3943 = vmul.f32 %v3675, %v3866
        %v3944 = vmul.f32 %v3677, %v3869
        %v3945 = vmul.f32 %v3679, %v3872
        %v3946 = vmul.f32 %v3681, %v3875
        %v3947 = vmul.f32 %v3683, %v3878
        %v3948 = vmul.f32 %v3685, %v3881
        %v3949 = vmul.f32 %v3687, %v3884
        %v3950 = vmul.f32 %v3689, %v3887
        %v3951 = vmul.f32 %v3691, %v3890
        %v3952 = vmul.f32 %v3693, %v3893
        %v3953 = vmul.f32 %v3695, %v3896
        %v3954 = vmul.f32 %v3697, %v3899
        %v3955 = vmul.f32 %v3699, %v3902
        %v3956 = vmul.f32 %v3701, %v3905
        %v3957 = vmul.f32 %v3703, %v3908
        %v3958 = vmul.f32 %v3705, %v3911
        %v3959 = vmul.f32 %v3707, %v3914
        %v3960 = vmul.f32 %v3709, %v3917
        %v3961 = vmul.f32 %v3711, %v3920
        %v3962 = vmul.f32 %v3713, %v3923
        %v3963 = vmul.f32 %v3715, %v3926
        %v3964 = vmul.f32 %v3717, %v3929
        %v3965 = vmul.f32 %v3719, %v3932
        %v3966 = vld [vmem:[%s7] sm:$0xff]
        %v3967 = vld [vmem:[%s7 + $0x8] sm:$0xff]
        %v3968 = vld [vmem:[%s7 + $0x10] sm:$0xff]
        %v3969 = vld [vmem:[%s7 + $0x18] sm:$0xff]
        %v3970 = vld [vmem:[%s7 + $0x20] sm:$0xff]
        %v3971 = vld [vmem:[%s7 + $0x28] sm:$0xff]
        %v3972 = vld [vmem:[%s7 + $0x30] sm:$0xff]
        %v3973 = vld [vmem:[%s7 + $0x38] sm:$0xff]
        %v3975 = vsel %vm3527, %v3934, 0
        %v3978 = vsel %vm3527, %v3935, 0
        %v3981 = vsel %vm3527, %v3936, 0
        %v3984 = vsel %vm3527, %v3937, 0
        %v3987 = vsel %vm3527, %v3938, 0
        %v3990 = vsel %vm3527, %v3939, 0
        %v3993 = vsel %vm3527, %v3940, 0
        %v3996 = vsel %vm3527, %v3941, 0
        %v3999 = vsel %vm3527, %v3942, 0
        %v4002 = vsel %vm3527, %v3943, 0
        %v4005 = vsel %vm3527, %v3944, 0
        %v4008 = vsel %vm3527, %v3945, 0
        %v4011 = vsel %vm3527, %v3946, 0
        %v4014 = vsel %vm3527, %v3947, 0
        %v4017 = vsel %vm3527, %v3948, 0
        %v4020 = vsel %vm3527, %v3949, 0
        %v4023 = vsel %vm3527, %v3950, 0
        %v4026 = vsel %vm3527, %v3951, 0
        %v4029 = vsel %vm3527, %v3952, 0
        %v4032 = vsel %vm3527, %v3953, 0
        %v4035 = vsel %vm3527, %v3954, 0
        %v4038 = vsel %vm3527, %v3955, 0
        %v4041 = vsel %vm3527, %v3956, 0
        %v4044 = vsel %vm3527, %v3957, 0
        %v4047 = vsel %vm3527, %v3958, 0
        %v4050 = vsel %vm3527, %v3959, 0
        %v4053 = vsel %vm3527, %v3960, 0
        %v4056 = vsel %vm3527, %v3961, 0
        %v4059 = vsel %vm3527, %v3962, 0
        %v4062 = vsel %vm3527, %v3963, 0
        %v4065 = vsel %vm3527, %v3964, 0
        %v4068 = vsel %vm3527, %v3965, 0
        %4070 = vmatpush.msra.mxu0 0.0
        %4071 = vmatpush.msra.mxu0 0.0
        %4072 = vmatpush.msra.mxu0 0.0
        %4073 = vmatpush.msra.mxu0 0.0
        %4074 = vmatpush.msra.mxu0 0.0
        %4075 = vmatpush.msra.mxu0 0.0
        %4076 = vmatpush.msra.mxu0 0.0
        %4077 = vmatpush.msra.mxu0 0.0
        %4078 = vmatpush.msra.mxu0 %v3973
        %4079 = vmatpush.msra.mxu0 %v3972
        %4080 = vmatpush.msra.mxu0 %v3971
        %4081 = vmatpush.msra.mxu0 %v3970
        %4082 = vmatpush.msra.mxu0 %v3969
        %4083 = vmatpush.msra.mxu0 %v3968
        %4084 = vmatpush.msra.mxu0 %v3967
        %4085 = vmatpush.msra.mxu0 %v3966
        %4086 = vmatmul.f32.gmra.mxu0 %v3975
        %v4087 = vpop.f32.mrf.mxu0
        %v4088 = vadd.f32 0.0, %v4087
        %4089 = vmatmul.f32.gmra.mxu0 %v3978
        %v4090 = vpop.f32.mrf.mxu0
        %v4091 = vadd.f32 0.0, %v4090
        %4092 = vmatmul.f32.gmra.mxu0 %v3981
        %v4093 = vpop.f32.mrf.mxu0
        %v4094 = vadd.f32 0.0, %v4093
        %4095 = vmatmul.f32.gmra.mxu0 %v3984
        %v4096 = vpop.f32.mrf.mxu0
        %v4097 = vadd.f32 0.0, %v4096
        %4098 = vmatmul.f32.gmra.mxu0 %v3987
        %v4099 = vpop.f32.mrf.mxu0
        %v4100 = vadd.f32 0.0, %v4099
        %4101 = vmatmul.f32.gmra.mxu0 %v3990
        %v4102 = vpop.f32.mrf.mxu0
        %v4103 = vadd.f32 0.0, %v4102
        %4104 = vmatmul.f32.gmra.mxu0 %v3993
        %v4105 = vpop.f32.mrf.mxu0
        %v4106 = vadd.f32 0.0, %v4105
        %4107 = vmatmul.f32.gmra.mxu0 %v3996
        %v4108 = vpop.f32.mrf.mxu0
        %v4109 = vadd.f32 0.0, %v4108
        %4110 = vmatmul.f32.gmra.mxu0 %v3999
        %v4111 = vpop.f32.mrf.mxu0
        %v4112 = vadd.f32 0.0, %v4111
        %4113 = vmatmul.f32.gmra.mxu0 %v4002
        %v4114 = vpop.f32.mrf.mxu0
        %v4115 = vadd.f32 0.0, %v4114
        %4116 = vmatmul.f32.gmra.mxu0 %v4005
        %v4117 = vpop.f32.mrf.mxu0
        %v4118 = vadd.f32 0.0, %v4117
        %4119 = vmatmul.f32.gmra.mxu0 %v4008
        %v4120 = vpop.f32.mrf.mxu0
        %v4121 = vadd.f32 0.0, %v4120
        %4122 = vmatmul.f32.gmra.mxu0 %v4011
        %v4123 = vpop.f32.mrf.mxu0
        %v4124 = vadd.f32 0.0, %v4123
        %4125 = vmatmul.f32.gmra.mxu0 %v4014
        %v4126 = vpop.f32.mrf.mxu0
        %v4127 = vadd.f32 0.0, %v4126
        %4128 = vmatmul.f32.gmra.mxu0 %v4017
        %v4129 = vpop.f32.mrf.mxu0
        %v4130 = vadd.f32 0.0, %v4129
        %4131 = vmatmul.f32.gmra.mxu0 %v4020
        %v4132 = vpop.f32.mrf.mxu0
        %v4133 = vadd.f32 0.0, %v4132
        %4134 = vmatmul.f32.gmra.mxu0 %v4023
        %v4135 = vpop.f32.mrf.mxu0
        %v4136 = vadd.f32 0.0, %v4135
        %4137 = vmatmul.f32.gmra.mxu0 %v4026
        %v4138 = vpop.f32.mrf.mxu0
        %v4139 = vadd.f32 0.0, %v4138
        %4140 = vmatmul.f32.gmra.mxu0 %v4029
        %v4141 = vpop.f32.mrf.mxu0
        %v4142 = vadd.f32 0.0, %v4141
        %4143 = vmatmul.f32.gmra.mxu0 %v4032
        %v4144 = vpop.f32.mrf.mxu0
        %v4145 = vadd.f32 0.0, %v4144
        %4146 = vmatmul.f32.gmra.mxu0 %v4035
        %v4147 = vpop.f32.mrf.mxu0
        %v4148 = vadd.f32 0.0, %v4147
        %4149 = vmatmul.f32.gmra.mxu0 %v4038
        %v4150 = vpop.f32.mrf.mxu0
        %v4151 = vadd.f32 0.0, %v4150
        %4152 = vmatmul.f32.gmra.mxu0 %v4041
        %v4153 = vpop.f32.mrf.mxu0
        %v4154 = vadd.f32 0.0, %v4153
        %4155 = vmatmul.f32.gmra.mxu0 %v4044
        %v4156 = vpop.f32.mrf.mxu0
        %v4157 = vadd.f32 0.0, %v4156
        %4158 = vmatmul.f32.gmra.mxu0 %v4047
        %v4159 = vpop.f32.mrf.mxu0
        %v4160 = vadd.f32 0.0, %v4159
        %4161 = vmatmul.f32.gmra.mxu0 %v4050
        %v4162 = vpop.f32.mrf.mxu0
        %v4163 = vadd.f32 0.0, %v4162
        %4164 = vmatmul.f32.gmra.mxu0 %v4053
        %v4165 = vpop.f32.mrf.mxu0
        %v4166 = vadd.f32 0.0, %v4165
        %4167 = vmatmul.f32.gmra.mxu0 %v4056
        %v4168 = vpop.f32.mrf.mxu0
        %v4169 = vadd.f32 0.0, %v4168
        %4170 = vmatmul.f32.gmra.mxu0 %v4059
        %v4171 = vpop.f32.mrf.mxu0
        %v4172 = vadd.f32 0.0, %v4171
        %4173 = vmatmul.f32.gmra.mxu0 %v4062
        %v4174 = vpop.f32.mrf.mxu0
        %v4175 = vadd.f32 0.0, %v4174
        %4176 = vmatmul.f32.gmra.mxu0 %v4065
        %v4177 = vpop.f32.mrf.mxu0
        %v4178 = vadd.f32 0.0, %v4177
        %4179 = vmatmul.f32.gmra.mxu0 %v4068
        %v4180 = vpop.f32.mrf.mxu0
        %v4181 = vadd.f32 0.0, %v4180
        %4182 = vdwg.mxu0
        %vm4183 = vcmp.eq.f32.partialorder %v4088, 0.0
        %vm4184 = vcmp.eq.f32.partialorder %v4091, 0.0
        %vm4185 = vcmp.eq.f32.partialorder %v4094, 0.0
        %vm4186 = vcmp.eq.f32.partialorder %v4097, 0.0
        %vm4187 = vcmp.eq.f32.partialorder %v4100, 0.0
        %vm4188 = vcmp.eq.f32.partialorder %v4103, 0.0
        %vm4189 = vcmp.eq.f32.partialorder %v4106, 0.0
        %vm4190 = vcmp.eq.f32.partialorder %v4109, 0.0
        %vm4191 = vcmp.eq.f32.partialorder %v4112, 0.0
        %vm4192 = vcmp.eq.f32.partialorder %v4115, 0.0
        %vm4193 = vcmp.eq.f32.partialorder %v4118, 0.0
        %vm4194 = vcmp.eq.f32.partialorder %v4121, 0.0
        %vm4195 = vcmp.eq.f32.partialorder %v4124, 0.0
        %vm4196 = vcmp.eq.f32.partialorder %v4127, 0.0
        %vm4197 = vcmp.eq.f32.partialorder %v4130, 0.0
        %vm4198 = vcmp.eq.f32.partialorder %v4133, 0.0
        %vm4199 = vcmp.eq.f32.partialorder %v4136, 0.0
        %vm4200 = vcmp.eq.f32.partialorder %v4139, 0.0
        %vm4201 = vcmp.eq.f32.partialorder %v4142, 0.0
        %vm4202 = vcmp.eq.f32.partialorder %v4145, 0.0
        %vm4203 = vcmp.eq.f32.partialorder %v4148, 0.0
        %vm4204 = vcmp.eq.f32.partialorder %v4151, 0.0
        %vm4205 = vcmp.eq.f32.partialorder %v4154, 0.0
        %vm4206 = vcmp.eq.f32.partialorder %v4157, 0.0
        %vm4207 = vcmp.eq.f32.partialorder %v4160, 0.0
        %vm4208 = vcmp.eq.f32.partialorder %v4163, 0.0
        %vm4209 = vcmp.eq.f32.partialorder %v4166, 0.0
        %vm4210 = vcmp.eq.f32.partialorder %v4169, 0.0
        %vm4211 = vcmp.eq.f32.partialorder %v4172, 0.0
        %vm4212 = vcmp.eq.f32.partialorder %v4175, 0.0
        %vm4213 = vcmp.eq.f32.partialorder %v4178, 0.0
        %vm4214 = vcmp.eq.f32.partialorder %v4181, 0.0
        %v4215 = vsel %vm4183, 2.220446e-16, %v4088
        %v4216 = vsel %vm4184, 2.220446e-16, %v4091
        %v4217 = vsel %vm4185, 2.220446e-16, %v4094
        %v4218 = vsel %vm4186, 2.220446e-16, %v4097
        %v4219 = vsel %vm4187, 2.220446e-16, %v4100
        %v4220 = vsel %vm4188, 2.220446e-16, %v4103
        %v4221 = vsel %vm4189, 2.220446e-16, %v4106
        %v4222 = vsel %vm4190, 2.220446e-16, %v4109
        %v4223 = vsel %vm4191, 2.220446e-16, %v4112
        %v4224 = vsel %vm4192, 2.220446e-16, %v4115
        %v4225 = vsel %vm4193, 2.220446e-16, %v4118
        %v4226 = vsel %vm4194, 2.220446e-16, %v4121
        %v4227 = vsel %vm4195, 2.220446e-16, %v4124
        %v4228 = vsel %vm4196, 2.220446e-16, %v4127
        %v4229 = vsel %vm4197, 2.220446e-16, %v4130
        %v4230 = vsel %vm4198, 2.220446e-16, %v4133
        %v4231 = vsel %vm4199, 2.220446e-16, %v4136
        %v4232 = vsel %vm4200, 2.220446e-16, %v4139
        %v4233 = vsel %vm4201, 2.220446e-16, %v4142
        %v4234 = vsel %vm4202, 2.220446e-16, %v4145
        %v4235 = vsel %vm4203, 2.220446e-16, %v4148
        %v4236 = vsel %vm4204, 2.220446e-16, %v4151
        %v4237 = vsel %vm4205, 2.220446e-16, %v4154
        %v4238 = vsel %vm4206, 2.220446e-16, %v4157
        %v4239 = vsel %vm4207, 2.220446e-16, %v4160
        %v4240 = vsel %vm4208, 2.220446e-16, %v4163
        %v4241 = vsel %vm4209, 2.220446e-16, %v4166
        %v4242 = vsel %vm4210, 2.220446e-16, %v4169
        %v4243 = vsel %vm4211, 2.220446e-16, %v4172
        %v4244 = vsel %vm4212, 2.220446e-16, %v4175
        %v4245 = vsel %vm4213, 2.220446e-16, %v4178
        %v4246 = vsel %vm4214, 2.220446e-16, %v4181
        %v4247 = vlog2.pop %v4215
        %v4248 = vmul.f32 %v4247, 0.6931472
        %v4249 = vlog2.pop %v4216
        %v4250 = vmul.f32 %v4249, 0.6931472
        %v4251 = vlog2.pop %v4217
        %v4252 = vmul.f32 %v4251, 0.6931472
        %v4253 = vlog2.pop %v4218
        %v4254 = vmul.f32 %v4253, 0.6931472
        %v4255 = vlog2.pop %v4219
        %v4256 = vmul.f32 %v4255, 0.6931472
        %v4257 = vlog2.pop %v4220
        %v4258 = vmul.f32 %v4257, 0.6931472
        %v4259 = vlog2.pop %v4221
        %v4260 = vmul.f32 %v4259, 0.6931472
        %v4261 = vlog2.pop %v4222
        %v4262 = vmul.f32 %v4261, 0.6931472
        %v4263 = vlog2.pop %v4223
        %v4264 = vmul.f32 %v4263, 0.6931472
        %v4265 = vlog2.pop %v4224
        %v4266 = vmul.f32 %v4265, 0.6931472
        %v4267 = vlog2.pop %v4225
        %v4268 = vmul.f32 %v4267, 0.6931472
        %v4269 = vlog2.pop %v4226
        %v4270 = vmul.f32 %v4269, 0.6931472
        %v4271 = vlog2.pop %v4227
        %v4272 = vmul.f32 %v4271, 0.6931472
        %v4273 = vlog2.pop %v4228
        %v4274 = vmul.f32 %v4273, 0.6931472
        %v4275 = vlog2.pop %v4229
        %v4276 = vmul.f32 %v4275, 0.6931472
        %v4277 = vlog2.pop %v4230
        %v4278 = vmul.f32 %v4277, 0.6931472
        %v4279 = vlog2.pop %v4231
        %v4280 = vmul.f32 %v4279, 0.6931472
        %v4281 = vlog2.pop %v4232
        %v4282 = vmul.f32 %v4281, 0.6931472
        %v4283 = vlog2.pop %v4233
        %v4284 = vmul.f32 %v4283, 0.6931472
        %v4285 = vlog2.pop %v4234
        %v4286 = vmul.f32 %v4285, 0.6931472
        %v4287 = vlog2.pop %v4235
        %v4288 = vmul.f32 %v4287, 0.6931472
        %v4289 = vlog2.pop %v4236
        %v4290 = vmul.f32 %v4289, 0.6931472
        %v4291 = vlog2.pop %v4237
        %v4292 = vmul.f32 %v4291, 0.6931472
        %v4293 = vlog2.pop %v4238
        %v4294 = vmul.f32 %v4293, 0.6931472
        %v4295 = vlog2.pop %v4239
        %v4296 = vmul.f32 %v4295, 0.6931472
        %v4297 = vlog2.pop %v4240
        %v4298 = vmul.f32 %v4297, 0.6931472
        %v4299 = vlog2.pop %v4241
        %v4300 = vmul.f32 %v4299, 0.6931472
        %v4301 = vlog2.pop %v4242
        %v4302 = vmul.f32 %v4301, 0.6931472
        %v4303 = vlog2.pop %v4243
        %v4304 = vmul.f32 %v4303, 0.6931472
        %v4305 = vlog2.pop %v4244
        %v4306 = vmul.f32 %v4305, 0.6931472
        %v4307 = vlog2.pop %v4245
        %v4308 = vmul.f32 %v4307, 0.6931472
        %v4309 = vlog2.pop %v4246
        %v4310 = vmul.f32 %v4309, 0.6931472
        %v4311 = vadd.f32 %v3530, %v4248
        %v4312 = vadd.f32 %v3533, %v4250
        %v4313 = vadd.f32 %v3536, %v4252
        %v4314 = vadd.f32 %v3539, %v4254
        %v4315 = vadd.f32 %v3542, %v4256
        %v4316 = vadd.f32 %v3545, %v4258
        %v4317 = vadd.f32 %v3548, %v4260
        %v4318 = vadd.f32 %v3551, %v4262
        %v4319 = vadd.f32 %v3554, %v4264
        %v4320 = vadd.f32 %v3557, %v4266
        %v4321 = vadd.f32 %v3560, %v4268
        %v4322 = vadd.f32 %v3563, %v4270
        %v4323 = vadd.f32 %v3566, %v4272
        %v4324 = vadd.f32 %v3569, %v4274
        %v4325 = vadd.f32 %v3572, %v4276
        %v4326 = vadd.f32 %v3575, %v4278
        %v4327 = vadd.f32 %v3578, %v4280
        %v4328 = vadd.f32 %v3581, %v4282
        %v4329 = vadd.f32 %v3584, %v4284
        %v4330 = vadd.f32 %v3587, %v4286
        %v4331 = vadd.f32 %v3590, %v4288
        %v4332 = vadd.f32 %v3593, %v4290
        %v4333 = vadd.f32 %v3596, %v4292
        %v4334 = vadd.f32 %v3599, %v4294
        %v4335 = vadd.f32 %v3602, %v4296
        %v4336 = vadd.f32 %v3605, %v4298
        %v4337 = vadd.f32 %v3608, %v4300
        %v4338 = vadd.f32 %v3611, %v4302
        %v4339 = vadd.f32 %v3614, %v4304
        %v4340 = vadd.f32 %v3617, %v4306
        %v4341 = vadd.f32 %v3620, %v4308
        %v4342 = vadd.f32 %v3623, %v4310
        %4343 = vst.msk [vmem:[%s397] sm:$0xff] %vm524, %v4311
        %4344 = vst.msk [vmem:[%s397 + $0x8] sm:$0xff] %vm524, %v4312
        %4345 = vst.msk [vmem:[%s397 + $0x10] sm:$0xff] %vm524, %v4313
        %4346 = vst.msk [vmem:[%s397 + $0x18] sm:$0xff] %vm524, %v4314
        %4347 = vst.msk [vmem:[%s397 + $0x20] sm:$0xff] %vm524, %v4315
        %4348 = vst.msk [vmem:[%s397 + $0x28] sm:$0xff] %vm524, %v4316
        %4349 = vst.msk [vmem:[%s397 + $0x30] sm:$0xff] %vm524, %v4317
        %4350 = vst.msk [vmem:[%s397 + $0x38] sm:$0xff] %vm524, %v4318
        %4351 = vst.msk [vmem:[%s397 + $0x40] sm:$0xff] %vm524, %v4319
        %4352 = vst.msk [vmem:[%s397 + $0x48] sm:$0xff] %vm524, %v4320
        %4353 = vst.msk [vmem:[%s397 + $0x50] sm:$0xff] %vm524, %v4321
        %4354 = vst.msk [vmem:[%s397 + $0x58] sm:$0xff] %vm524, %v4322
        %4355 = vst.msk [vmem:[%s397 + $0x60] sm:$0xff] %vm524, %v4323
        %4356 = vst.msk [vmem:[%s397 + $0x68] sm:$0xff] %vm524, %v4324
        %4357 = vst.msk [vmem:[%s397 + $0x70] sm:$0xff] %vm524, %v4325
        %4358 = vst.msk [vmem:[%s397 + $0x78] sm:$0xff] %vm524, %v4326
        %4359 = vst.msk [vmem:[%s397 + $0x80] sm:$0xff] %vm524, %v4327
        %4360 = vst.msk [vmem:[%s397 + $0x88] sm:$0xff] %vm524, %v4328
        %4361 = vst.msk [vmem:[%s397 + $0x90] sm:$0xff] %vm524, %v4329
        %4362 = vst.msk [vmem:[%s397 + $0x98] sm:$0xff] %vm524, %v4330
        %4363 = vst.msk [vmem:[%s397 + $0xa0] sm:$0xff] %vm524, %v4331
        %4364 = vst.msk [vmem:[%s397 + $0xa8] sm:$0xff] %vm524, %v4332
        %4365 = vst.msk [vmem:[%s397 + $0xb0] sm:$0xff] %vm524, %v4333
        %4366 = vst.msk [vmem:[%s397 + $0xb8] sm:$0xff] %vm524, %v4334
        %4367 = vst.msk [vmem:[%s397 + $0xc0] sm:$0xff] %vm524, %v4335
        %4368 = vst.msk [vmem:[%s397 + $0xc8] sm:$0xff] %vm524, %v4336
        %4369 = vst.msk [vmem:[%s397 + $0xd0] sm:$0xff] %vm524, %v4337
        %4370 = vst.msk [vmem:[%s397 + $0xd8] sm:$0xff] %vm524, %v4338
        %4371 = vst.msk [vmem:[%s397 + $0xe0] sm:$0xff] %vm524, %v4339
        %4372 = vst.msk [vmem:[%s397 + $0xe8] sm:$0xff] %vm524, %v4340
        %4373 = vst.msk [vmem:[%s397 + $0xf0] sm:$0xff] %vm524, %v4341
        %4374 = vst.msk [vmem:[%s397 + $0xf8] sm:$0xff] %vm524, %v4342
        %v4375 = vsel %vm789, %v2564, 0.0
        %v4376 = vsel %vm789, %v2579, 0.0
        %v4377 = vadd.f32 %v4375, %v4376
        %v4378 = vsel %vm789, %v2594, 0.0
        %v4379 = vadd.f32 %v4377, %v4378
        %v4380 = vsel %vm789, %v2609, 0.0
        %v4381 = vadd.f32 %v4379, %v4380
        %v4382 = vsel %vm789, %v2624, 0.0
        %v4383 = vadd.f32 %v4381, %v4382
        %v4384 = vsel %vm789, %v2639, 0.0
        %v4385 = vadd.f32 %v4383, %v4384
        %v4386 = vsel %vm789, %v2654, 0.0
        %v4387 = vadd.f32 %v4385, %v4386
        %v4388 = vsel %vm789, %v2669, 0.0
        %v4389 = vadd.f32 %v4387, %v4388
        %v4390 = vsel %vm789, %v2684, 0.0
        %v4391 = vadd.f32 %v4389, %v4390
        %v4392 = vsel %vm789, %v2699, 0.0
        %v4393 = vadd.f32 %v4391, %v4392
        %v4394 = vsel %vm789, %v2714, 0.0
        %v4395 = vadd.f32 %v4393, %v4394
        %v4396 = vsel %vm789, %v2729, 0.0
        %v4397 = vadd.f32 %v4395, %v4396
        %v4398 = vsel %vm789, %v2744, 0.0
        %v4399 = vadd.f32 %v4397, %v4398
        %v4400 = vsel %vm789, %v2759, 0.0
        %v4401 = vadd.f32 %v4399, %v4400
        %v4402 = vsel %vm789, %v2774, 0.0
        %v4403 = vadd.f32 %v4401, %v4402
        %v4404 = vsel %vm789, %v2789, 0.0
        %v4405 = vadd.f32 %v4403, %v4404
        %v4406 = vsel %vm789, %v2804, 0.0
        %v4407 = vadd.f32 %v4405, %v4406
        %v4408 = vsel %vm789, %v2819, 0.0
        %v4409 = vadd.f32 %v4407, %v4408
        %v4410 = vsel %vm789, %v2834, 0.0
        %v4411 = vadd.f32 %v4409, %v4410
        %v4412 = vsel %vm789, %v2849, 0.0
        %v4413 = vadd.f32 %v4411, %v4412
        %v4414 = vsel %vm789, %v2864, 0.0
        %v4415 = vadd.f32 %v4413, %v4414
        %v4416 = vsel %vm789, %v2879, 0.0
        %v4417 = vadd.f32 %v4415, %v4416
        %v4418 = vsel %vm789, %v2894, 0.0
        %v4419 = vadd.f32 %v4417, %v4418
        %v4420 = vsel %vm789, %v2909, 0.0
        %v4421 = vadd.f32 %v4419, %v4420
        %v4422 = vsel %vm789, %v2924, 0.0
        %v4423 = vadd.f32 %v4421, %v4422
        %v4424 = vsel %vm789, %v2939, 0.0
        %v4425 = vadd.f32 %v4423, %v4424
        %v4426 = vsel %vm789, %v2954, 0.0
        %v4427 = vadd.f32 %v4425, %v4426
        %v4428 = vsel %vm789, %v2969, 0.0
        %v4429 = vadd.f32 %v4427, %v4428
        %v4430 = vsel %vm789, %v2984, 0.0
        %v4431 = vadd.f32 %v4429, %v4430
        %v4432 = vsel %vm789, %v2999, 0.0
        %v4433 = vadd.f32 %v4431, %v4432
        %v4434 = vsel %vm789, %v3014, 0.0
        %v4435 = vadd.f32 %v4433, %v4434
        %v4436 = vsel %vm789, %v3029, 0.0
        %v4437 = vadd.f32 %v4435, %v4436
        %v4438 = vrot.slane %v4437, 4
        %v4439 = vadd.f32 %v4437, %v4438
        %v4440 = vrot.slane %v4439, 2
        %v4441 = vadd.f32 %v4439, %v4440
        %v4442 = vrot.slane %v4441, 1
        %v4443 = vadd.f32 %v4441, %v4442
        %vm4444 = vcmp.gt.f32.partialorder %v2564, 0.0
        %vm4445 = vcmp.gt.f32.partialorder %v2579, 0.0
        %vm4446 = vcmp.gt.f32.partialorder %v2594, 0.0
        %vm4447 = vcmp.gt.f32.partialorder %v2609, 0.0
        %vm4448 = vcmp.gt.f32.partialorder %v2624, 0.0
        %vm4449 = vcmp.gt.f32.partialorder %v2639, 0.0
        %vm4450 = vcmp.gt.f32.partialorder %v2654, 0.0
        %vm4451 = vcmp.gt.f32.partialorder %v2669, 0.0
        %vm4452 = vcmp.gt.f32.partialorder %v2684, 0.0
        %vm4453 = vcmp.gt.f32.partialorder %v2699, 0.0
        %vm4454 = vcmp.gt.f32.partialorder %v2714, 0.0
        %vm4455 = vcmp.gt.f32.partialorder %v2729, 0.0
        %vm4456 = vcmp.gt.f32.partialorder %v2744, 0.0
        %vm4457 = vcmp.gt.f32.partialorder %v2759, 0.0
        %vm4458 = vcmp.gt.f32.partialorder %v2774, 0.0
        %vm4459 = vcmp.gt.f32.partialorder %v2789, 0.0
        %vm4460 = vcmp.gt.f32.partialorder %v2804, 0.0
        %vm4461 = vcmp.gt.f32.partialorder %v2819, 0.0
        %vm4462 = vcmp.gt.f32.partialorder %v2834, 0.0
        %vm4463 = vcmp.gt.f32.partialorder %v2849, 0.0
        %vm4464 = vcmp.gt.f32.partialorder %v2864, 0.0
        %vm4465 = vcmp.gt.f32.partialorder %v2879, 0.0
        %vm4466 = vcmp.gt.f32.partialorder %v2894, 0.0
        %vm4467 = vcmp.gt.f32.partialorder %v2909, 0.0
        %vm4468 = vcmp.gt.f32.partialorder %v2924, 0.0
        %vm4469 = vcmp.gt.f32.partialorder %v2939, 0.0
        %vm4470 = vcmp.gt.f32.partialorder %v2954, 0.0
        %vm4471 = vcmp.gt.f32.partialorder %v2969, 0.0
        %vm4472 = vcmp.gt.f32.partialorder %v2984, 0.0
        %vm4473 = vcmp.gt.f32.partialorder %v2999, 0.0
        %vm4474 = vcmp.gt.f32.partialorder %v3014, 0.0
        %vm4475 = vcmp.gt.f32.partialorder %v3029, 0.0
        %v4476 = vsel %vm4444, 1, 0
        %v4477 = vsel %vm4445, 1, 0
        %v4478 = vsel %vm4446, 1, 0
        %v4479 = vsel %vm4447, 1, 0
        %v4480 = vsel %vm4448, 1, 0
        %v4481 = vsel %vm4449, 1, 0
        %v4482 = vsel %vm4450, 1, 0
        %v4483 = vsel %vm4451, 1, 0
        %v4484 = vsel %vm4452, 1, 0
        %v4485 = vsel %vm4453, 1, 0
        %v4486 = vsel %vm4454, 1, 0
        %v4487 = vsel %vm4455, 1, 0
        %v4488 = vsel %vm4456, 1, 0
        %v4489 = vsel %vm4457, 1, 0
        %v4490 = vsel %vm4458, 1, 0
        %v4491 = vsel %vm4459, 1, 0
        %v4492 = vsel %vm4460, 1, 0
        %v4493 = vsel %vm4461, 1, 0
        %v4494 = vsel %vm4462, 1, 0
        %v4495 = vsel %vm4463, 1, 0
        %v4496 = vsel %vm4464, 1, 0
        %v4497 = vsel %vm4465, 1, 0
        %v4498 = vsel %vm4466, 1, 0
        %v4499 = vsel %vm4467, 1, 0
        %v4500 = vsel %vm4468, 1, 0
        %v4501 = vsel %vm4469, 1, 0
        %v4502 = vsel %vm4470, 1, 0
        %v4503 = vsel %vm4471, 1, 0
        %v4504 = vsel %vm4472, 1, 0
        %v4505 = vsel %vm4473, 1, 0
        %v4506 = vsel %vm4474, 1, 0
        %v4507 = vsel %vm4475, 1, 0
        %v4508 = vcvt.s32.f32 %v4476
        %v4509 = vcvt.s32.f32 %v4477
        %v4510 = vcvt.s32.f32 %v4478
        %v4511 = vcvt.s32.f32 %v4479
        %v4512 = vcvt.s32.f32 %v4480
        %v4513 = vcvt.s32.f32 %v4481
        %v4514 = vcvt.s32.f32 %v4482
        %v4515 = vcvt.s32.f32 %v4483
        %v4516 = vcvt.s32.f32 %v4484
        %v4517 = vcvt.s32.f32 %v4485
        %v4518 = vcvt.s32.f32 %v4486
        %v4519 = vcvt.s32.f32 %v4487
        %v4520 = vcvt.s32.f32 %v4488
        %v4521 = vcvt.s32.f32 %v4489
        %v4522 = vcvt.s32.f32 %v4490
        %v4523 = vcvt.s32.f32 %v4491
        %v4524 = vcvt.s32.f32 %v4492
        %v4525 = vcvt.s32.f32 %v4493
        %v4526 = vcvt.s32.f32 %v4494
        %v4527 = vcvt.s32.f32 %v4495
        %v4528 = vcvt.s32.f32 %v4496
        %v4529 = vcvt.s32.f32 %v4497
        %v4530 = vcvt.s32.f32 %v4498
        %v4531 = vcvt.s32.f32 %v4499
        %v4532 = vcvt.s32.f32 %v4500
        %v4533 = vcvt.s32.f32 %v4501
        %v4534 = vcvt.s32.f32 %v4502
        %v4535 = vcvt.s32.f32 %v4503
        %v4536 = vcvt.s32.f32 %v4504
        %v4537 = vcvt.s32.f32 %v4505
        %v4538 = vcvt.s32.f32 %v4506
        %v4539 = vcvt.s32.f32 %v4507
        %v4540 = vsel %vm789, %v4508, 0.0
        %v4541 = vsel %vm789, %v4509, 0.0
        %v4542 = vadd.f32 %v4540, %v4541
        %v4543 = vsel %vm789, %v4510, 0.0
        %v4544 = vadd.f32 %v4542, %v4543
        %v4545 = vsel %vm789, %v4511, 0.0
        %v4546 = vadd.f32 %v4544, %v4545
        %v4547 = vsel %vm789, %v4512, 0.0
        %v4548 = vadd.f32 %v4546, %v4547
        %v4549 = vsel %vm789, %v4513, 0.0
        %v4550 = vadd.f32 %v4548, %v4549
        %v4551 = vsel %vm789, %v4514, 0.0
        %v4552 = vadd.f32 %v4550, %v4551
        %v4553 = vsel %vm789, %v4515, 0.0
        %v4554 = vadd.f32 %v4552, %v4553
        %v4555 = vsel %vm789, %v4516, 0.0
        %v4556 = vadd.f32 %v4554, %v4555
        %v4557 = vsel %vm789, %v4517, 0.0
        %v4558 = vadd.f32 %v4556, %v4557
        %v4559 = vsel %vm789, %v4518, 0.0
        %v4560 = vadd.f32 %v4558, %v4559
        %v4561 = vsel %vm789, %v4519, 0.0
        %v4562 = vadd.f32 %v4560, %v4561
        %v4563 = vsel %vm789, %v4520, 0.0
        %v4564 = vadd.f32 %v4562, %v4563
        %v4565 = vsel %vm789, %v4521, 0.0
        %v4566 = vadd.f32 %v4564, %v4565
        %v4567 = vsel %vm789, %v4522, 0.0
        %v4568 = vadd.f32 %v4566, %v4567
        %v4569 = vsel %vm789, %v4523, 0.0
        %v4570 = vadd.f32 %v4568, %v4569
        %v4571 = vsel %vm789, %v4524, 0.0
        %v4572 = vadd.f32 %v4570, %v4571
        %v4573 = vsel %vm789, %v4525, 0.0
        %v4574 = vadd.f32 %v4572, %v4573
        %v4575 = vsel %vm789, %v4526, 0.0
        %v4576 = vadd.f32 %v4574, %v4575
        %v4577 = vsel %vm789, %v4527, 0.0
        %v4578 = vadd.f32 %v4576, %v4577
        %v4579 = vsel %vm789, %v4528, 0.0
        %v4580 = vadd.f32 %v4578, %v4579
        %v4581 = vsel %vm789, %v4529, 0.0
        %v4582 = vadd.f32 %v4580, %v4581
        %v4583 = vsel %vm789, %v4530, 0.0
        %v4584 = vadd.f32 %v4582, %v4583
        %v4585 = vsel %vm789, %v4531, 0.0
        %v4586 = vadd.f32 %v4584, %v4585
        %v4587 = vsel %vm789, %v4532, 0.0
        %v4588 = vadd.f32 %v4586, %v4587
        %v4589 = vsel %vm789, %v4533, 0.0
        %v4590 = vadd.f32 %v4588, %v4589
        %v4591 = vsel %vm789, %v4534, 0.0
        %v4592 = vadd.f32 %v4590, %v4591
        %v4593 = vsel %vm789, %v4535, 0.0
        %v4594 = vadd.f32 %v4592, %v4593
        %v4595 = vsel %vm789, %v4536, 0.0
        %v4596 = vadd.f32 %v4594, %v4595
        %v4597 = vsel %vm789, %v4537, 0.0
        %v4598 = vadd.f32 %v4596, %v4597
        %v4599 = vsel %vm789, %v4538, 0.0
        %v4600 = vadd.f32 %v4598, %v4599
        %v4601 = vsel %vm789, %v4539, 0.0
        %v4602 = vadd.f32 %v4600, %v4601
        %v4603 = vrot.slane %v4602, 4
        %v4604 = vadd.f32 %v4602, %v4603
        %v4605 = vrot.slane %v4604, 2
        %v4606 = vadd.f32 %v4604, %v4605
        %v4607 = vrot.slane %v4606, 1
        %v4608 = vadd.f32 %v4606, %v4607
        %vm4609 = vcmask 1040384
        %v4610 = vsel %vm4609, %v4443, %v4608
        %vm4611 = vcmask 25600
        %4612 = vst.msk [vmem:[%s375] sm:$0x3] %vm4611, %v4610
        %s4613 = smul.u32 32, %s29
        %p4614 = scmp.lt.s32.totalorder %s28, 1
        %s4615 = scalar_select %p4614, %s28, 1
        %p4616 = scmp.lt.s32.totalorder %s4613, 31
        %s4617 = scalar_select %p4616, %s4613, 31
        %s4618 = smul.addr %s4615, 32
        %s4619 = sadd.s32 %s4617, %s4618
        %s4620 = smul.addr %s4619, 8
        %s4621 = scalar_lea.vmem %s8, %s4620
        %s4622 = sand.u32 %s254, 1
        %s4623 = scalar_lea.sflag [#allocation3], %s4622
        %s4624 = sand.u32 %s254, 1
        %s4625 = smul.addr %s4624, 2
        %s4626 = scalar_lea.vmem [#allocation2], %s4625
        // Predicated region
        $region53: #{tpu_custom_call.1} parent=51 // pred_check
          %p4627 = pneg %p236
        $region54: #{tpu_custom_call.1} parent=51 // pred_check_branch
          %4629 = sbr.rel (%p4627) target = $region56
        $region55: #{tpu_custom_call.1} parent=51 // pred_region
          %s4630 = smul.u32 32, %s29
        $region56: #{tpu_custom_call.1} parent=51 // pred_fallthru
          _
        // Predicated region
        $region57: #{tpu_custom_call.1} parent=51 // pred_check
          %p4631 = pneg %p264
        $region58: #{tpu_custom_call.1} parent=51 // pred_check_branch
          %4633 = sbr.rel (%p4631) target = $region60
        $region59: #{tpu_custom_call.1} parent=51 // pred_region
          %4635 = vsyncadd %s4623, 0
          %s4636 = sadd.s32 %s29, %s28
          %s4637 = smul.addr %s4636, 2
          %s4638 = scalar_lea.hbm %s9, %s4637
          %s4640 = sshll.u32 %s4626, 4
          %s4641 = int_to_ptr.vmem [resolvable:$true] %s4640
          %s4642 = sshll.u32 %s4638, 4
          %s4643 = int_to_ptr.hbm [resolvable:$true] %s4642
          %4645 = dma.vmem_to_hbm [thread:$0]  %s4641, 32, %s4643, %s4623
        $region60: #{tpu_custom_call.1} parent=51 // pred_fallthru
          _
      $region52: #{tpu_custom_call.1} parent=5 // pred_fallthru
        _
      %p4646 = scmp.le.s32.totalorder 2, %s19
      // Predicated region
      $region61: #{tpu_custom_call.1} parent=5 // pred_check
        %p4647 = pneg %p4646
      $region62: #{tpu_custom_call.1} parent=5 // pred_check_branch
        %4649 = sbr.rel (%p4647) target = $region64
      $region63: #{tpu_custom_call.1} parent=5 // pred_region
        %s4650 = ssub.s32 %s19, 2
        // Predicated region
        $region65: #{tpu_custom_call.1} parent=63 // pred_check
          %p4651 = pneg %p242
        $region66: #{tpu_custom_call.1} parent=63 // pred_check_branch
          %4653 = sbr.rel (%p4651) target = $region68
        $region67: #{tpu_custom_call.1} parent=63 // pred_region
          %s4654 = smul.u32 32, %s31
          %p4655 = scmp.lt.s32.totalorder %s30, 1
          %s4656 = scalar_select %p4655, %s30, 1
          %p4657 = scmp.lt.s32.totalorder %s4654, 31
          %s4658 = scalar_select %p4657, %s4654, 31
          %s4659 = smul.addr %s4656, 32
          %s4660 = sadd.s32 %s4658, %s4659
          %s4661 = smul.addr %s4660, 8
          %s4662 = scalar_lea.vmem %s8, %s4661
        $region68: #{tpu_custom_call.1} parent=63 // pred_fallthru
          _
        // Predicated region
        $region69: #{tpu_custom_call.1} parent=63 // pred_check
          %p4663 = pneg %p270
        $region70: #{tpu_custom_call.1} parent=63 // pred_check_branch
          %4665 = sbr.rel (%p4663) target = $region72
        $region71: #{tpu_custom_call.1} parent=63 // pred_region
          %s4666 = sand.u32 %s255, 1
          %s4667 = scalar_lea.sflag [#allocation3], %s4666
          %s4668 = sand.u32 %s255, 1
          %s4669 = smul.addr %s4668, 2
          %s4670 = scalar_lea.vmem [#allocation2], %s4669
          %4672 = dma.done %s4667, 32
        $region72: #{tpu_custom_call.1} parent=63 // pred_fallthru
          _
      $region64: #{tpu_custom_call.1} parent=5 // pred_fallthru
        _
    $region6: #{tpu_custom_call.1} parent=1 // loop_footer
      %s23 = sadd.s32 1, %s19
    $region7: #{tpu_custom_call.1} parent=1 // loop_footer_branch
      %18 = sbr.rel target = $region3
    $region8: #{tpu_custom_call.1} parent=1 // loop_exit
      _
    %4673 = vsyncpa [#allocation3], 1
    %s4674 = scalar_lea.sflag [#allocation3], 1
    %4675 = vsyncpa %s4674, 1

</llo_original>
